<compile_context>
chip_gen: v6e
topology: v6e:2x2x1
jax: 0.10.0
libtpu: 0.0.40
codegen_flags: <defaults>
</compile_context>

<pallas_src>
import functools
import jax
import jax.numpy as jnp
from jax import lax
from jax.experimental import pallas as pl
from jax.experimental.pallas import tpu as pltpu

EPS = 1e-12


def _pair(k):
    return (k, k) if isinstance(k, int) else tuple(k)


def _p_tiles(P):
    """Lane-dense tiling of the flattened-pixel axis; no padding ever."""
    if P % 128 == 0:
        return P // 128, 128
    return 1, P  # small / ragged: single full-extent block


# ----------------------------------------------------------------------------
# Pallas kernels  (all operate on channel-major (Cout, P) tiles; P is lane axis)
# ----------------------------------------------------------------------------
def _convgemm_bias_kernel(w_ref, x_ref, b_ref, o_ref):
    o_ref[...] = jnp.dot(w_ref[...], x_ref[...],
                         preferred_element_type=jnp.float32) + b_ref[...]


def _conv_bn_relu_kernel(w_ref, x_ref, g_ref, b_ref, o_ref, *, eps):
    # conv (no bias: cancelled by BN) -> batch-stat BatchNorm -> ReLU, fully fused.
    y = jnp.dot(w_ref[...], x_ref[...], preferred_element_type=jnp.float32)
    mean = jnp.mean(y, axis=1, keepdims=True)
    var = jnp.maximum(jnp.mean(y * y, axis=1, keepdims=True) - mean * mean, 0.0)
    scale = g_ref[...] * lax.rsqrt(var + eps)
    o_ref[...] = jnp.maximum((y - mean) * scale + b_ref[...], 0.0)


def _gtu_conv_kernel(w_ref, x_ref, b_ref, o_ref):
    # one GEMM over [map; gate] stacked weights, then tanh(map) * sigmoid(gate)
    y = jnp.dot(w_ref[...], x_ref[...], preferred_element_type=jnp.float32) + b_ref[...]
    co = o_ref.shape[0]
    a, g = y[:co], y[co:]
    sig = pl.reciprocal(1.0 + jnp.exp(-g), approx=True)   # exp + recip both on EUP
    o_ref[...] = jnp.tanh(a) * sig


# ----------------------------------------------------------------------------
# Pallas wrappers
# ----------------------------------------------------------------------------
def pallas_conv_gemm(wmat, patches, bias):
    """(Cout,K) @ (K,P) + bias -> (Cout,P) f32, lane-dense along P."""
    Cout, K = wmat.shape
    P = patches.shape[1]
    n_tiles, tp = _p_tiles(P)
    return pl.pallas_call(
        _convgemm_bias_kernel,
        out_shape=jax.ShapeDtypeStruct((Cout, P), jnp.float32),
        grid=(n_tiles,),
        in_specs=[
            pl.BlockSpec((Cout, K), lambda i: (0, 0)),
            pl.BlockSpec((K, tp), lambda i: (0, i)),
            pl.BlockSpec((Cout, 1), lambda i: (0, 0)),
        ],
        out_specs=pl.BlockSpec((Cout, tp), lambda i: (0, i)),
        compiler_params=pltpu.CompilerParams(dimension_semantics=("parallel",)),
    )(wmat.astype(jnp.bfloat16), patches.astype(jnp.bfloat16),
      bias.reshape(Cout, 1).astype(jnp.float32))


def pallas_conv_bn_relu(wmat, patches, gamma, beta, eps):
    """Fused conv(im2col GEMM, bias folded into BN) + BatchNorm(batch stats) + ReLU.

    Whole (Cout,P) problem held in one VMEM block (global per-channel stats needed).
    # TODO(synk): for P too large for VMEM, switch to a two-pass variant (GEMM with
    # accumulated per-channel sum/sumsq, then a tiled scale-shift-relu kernel).
    """
    Cout, K = wmat.shape
    P = patches.shape[1]
    return pl.pallas_call(
        functools.partial(_conv_bn_relu_kernel, eps=eps),
        out_shape=jax.ShapeDtypeStruct((Cout, P), jnp.float32),
        grid=(1,),
        in_specs=[
            pl.BlockSpec((Cout, K), lambda i: (0, 0)),
            pl.BlockSpec((K, P), lambda i: (0, 0)),
            pl.BlockSpec((Cout, 1), lambda i: (0, 0)),
            pl.BlockSpec((Cout, 1), lambda i: (0, 0)),
        ],
        out_specs=pl.BlockSpec((Cout, P), lambda i: (0, 0)),
        compiler_params=pltpu.CompilerParams(dimension_semantics=("arbitrary",)),
    )(wmat.astype(jnp.bfloat16), patches.astype(jnp.bfloat16),
      gamma.reshape(Cout, 1).astype(jnp.float32),
      beta.reshape(Cout, 1).astype(jnp.float32))


def pallas_gtu_conv(wcat, patches, bcat, cout):
    """Fused gated conv: y = [Wmap;Wgate]@patches + b; out = tanh(y_map)*sigmoid(y_gate)."""
    C2, K = wcat.shape
    P = patches.shape[1]
    n_tiles, tp = _p_tiles(P)
    return pl.pallas_call(
        _gtu_conv_kernel,
        out_shape=jax.ShapeDtypeStruct((cout, P), jnp.float32),
        grid=(n_tiles,),
        in_specs=[
            pl.BlockSpec((C2, K), lambda i: (0, 0)),
            pl.BlockSpec((K, tp), lambda i: (0, i)),
            pl.BlockSpec((C2, 1), lambda i: (0, 0)),
        ],
        out_specs=pl.BlockSpec((cout, tp), lambda i: (0, i)),
        compiler_params=pltpu.CompilerParams(dimension_semantics=("parallel",)),
    )(wcat.astype(jnp.bfloat16), patches.astype(jnp.bfloat16),
      bcat.reshape(C2, 1).astype(jnp.float32))


# ----------------------------------------------------------------------------
# Conv / norm building blocks (channel-major glue + Pallas GEMMs)
# ----------------------------------------------------------------------------
def _im2col(x, kh, kw, ph, pw, dh, dw):
    """x: (C, N, H, W) -> patches (C*kh*kw, N*Hout*Wout); K ordering matches
    torch weight.reshape(Cout, Cin*kh*kw)."""
    C, N, H, W = x.shape
    Hout = H + 2 * ph - dh * (kh - 1)
    Wout = W + 2 * pw - dw * (kw - 1)
    xp = jnp.pad(x, ((0, 0), (0, 0), (ph, ph), (pw, pw)))
    taps = [xp[:, :, i * dh:i * dh + Hout, j * dw:j * dw + Wout]
            for i in range(kh) for j in range(kw)]
    patches = jnp.stack(taps, axis=1)                  # (C, kh*kw, N, Hout, Wout)
    return patches.reshape(C * kh * kw, N * Hout * Wout), Hout, Wout


def conv2d(x, params, *, kernel_size, padding, dilation=(1, 1)):
    """Plain stride-1 conv with bias (no BN).  x is channel-major (C, N, H, W)."""
    w, b = params['w'], params['b']
    Cout, Cin = w.shape[0], w.shape[1]
    kh, kw = _pair(kernel_size)
    ph, pw = _pair(padding)
    dh, dw = _pair(dilation)
    N = x.shape[1]
    patches, Hout, Wout = _im2col(x, kh, kw, ph, pw, dh, dw)
    y = pallas_conv_gemm(w.reshape(Cout, Cin * kh * kw), patches, b)
    return y.reshape(Cout, N, Hout, Wout)


def conv_block(x, params, *, kernel_size, dilation, eps):
    """Conv2d -> BatchNorm2d(batch stats) -> ReLU, single fused Pallas launch.
    Conv bias is omitted: it is zero-initialized AND exactly cancelled by BN mean."""
    kh, kw = _pair(kernel_size)
    dh, dw = _pair(dilation)
    ph, pw = dh * (kh - 1) // 2, dw * (kw - 1) // 2
    w = params['w']
    Cout, Cin = w.shape[0], w.shape[1]
    N = x.shape[1]
    patches, Hout, Wout = _im2col(x, kh, kw, ph, pw, dh, dw)
    y = pallas_conv_bn_relu(w.reshape(Cout, Cin * kh * kw), patches,
                            params['gamma'], params['beta'], eps)
    return y.reshape(Cout, N, Hout, Wout)


# TODO(synk): D2Block class body was not provided; reconstructed as a dense block of
# `depth` multi-dilated conv-bn-relu layers (dilation 2**i), output = concat of layer outputs.
def d2block(x, params, *, growth, depth, kernel_size, eps):
    feats = [x]
    outs = []
    for i in range(depth):
        xin = feats[0] if i == 0 else jnp.concatenate(feats, axis=0)
        y = conv_block(xin, params[i], kernel_size=kernel_size,
                       dilation=(2 ** i, 2 ** i), eps=eps)
        feats.append(y)
        outs.append(y)
    return jnp.concatenate(outs, axis=0)


def d3block(x, params, *, num_blocks, growth, depth, kernel_size, eps):
    stacked = [x]
    cur = x
    for idx in range(num_blocks):
        if idx != 0:
            cur = jnp.concatenate(stacked, axis=0)
        cur = d2block(cur, params[idx], growth=growth, depth=depth,
                      kernel_size=kernel_size, eps=eps)
        stacked.append(cur)
    return jnp.concatenate(stacked[1:], axis=0)


def down_d3block(x, params, *, down_scale, **kw):
    C, N, H, W = x.shape
    Kh, Kw = down_scale
    Ph, Pw = (Kh - H % Kh) % Kh, (Kw - W % Kw) % Kw
    pu, pb = Ph // 2, Ph - Ph // 2
    plft, prt = Pw // 2, Pw - Pw // 2
    x = jnp.pad(x, ((0, 0), (0, 0), (pu, pb), (plft, prt)))
    H2, W2 = x.shape[2] // Kh, x.shape[3] // Kw
    x = x.reshape(C, N, H2, Kh, W2, Kw).mean(axis=(3, 5))   # AvgPool2d(K, stride=K)
    return d3block(x, params, **kw)


def up_d3block(x, skip, params, *, up_scale, **kw):
    # depthwise ConvTranspose2d(kernel=stride=up_scale, groups=C, bias=False)
    w = params['up_w']                                      # (C, 1, Kh, Kw)
    C, N, H, W = x.shape
    Kh, Kw = up_scale
    wd = w[:, 0]                                            # (C, Kh, Kw)
    y = x[:, :, :, None, :, None] * wd[:, None, None, :, None, :]
    y = y.reshape(C, N, H * Kh, W * Kw)
    if skip is not None:
        Hs, Ws = skip.shape[2], skip.shape[3]
        ph, pw = y.shape[2] - Hs, y.shape[3] - Ws
        pu, pb = ph // 2, ph - ph // 2
        plf, prt = pw // 2, pw - pw // 2
        y = y[:, :, pu:y.shape[2] - pb, plf:y.shape[3] - prt]
        y = jnp.concatenate([y, skip], axis=0)
    return d3block(y, params['d3'], **kw)


def backbone(x, params, cfg):
    x = conv2d(x, params['conv'], kernel_size=(3, 3), padding=(1, 1))
    skips = [x]
    num_stacks = cfg['num_d3blocks'] // 2 + 1
    for idx in range(num_stacks):
        kw = dict(num_blocks=cfg['num_d2blocks'][idx], growth=cfg['growth_rate'][idx],
                  depth=cfg['depth'][idx], kernel_size=cfg['kernel_size'], eps=cfg['eps'])
        if idx == 0:
            x = d3block(x, params['enc'][idx], **kw)
        else:
            x = down_d3block(x, params['enc'][idx], down_scale=cfg['scale'], **kw)
        skips.append(x)
    for i in range(num_stacks - 1):
        skip = skips[num_stacks - i - 1]
        d = num_stacks + i
        kw = dict(num_blocks=cfg['num_d2blocks'][d], growth=cfg['growth_rate'][d],
                  depth=cfg['depth'][d], kernel_size=cfg['kernel_size'], eps=cfg['eps'])
        x = up_d3block(x, skip, params['dec'][i], up_scale=cfg['scale'], **kw)
    return conv2d(x, params['bottleneck'], kernel_size=(1, 1), padding=(0, 0))


def d3net_forward(x, params, cfg):
    length = sum(cfg['sections'])
    x = x[:, :, :, :length]
    B, C, H, W = x.shape
    x = x.reshape(B, C, W, H)                    # view-style swap of last two dims, as in torch
    x = jnp.transpose(x, (1, 0, 2, 3))           # ONE layout change: NCHW -> channel-major CNHW
    lo = cfg['sections'][0]
    x_low, x_high = x[:, :, :lo, :], x[:, :, lo:, :]    # BandSplit over frequency axis
    out_low = backbone(x_low, params['net']['low'], cfg['band']['low'])
    out_high = backbone(x_high, params['net']['high'], cfg['band']['high'])
    stacked = jnp.concatenate([out_low, out_high], axis=2)
    out_full = backbone(x, params['net']['full'], cfg['band']['full'])
    y = jnp.concatenate([stacked, out_full], axis=0)
    y = d2block(y, params['d2block'], growth=cfg['growth_rate_d2block'],
                depth=cfg['depth_d2block'], kernel_size=cfg['kernel_size_d2block'],
                eps=cfg['eps'])
    # GTU2d fused: one im2col, one GEMM over [map; gate], tanh*sigmoid epilogue
    kh, kw = _pair(cfg['kernel_size_gated'])
    Cin_g, N = y.shape[0], y.shape[1]
    patches, Hh, Ww = _im2col(y, kh, kw, 1, 1, 1, 1)
    Co = params['gtu']['map']['w'].shape[0]
    wcat = jnp.concatenate(
        [params['gtu']['map']['w'].reshape(Co, Cin_g * kh * kw),
         params['gtu']['gate']['w'].reshape(Co, Cin_g * kh * kw)], axis=0)
    bcat = jnp.concatenate([params['gtu']['map']['b'], params['gtu']['gate']['b']], axis=0)
    out = pallas_gtu_conv(wcat, patches, bcat, Co).reshape(Co, N, Hh, Ww)
    out = jnp.transpose(out, (1, 0, 2, 3))       # back to NCHW once
    return out.reshape(out.shape[0], out.shape[1], out.shape[3], out.shape[2])


# ----------------------------------------------------------------------------
# Deterministic parameter init (kaiming-normal fan_out for convs, BN=(1,0), bias=0)
# ----------------------------------------------------------------------------
class KeyGen:
    def __init__(self, key):
        self.key = key

    def __call__(self):
        self.key, sub = jax.random.split(self.key)
        return sub


def init_conv(kg, cin, cout, kh, kw):
    std = (2.0 / (cout * kh * kw)) ** 0.5
    return {'w': std * jax.random.normal(kg(), (cout, cin, kh, kw), jnp.float32),
            'b': jnp.zeros((cout,), jnp.float32)}


def init_conv_block(kg, cin, cout, k):
    kh, kw = _pair(k)
    p = init_conv(kg, cin, cout, kh, kw)
    p['gamma'] = jnp.ones((cout,), jnp.float32)
    p['beta'] = jnp.zeros((cout,), jnp.float32)
    return p


def init_d2block(kg, cin, growth, depth, k):
    return [init_conv_block(kg, cin + i * growth, growth, k) for i in range(depth)]


def init_d3block(kg, cin, growth, depth, k, num_blocks):
    blocks = []
    for _ in range(num_blocks):
        blocks.append(init_d2block(kg, cin, growth, depth, k))
        cin += growth * depth
    return blocks


def init_backbone(kg, in_ch, cfg):
    p = {'conv': init_conv(kg, in_ch, cfg['num_features'], 3, 3)}
    nf = cfg['num_features']
    num_stacks = cfg['num_d3blocks'] // 2 + 1
    enc, dec = [], []
    for idx in range(num_stacks):
        enc.append(init_d3block(kg, nf, cfg['growth_rate'][idx], cfg['depth'][idx],
                                cfg['kernel_size'], cfg['num_d2blocks'][idx]))
        nf = cfg['num_d2blocks'][idx] * cfg['depth'][idx] * cfg['growth_rate'][idx]
    for idx in range(num_stacks, cfg['num_d3blocks']):
        skip_idx = cfg['num_d3blocks'] - idx - 1
        skip_ch = (cfg['num_d2blocks'][skip_idx] * cfg['depth'][skip_idx]
                   * cfg['growth_rate'][skip_idx])
        Kh, Kw = cfg['scale']
        std = (2.0 / (nf * Kh * Kw)) ** 0.5
        up_w = std * jax.random.normal(kg(), (nf, 1, Kh, Kw), jnp.float32)
        d3 = init_d3block(kg, nf + skip_ch, cfg['growth_rate'][idx], cfg['depth'][idx],
                          cfg['kernel_size'], cfg['num_d2blocks'][idx])
        dec.append({'up_w': up_w, 'd3': d3})
        nf = cfg['num_d2blocks'][idx] * cfg['depth'][idx] * cfg['growth_rate'][idx]
    p['enc'], p['dec'] = enc, dec
    p['bottleneck'] = init_conv(kg, nf, cfg['bottleneck_channels'], 1, 1)
    return p


def init_d3net(key, cfg):
    kg = KeyGen(key)
    params = {'net': {}}
    for band in ['low', 'high', 'full']:
        params['net'][band] = init_backbone(kg, cfg['in_channels'], cfg['band'][band])
    in_d2 = 2 * cfg['bottleneck_channels']                  # len(bands[:-1]) * bottleneck
    params['d2block'] = init_d2block(kg, in_d2, cfg['growth_rate_d2block'],
                                     cfg['depth_d2block'], cfg['kernel_size_d2block'])
    gin = cfg['depth_d2block'] * cfg['growth_rate_d2block']
    kh, kw = cfg['kernel_size_gated']
    params['gtu'] = {'map': init_conv(kg, gin, cfg['in_channels'], kh, kw),
                     'gate': init_conv(kg, gin, cfg['in_channels'], kh, kw)}
    return params


# ----------------------------------------------------------------------------
# Small synthetic configuration
# ----------------------------------------------------------------------------
IN_CHANNELS = 2
SECTIONS = [8, 8]
BOTTLENECK = 4


def band_cfg():
    return dict(num_features=8, growth_rate=[2, 2, 2], bottleneck_channels=BOTTLENECK,
                kernel_size=3, scale=(2, 2), num_d3blocks=3,
                num_d2blocks=[1, 1, 1], depth=[1, 1, 1], eps=EPS)


CFG = dict(
    in_channels=IN_CHANNELS,
    sections=SECTIONS,
    bottleneck_channels=BOTTLENECK,
    band={'low': band_cfg(), 'high': band_cfg(), 'full': band_cfg()},
    growth_rate_d2block=2,
    kernel_size_d2block=3,
    depth_d2block=2,
    kernel_size_gated=(3, 3),
    eps=EPS,
)


if __name__ == "__main__":
    key = jax.random.PRNGKey(0)
    kp, kx = jax.random.split(key)
    params = init_d3net(kp, CFG)
    # input: (batch, in_channels, n_frames=8, n_bins=20); forward crops last dim to 16
    x = jax.random.normal(kx, (2, IN_CHANNELS, 8, 20), jnp.float32)

    fwd = jax.jit(functools.partial(d3net_forward, cfg=CFG))
    out = fwd(x, params)
    out = jax.block_until_ready(out)
    assert out.shape == (2, IN_CHANNELS, 8, sum(SECTIONS)), out.shape
    assert jnp.all(jnp.isfinite(out))
    print("KERNEL_OK")
</pallas_src>

<mosaic_0001>
module attributes {stable_mosaic.version = 11 : i64} {
  func.func @_convgemm_bias_kernel(%arg0: i32, %arg1: memref<8x18xbf16, #tpu.memory_space<vmem>>, %arg2: memref<18x128xbf16, #tpu.memory_space<vmem>>, %arg3: memref<8x1xf32, #tpu.memory_space<vmem>>, %arg4: memref<8x128xf32, #tpu.memory_space<vmem>>) attributes {dimension_semantics = [#tpu.dimension_semantics<parallel>], iteration_bounds = array<i64: 1>, scalar_prefetch = 0 : i64, scratch_operands = 0 : i64, tpu.core_type = #tpu.core_type<tc>, window_params = [{pipeline_mode = #tpu.pipeline_mode<synchronous>, transform_indices = @transform_0, window_bounds = array<i64: 8, 18>}, {transform_indices = @transform_1, window_bounds = array<i64: 18, 128>}, {pipeline_mode = #tpu.pipeline_mode<synchronous>, transform_indices = @transform_2, window_bounds = array<i64: 8, 1>}, {transform_indices = @transform_3, window_bounds = array<i64: 8, 128>}]} {
    %c0 = arith.constant 0 : index
    %c0_0 = arith.constant 0 : index
    %0 = vector.load %arg1[%c0, %c0_0] : memref<8x18xbf16, #tpu.memory_space<vmem>>, vector<8x18xbf16>
    %c0_1 = arith.constant 0 : index
    %c0_2 = arith.constant 0 : index
    %1 = vector.load %arg2[%c0_1, %c0_2] : memref<18x128xbf16, #tpu.memory_space<vmem>>, vector<18x128xbf16>
    %cst = arith.constant dense<0.000000e+00> : vector<8x128xf32>
    %2 = tpu.matmul %0, %1, %cst {dimension_numbers = #tpu.dot_dimension_numbers<[1], [0], [0], [1], [0, 0, 1, 1], [], []>} : vector<8x18xbf16>, vector<18x128xbf16>, vector<8x128xf32> -> vector<8x128xf32>
    %c0_3 = arith.constant 0 : index
    %c0_4 = arith.constant 0 : index
    %3 = vector.load %arg3[%c0_3, %c0_4] : memref<8x1xf32, #tpu.memory_space<vmem>>, vector<8x1xf32>
    %4 = vector.broadcast %3 : vector<8x1xf32> to vector<8x128xf32>
    %5 = arith.addf %2, %4 : vector<8x128xf32>
    %c0_5 = arith.constant 0 : index
    %c0_6 = arith.constant 0 : index
    %6 = vector.load %arg4[%c0_5, %c0_6] : memref<8x128xf32, #tpu.memory_space<vmem>>, vector<8x128xf32>
    tpu.vector_store %arg4[%c0_5, %c0_6], %5 {strides = array<i32>} : memref<8x128xf32, #tpu.memory_space<vmem>>, vector<8x128xf32>,
    return
  }
  func.func @transform_0(%arg0: i32) -> (i32, i32) {
    %c0_i32 = arith.constant 0 : i32
    %c0_i32_0 = arith.constant 0 : i32
    %c0_i32_1 = arith.constant 0 : i32
    return %c0_i32, %c0_i32_0 : i32, i32
  }
  func.func @transform_1(%arg0: i32) -> (i32, i32) {
    %c0_i32 = arith.constant 0 : i32
    %c0_i32_0 = arith.constant 0 : i32
    return %c0_i32, %arg0 : i32, i32
  }
  func.func @transform_2(%arg0: i32) -> (i32, i32) {
    %c0_i32 = arith.constant 0 : i32
    %c0_i32_0 = arith.constant 0 : i32
    %c0_i32_1 = arith.constant 0 : i32
    return %c0_i32, %c0_i32_0 : i32, i32
  }
  func.func @transform_3(%arg0: i32) -> (i32, i32) {
    %c0_i32 = arith.constant 0 : i32
    %c0_i32_0 = arith.constant 0 : i32
    return %c0_i32, %arg0 : i32, i32
  }
}

module attributes {stable_mosaic.version = 11 : i64} {
  func.func @_conv_bn_relu_kernel(%arg0: i32, %arg1: memref<2x72xbf16, #tpu.memory_space<vmem>>, %arg2: memref<72x128xbf16, #tpu.memory_space<vmem>>, %arg3: memref<2x1xf32, #tpu.memory_space<vmem>>, %arg4: memref<2x1xf32, #tpu.memory_space<vmem>>, %arg5: memref<2x128xf32, #tpu.memory_space<vmem>>) attributes {dimension_semantics = [#tpu.dimension_semantics<arbitrary>], iteration_bounds = array<i64: 1>, scalar_prefetch = 0 : i64, scratch_operands = 0 : i64, tpu.core_type = #tpu.core_type<tc>, window_params = [{pipeline_mode = #tpu.pipeline_mode<synchronous>, transform_indices = @transform_0, window_bounds = array<i64: 2, 72>}, {pipeline_mode = #tpu.pipeline_mode<synchronous>, transform_indices = @transform_1, window_bounds = array<i64: 72, 128>}, {pipeline_mode = #tpu.pipeline_mode<synchronous>, transform_indices = @transform_2, window_bounds = array<i64: 2, 1>}, {pipeline_mode = #tpu.pipeline_mode<synchronous>, transform_indices = @transform_3, window_bounds = array<i64: 2, 1>}, {pipeline_mode = #tpu.pipeline_mode<synchronous>, transform_indices = @transform_4, window_bounds = array<i64: 2, 128>}]} {
    %c0 = arith.constant 0 : index
    %c0_0 = arith.constant 0 : index
    %0 = vector.load %arg1[%c0, %c0_0] : memref<2x72xbf16, #tpu.memory_space<vmem>>, vector<2x72xbf16>
    %c0_1 = arith.constant 0 : index
    %c0_2 = arith.constant 0 : index
    %1 = vector.load %arg2[%c0_1, %c0_2] : memref<72x128xbf16, #tpu.memory_space<vmem>>, vector<72x128xbf16>
    %cst = arith.constant dense<0.000000e+00> : vector<2x128xf32>
    %2 = tpu.matmul %0, %1, %cst {dimension_numbers = #tpu.dot_dimension_numbers<[1], [0], [0], [1], [0, 0, 1, 1], [], []>} : vector<2x72xbf16>, vector<72x128xbf16>, vector<2x128xf32> -> vector<2x128xf32>
    %cst_3 = arith.constant dense<0.000000e+00> : vector<2xf32>
    %3 = vector.multi_reduction <add>, %2, %cst_3 [1] : vector<2x128xf32> to vector<2xf32>
    %4 = vector.shape_cast %3 : vector<2xf32> to vector<2x1xf32>
    %cst_4 = arith.constant 1.280000e+02 : f32
    %5 = vector.broadcast %cst_4 : f32 to vector<2x1xf32>
    %6 = arith.divf %4, %5 : vector<2x1xf32>
    %7 = arith.mulf %2, %2 : vector<2x128xf32>
    %cst_5 = arith.constant dense<0.000000e+00> : vector<2xf32>
    %8 = vector.multi_reduction <add>, %7, %cst_5 [1] : vector<2x128xf32> to vector<2xf32>
    %9 = vector.shape_cast %8 : vector<2xf32> to vector<2x1xf32>
    %cst_6 = arith.constant 1.280000e+02 : f32
    %10 = vector.broadcast %cst_6 : f32 to vector<2x1xf32>
    %11 = arith.divf %9, %10 : vector<2x1xf32>
    %12 = arith.mulf %6, %6 : vector<2x1xf32>
    %13 = arith.subf %11, %12 : vector<2x1xf32>
    %cst_7 = arith.constant 0.000000e+00 : f32
    %14 = vector.broadcast %cst_7 : f32 to vector<2x1xf32>
    %15 = arith.maximumf %13, %14 : vector<2x1xf32>
    %c0_8 = arith.constant 0 : index
    %c0_9 = arith.constant 0 : index
    %16 = vector.load %arg3[%c0_8, %c0_9] : memref<2x1xf32, #tpu.memory_space<vmem>>, vector<2x1xf32>
    %cst_10 = arith.constant 9.99999996E-13 : f32
    %17 = vector.broadcast %cst_10 : f32 to vector<2x1xf32>
    %18 = arith.addf %15, %17 : vector<2x1xf32>
    %19 = math.rsqrt %18 : vector<2x1xf32>
    %20 = arith.mulf %16, %19 : vector<2x1xf32>
    %21 = vector.broadcast %6 : vector<2x1xf32> to vector<2x128xf32>
    %22 = arith.subf %2, %21 : vector<2x128xf32>
    %23 = vector.broadcast %20 : vector<2x1xf32> to vector<2x128xf32>
    %24 = arith.mulf %22, %23 : vector<2x128xf32>
    %c0_11 = arith.constant 0 : index
    %c0_12 = arith.constant 0 : index
    %25 = vector.load %arg4[%c0_11, %c0_12] : memref<2x1xf32, #tpu.memory_space<vmem>>, vector<2x1xf32>
    %26 = vector.broadcast %25 : vector<2x1xf32> to vector<2x128xf32>
    %27 = arith.addf %24, %26 : vector<2x128xf32>
    %cst_13 = arith.constant 0.000000e+00 : f32
    %28 = vector.broadcast %cst_13 : f32 to vector<2x128xf32>
    %29 = arith.maximumf %27, %28 : vector<2x128xf32>
    %c0_14 = arith.constant 0 : index
    %c0_15 = arith.constant 0 : index
    %30 = vector.load %arg5[%c0_14, %c0_15] : memref<2x128xf32, #tpu.memory_space<vmem>>, vector<2x128xf32>
    tpu.vector_store %arg5[%c0_14, %c0_15], %29 {strides = array<i32>} : memref<2x128xf32, #tpu.memory_space<vmem>>, vector<2x128xf32>,
    return
  }
  func.func @transform_0(%arg0: i32) -> (i32, i32) {
    %c0_i32 = arith.constant 0 : i32
    %c0_i32_0 = arith.constant 0 : i32
    %c0_i32_1 = arith.constant 0 : i32
    return %c0_i32, %c0_i32_0 : i32, i32
  }
  func.func @transform_1(%arg0: i32) -> (i32, i32) {
    %c0_i32 = arith.constant 0 : i32
    %c0_i32_0 = arith.constant 0 : i32
    %c0_i32_1 = arith.constant 0 : i32
    return %c0_i32, %c0_i32_0 : i32, i32
  }
  func.func @transform_2(%arg0: i32) -> (i32, i32) {
    %c0_i32 = arith.constant 0 : i32
    %c0_i32_0 = arith.constant 0 : i32
    %c0_i32_1 = arith.constant 0 : i32
    return %c0_i32, %c0_i32_0 : i32, i32
  }
  func.func @transform_3(%arg0: i32) -> (i32, i32) {
    %c0_i32 = arith.constant 0 : i32
    %c0_i32_0 = arith.constant 0 : i32
    %c0_i32_1 = arith.constant 0 : i32
    return %c0_i32, %c0_i32_0 : i32, i32
  }
  func.func @transform_4(%arg0: i32) -> (i32, i32) {
    %c0_i32 = arith.constant 0 : i32
    %c0_i32_0 = arith.constant 0 : i32
    %c0_i32_1 = arith.constant 0 : i32
    return %c0_i32, %c0_i32_0 : i32, i32
  }
}

module attributes {stable_mosaic.version = 11 : i64} {
  func.func @_conv_bn_relu_kernel(%arg0: i32, %arg1: memref<2x18xbf16, #tpu.memory_space<vmem>>, %arg2: memref<18x32xbf16, #tpu.memory_space<vmem>>, %arg3: memref<2x1xf32, #tpu.memory_space<vmem>>, %arg4: memref<2x1xf32, #tpu.memory_space<vmem>>, %arg5: memref<2x32xf32, #tpu.memory_space<vmem>>) attributes {dimension_semantics = [#tpu.dimension_semantics<arbitrary>], iteration_bounds = array<i64: 1>, scalar_prefetch = 0 : i64, scratch_operands = 0 : i64, tpu.core_type = #tpu.core_type<tc>, window_params = [{pipeline_mode = #tpu.pipeline_mode<synchronous>, transform_indices = @transform_0, window_bounds = array<i64: 2, 18>}, {pipeline_mode = #tpu.pipeline_mode<synchronous>, transform_indices = @transform_1, window_bounds = array<i64: 18, 32>}, {pipeline_mode = #tpu.pipeline_mode<synchronous>, transform_indices = @transform_2, window_bounds = array<i64: 2, 1>}, {pipeline_mode = #tpu.pipeline_mode<synchronous>, transform_indices = @transform_3, window_bounds = array<i64: 2, 1>}, {pipeline_mode = #tpu.pipeline_mode<synchronous>, transform_indices = @transform_4, window_bounds = array<i64: 2, 32>}]} {
    %c0 = arith.constant 0 : index
    %c0_0 = arith.constant 0 : index
    %0 = vector.load %arg1[%c0, %c0_0] : memref<2x18xbf16, #tpu.memory_space<vmem>>, vector<2x18xbf16>
    %c0_1 = arith.constant 0 : index
    %c0_2 = arith.constant 0 : index
    %1 = vector.load %arg2[%c0_1, %c0_2] : memref<18x32xbf16, #tpu.memory_space<vmem>>, vector<18x32xbf16>
    %cst = arith.constant dense<0.000000e+00> : vector<2x32xf32>
    %2 = tpu.matmul %0, %1, %cst {dimension_numbers = #tpu.dot_dimension_numbers<[1], [0], [0], [1], [0, 0, 1, 1], [], []>} : vector<2x18xbf16>, vector<18x32xbf16>, vector<2x32xf32> -> vector<2x32xf32>
    %cst_3 = arith.constant dense<0.000000e+00> : vector<2xf32>
    %3 = vector.multi_reduction <add>, %2, %cst_3 [1] : vector<2x32xf32> to vector<2xf32>
    %4 = vector.shape_cast %3 : vector<2xf32> to vector<2x1xf32>
    %cst_4 = arith.constant 3.200000e+01 : f32
    %5 = vector.broadcast %cst_4 : f32 to vector<2x1xf32>
    %6 = arith.divf %4, %5 : vector<2x1xf32>
    %7 = arith.mulf %2, %2 : vector<2x32xf32>
    %cst_5 = arith.constant dense<0.000000e+00> : vector<2xf32>
    %8 = vector.multi_reduction <add>, %7, %cst_5 [1] : vector<2x32xf32> to vector<2xf32>
    %9 = vector.shape_cast %8 : vector<2xf32> to vector<2x1xf32>
    %cst_6 = arith.constant 3.200000e+01 : f32
    %10 = vector.broadcast %cst_6 : f32 to vector<2x1xf32>
    %11 = arith.divf %9, %10 : vector<2x1xf32>
    %12 = arith.mulf %6, %6 : vector<2x1xf32>
    %13 = arith.subf %11, %12 : vector<2x1xf32>
    %cst_7 = arith.constant 0.000000e+00 : f32
    %14 = vector.broadcast %cst_7 : f32 to vector<2x1xf32>
    %15 = arith.maximumf %13, %14 : vector<2x1xf32>
    %c0_8 = arith.constant 0 : index
    %c0_9 = arith.constant 0 : index
    %16 = vector.load %arg3[%c0_8, %c0_9] : memref<2x1xf32, #tpu.memory_space<vmem>>, vector<2x1xf32>
    %cst_10 = arith.constant 9.99999996E-13 : f32
    %17 = vector.broadcast %cst_10 : f32 to vector<2x1xf32>
    %18 = arith.addf %15, %17 : vector<2x1xf32>
    %19 = math.rsqrt %18 : vector<2x1xf32>
    %20 = arith.mulf %16, %19 : vector<2x1xf32>
    %21 = vector.broadcast %6 : vector<2x1xf32> to vector<2x32xf32>
    %22 = arith.subf %2, %21 : vector<2x32xf32>
    %23 = vector.broadcast %20 : vector<2x1xf32> to vector<2x32xf32>
    %24 = arith.mulf %22, %23 : vector<2x32xf32>
    %c0_11 = arith.constant 0 : index
    %c0_12 = arith.constant 0 : index
    %25 = vector.load %arg4[%c0_11, %c0_12] : memref<2x1xf32, #tpu.memory_space<vmem>>, vector<2x1xf32>
    %26 = vector.broadcast %25 : vector<2x1xf32> to vector<2x32xf32>
    %27 = arith.addf %24, %26 : vector<2x32xf32>
    %cst_13 = arith.constant 0.000000e+00 : f32
    %28 = vector.broadcast %cst_13 : f32 to vector<2x32xf32>
    %29 = arith.maximumf %27, %28 : vector<2x32xf32>
    %c0_14 = arith.constant 0 : index
    %c0_15 = arith.constant 0 : index
    %30 = vector.load %arg5[%c0_14, %c0_15] : memref<2x32xf32, #tpu.memory_space<vmem>>, vector<2x32xf32>
    tpu.vector_store %arg5[%c0_14, %c0_15], %29 {strides = array<i32>} : memref<2x32xf32, #tpu.memory_space<vmem>>, vector<2x32xf32>,
    return
  }
  func.func @transform_0(%arg0: i32) -> (i32, i32) {
    %c0_i32 = arith.constant 0 : i32
    %c0_i32_0 = arith.constant 0 : i32
    %c0_i32_1 = arith.constant 0 : i32
    return %c0_i32, %c0_i32_0 : i32, i32
  }
  func.func @transform_1(%arg0: i32) -> (i32, i32) {
    %c0_i32 = arith.constant 0 : i32
    %c0_i32_0 = arith.constant 0 : i32
    %c0_i32_1 = arith.constant 0 : i32
    return %c0_i32, %c0_i32_0 : i32, i32
  }
  func.func @transform_2(%arg0: i32) -> (i32, i32) {
    %c0_i32 = arith.constant 0 : i32
    %c0_i32_0 = arith.constant 0 : i32
    %c0_i32_1 = arith.constant 0 : i32
    return %c0_i32, %c0_i32_0 : i32, i32
  }
  func.func @transform_3(%arg0: i32) -> (i32, i32) {
    %c0_i32 = arith.constant 0 : i32
    %c0_i32_0 = arith.constant 0 : i32
    %c0_i32_1 = arith.constant 0 : i32
    return %c0_i32, %c0_i32_0 : i32, i32
  }
  func.func @transform_4(%arg0: i32) -> (i32, i32) {
    %c0_i32 = arith.constant 0 : i32
    %c0_i32_0 = arith.constant 0 : i32
    %c0_i32_1 = arith.constant 0 : i32
    return %c0_i32, %c0_i32_0 : i32, i32
  }
}

module attributes {stable_mosaic.version = 11 : i64} {
  func.func @_conv_bn_relu_kernel(%arg0: i32, %arg1: memref<2x36xbf16, #tpu.memory_space<vmem>>, %arg2: memref<36x128xbf16, #tpu.memory_space<vmem>>, %arg3: memref<2x1xf32, #tpu.memory_space<vmem>>, %arg4: memref<2x1xf32, #tpu.memory_space<vmem>>, %arg5: memref<2x128xf32, #tpu.memory_space<vmem>>) attributes {dimension_semantics = [#tpu.dimension_semantics<arbitrary>], iteration_bounds = array<i64: 1>, scalar_prefetch = 0 : i64, scratch_operands = 0 : i64, tpu.core_type = #tpu.core_type<tc>, window_params = [{pipeline_mode = #tpu.pipeline_mode<synchronous>, transform_indices = @transform_0, window_bounds = array<i64: 2, 36>}, {pipeline_mode = #tpu.pipeline_mode<synchronous>, transform_indices = @transform_1, window_bounds = array<i64: 36, 128>}, {pipeline_mode = #tpu.pipeline_mode<synchronous>, transform_indices = @transform_2, window_bounds = array<i64: 2, 1>}, {pipeline_mode = #tpu.pipeline_mode<synchronous>, transform_indices = @transform_3, window_bounds = array<i64: 2, 1>}, {pipeline_mode = #tpu.pipeline_mode<synchronous>, transform_indices = @transform_4, window_bounds = array<i64: 2, 128>}]} {
    %c0 = arith.constant 0 : index
    %c0_0 = arith.constant 0 : index
    %0 = vector.load %arg1[%c0, %c0_0] : memref<2x36xbf16, #tpu.memory_space<vmem>>, vector<2x36xbf16>
    %c0_1 = arith.constant 0 : index
    %c0_2 = arith.constant 0 : index
    %1 = vector.load %arg2[%c0_1, %c0_2] : memref<36x128xbf16, #tpu.memory_space<vmem>>, vector<36x128xbf16>
    %cst = arith.constant dense<0.000000e+00> : vector<2x128xf32>
    %2 = tpu.matmul %0, %1, %cst {dimension_numbers = #tpu.dot_dimension_numbers<[1], [0], [0], [1], [0, 0, 1, 1], [], []>} : vector<2x36xbf16>, vector<36x128xbf16>, vector<2x128xf32> -> vector<2x128xf32>
    %cst_3 = arith.constant dense<0.000000e+00> : vector<2xf32>
    %3 = vector.multi_reduction <add>, %2, %cst_3 [1] : vector<2x128xf32> to vector<2xf32>
    %4 = vector.shape_cast %3 : vector<2xf32> to vector<2x1xf32>
    %cst_4 = arith.constant 1.280000e+02 : f32
    %5 = vector.broadcast %cst_4 : f32 to vector<2x1xf32>
    %6 = arith.divf %4, %5 : vector<2x1xf32>
    %7 = arith.mulf %2, %2 : vector<2x128xf32>
    %cst_5 = arith.constant dense<0.000000e+00> : vector<2xf32>
    %8 = vector.multi_reduction <add>, %7, %cst_5 [1] : vector<2x128xf32> to vector<2xf32>
    %9 = vector.shape_cast %8 : vector<2xf32> to vector<2x1xf32>
    %cst_6 = arith.constant 1.280000e+02 : f32
    %10 = vector.broadcast %cst_6 : f32 to vector<2x1xf32>
    %11 = arith.divf %9, %10 : vector<2x1xf32>
    %12 = arith.mulf %6, %6 : vector<2x1xf32>
    %13 = arith.subf %11, %12 : vector<2x1xf32>
    %cst_7 = arith.constant 0.000000e+00 : f32
    %14 = vector.broadcast %cst_7 : f32 to vector<2x1xf32>
    %15 = arith.maximumf %13, %14 : vector<2x1xf32>
    %c0_8 = arith.constant 0 : index
    %c0_9 = arith.constant 0 : index
    %16 = vector.load %arg3[%c0_8, %c0_9] : memref<2x1xf32, #tpu.memory_space<vmem>>, vector<2x1xf32>
    %cst_10 = arith.constant 9.99999996E-13 : f32
    %17 = vector.broadcast %cst_10 : f32 to vector<2x1xf32>
    %18 = arith.addf %15, %17 : vector<2x1xf32>
    %19 = math.rsqrt %18 : vector<2x1xf32>
    %20 = arith.mulf %16, %19 : vector<2x1xf32>
    %21 = vector.broadcast %6 : vector<2x1xf32> to vector<2x128xf32>
    %22 = arith.subf %2, %21 : vector<2x128xf32>
    %23 = vector.broadcast %20 : vector<2x1xf32> to vector<2x128xf32>
    %24 = arith.mulf %22, %23 : vector<2x128xf32>
    %c0_11 = arith.constant 0 : index
    %c0_12 = arith.constant 0 : index
    %25 = vector.load %arg4[%c0_11, %c0_12] : memref<2x1xf32, #tpu.memory_space<vmem>>, vector<2x1xf32>
    %26 = vector.broadcast %25 : vector<2x1xf32> to vector<2x128xf32>
    %27 = arith.addf %24, %26 : vector<2x128xf32>
    %cst_13 = arith.constant 0.000000e+00 : f32
    %28 = vector.broadcast %cst_13 : f32 to vector<2x128xf32>
    %29 = arith.maximumf %27, %28 : vector<2x128xf32>
    %c0_14 = arith.constant 0 : index
    %c0_15 = arith.constant 0 : index
    %30 = vector.load %arg5[%c0_14, %c0_15] : memref<2x128xf32, #tpu.memory_space<vmem>>, vector<2x128xf32>
    tpu.vector_store %arg5[%c0_14, %c0_15], %29 {strides = array<i32>} : memref<2x128xf32, #tpu.memory_space<vmem>>, vector<2x128xf32>,
    return
  }
  func.func @transform_0(%arg0: i32) -> (i32, i32) {
    %c0_i32 = arith.constant 0 : i32
    %c0_i32_0 = arith.constant 0 : i32
    %c0_i32_1 = arith.constant 0 : i32
    return %c0_i32, %c0_i32_0 : i32, i32
  }
  func.func @transform_1(%arg0: i32) -> (i32, i32) {
    %c0_i32 = arith.constant 0 : i32
    %c0_i32_0 = arith.constant 0 : i32
    %c0_i32_1 = arith.constant 0 : i32
    return %c0_i32, %c0_i32_0 : i32, i32
  }
  func.func @transform_2(%arg0: i32) -> (i32, i32) {
    %c0_i32 = arith.constant 0 : i32
    %c0_i32_0 = arith.constant 0 : i32
    %c0_i32_1 = arith.constant 0 : i32
    return %c0_i32, %c0_i32_0 : i32, i32
  }
  func.func @transform_3(%arg0: i32) -> (i32, i32) {
    %c0_i32 = arith.constant 0 : i32
    %c0_i32_0 = arith.constant 0 : i32
    %c0_i32_1 = arith.constant 0 : i32
    return %c0_i32, %c0_i32_0 : i32, i32
  }
  func.func @transform_4(%arg0: i32) -> (i32, i32) {
    %c0_i32 = arith.constant 0 : i32
    %c0_i32_0 = arith.constant 0 : i32
    %c0_i32_1 = arith.constant 0 : i32
    return %c0_i32, %c0_i32_0 : i32, i32
  }
}

module attributes {stable_mosaic.version = 11 : i64} {
  func.func @_convgemm_bias_kernel(%arg0: i32, %arg1: memref<4x2xbf16, #tpu.memory_space<vmem>>, %arg2: memref<2x128xbf16, #tpu.memory_space<vmem>>, %arg3: memref<4x1xf32, #tpu.memory_space<vmem>>, %arg4: memref<4x128xf32, #tpu.memory_space<vmem>>) attributes {dimension_semantics = [#tpu.dimension_semantics<parallel>], iteration_bounds = array<i64: 1>, scalar_prefetch = 0 : i64, scratch_operands = 0 : i64, tpu.core_type = #tpu.core_type<tc>, window_params = [{pipeline_mode = #tpu.pipeline_mode<synchronous>, transform_indices = @transform_0, window_bounds = array<i64: 4, 2>}, {transform_indices = @transform_1, window_bounds = array<i64: 2, 128>}, {pipeline_mode = #tpu.pipeline_mode<synchronous>, transform_indices = @transform_2, window_bounds = array<i64: 4, 1>}, {transform_indices = @transform_3, window_bounds = array<i64: 4, 128>}]} {
    %c0 = arith.constant 0 : index
    %c0_0 = arith.constant 0 : index
    %0 = vector.load %arg1[%c0, %c0_0] : memref<4x2xbf16, #tpu.memory_space<vmem>>, vector<4x2xbf16>
    %c0_1 = arith.constant 0 : index
    %c0_2 = arith.constant 0 : index
    %1 = vector.load %arg2[%c0_1, %c0_2] : memref<2x128xbf16, #tpu.memory_space<vmem>>, vector<2x128xbf16>
    %cst = arith.constant dense<0.000000e+00> : vector<4x128xf32>
    %2 = tpu.matmul %0, %1, %cst {dimension_numbers = #tpu.dot_dimension_numbers<[1], [0], [0], [1], [0, 0, 1, 1], [], []>} : vector<4x2xbf16>, vector<2x128xbf16>, vector<4x128xf32> -> vector<4x128xf32>
    %c0_3 = arith.constant 0 : index
    %c0_4 = arith.constant 0 : index
    %3 = vector.load %arg3[%c0_3, %c0_4] : memref<4x1xf32, #tpu.memory_space<vmem>>, vector<4x1xf32>
    %4 = vector.broadcast %3 : vector<4x1xf32> to vector<4x128xf32>
    %5 = arith.addf %2, %4 : vector<4x128xf32>
    %c0_5 = arith.constant 0 : index
    %c0_6 = arith.constant 0 : index
    %6 = vector.load %arg4[%c0_5, %c0_6] : memref<4x128xf32, #tpu.memory_space<vmem>>, vector<4x128xf32>
    tpu.vector_store %arg4[%c0_5, %c0_6], %5 {strides = array<i32>} : memref<4x128xf32, #tpu.memory_space<vmem>>, vector<4x128xf32>,
    return
  }
  func.func @transform_0(%arg0: i32) -> (i32, i32) {
    %c0_i32 = arith.constant 0 : i32
    %c0_i32_0 = arith.constant 0 : i32
    %c0_i32_1 = arith.constant 0 : i32
    return %c0_i32, %c0_i32_0 : i32, i32
  }
  func.func @transform_1(%arg0: i32) -> (i32, i32) {
    %c0_i32 = arith.constant 0 : i32
    %c0_i32_0 = arith.constant 0 : i32
    return %c0_i32, %arg0 : i32, i32
  }
  func.func @transform_2(%arg0: i32) -> (i32, i32) {
    %c0_i32 = arith.constant 0 : i32
    %c0_i32_0 = arith.constant 0 : i32
    %c0_i32_1 = arith.constant 0 : i32
    return %c0_i32, %c0_i32_0 : i32, i32
  }
  func.func @transform_3(%arg0: i32) -> (i32, i32) {
    %c0_i32 = arith.constant 0 : i32
    %c0_i32_0 = arith.constant 0 : i32
    return %c0_i32, %arg0 : i32, i32
  }
}

module attributes {stable_mosaic.version = 11 : i64} {
  func.func @_convgemm_bias_kernel(%arg0: i32, %arg1: memref<8x18xbf16, #tpu.memory_space<vmem>>, %arg2: memref<18x128xbf16, #tpu.memory_space<vmem>>, %arg3: memref<8x1xf32, #tpu.memory_space<vmem>>, %arg4: memref<8x128xf32, #tpu.memory_space<vmem>>) attributes {dimension_semantics = [#tpu.dimension_semantics<parallel>], iteration_bounds = array<i64: 2>, scalar_prefetch = 0 : i64, scratch_operands = 0 : i64, tpu.core_type = #tpu.core_type<tc>, window_params = [{pipeline_mode = #tpu.pipeline_mode<synchronous>, transform_indices = @transform_0, window_bounds = array<i64: 8, 18>}, {transform_indices = @transform_1, window_bounds = array<i64: 18, 128>}, {pipeline_mode = #tpu.pipeline_mode<synchronous>, transform_indices = @transform_2, window_bounds = array<i64: 8, 1>}, {transform_indices = @transform_3, window_bounds = array<i64: 8, 128>}]} {
    %c0 = arith.constant 0 : index
    %c0_0 = arith.constant 0 : index
    %0 = vector.load %arg1[%c0, %c0_0] : memref<8x18xbf16, #tpu.memory_space<vmem>>, vector<8x18xbf16>
    %c0_1 = arith.constant 0 : index
    %c0_2 = arith.constant 0 : index
    %1 = vector.load %arg2[%c0_1, %c0_2] : memref<18x128xbf16, #tpu.memory_space<vmem>>, vector<18x128xbf16>
    %cst = arith.constant dense<0.000000e+00> : vector<8x128xf32>
    %2 = tpu.matmul %0, %1, %cst {dimension_numbers = #tpu.dot_dimension_numbers<[1], [0], [0], [1], [0, 0, 1, 1], [], []>} : vector<8x18xbf16>, vector<18x128xbf16>, vector<8x128xf32> -> vector<8x128xf32>
    %c0_3 = arith.constant 0 : index
    %c0_4 = arith.constant 0 : index
    %3 = vector.load %arg3[%c0_3, %c0_4] : memref<8x1xf32, #tpu.memory_space<vmem>>, vector<8x1xf32>
    %4 = vector.broadcast %3 : vector<8x1xf32> to vector<8x128xf32>
    %5 = arith.addf %2, %4 : vector<8x128xf32>
    %c0_5 = arith.constant 0 : index
    %c0_6 = arith.constant 0 : index
    %6 = vector.load %arg4[%c0_5, %c0_6] : memref<8x128xf32, #tpu.memory_space<vmem>>, vector<8x128xf32>
    tpu.vector_store %arg4[%c0_5, %c0_6], %5 {strides = array<i32>} : memref<8x128xf32, #tpu.memory_space<vmem>>, vector<8x128xf32>,
    return
  }
  func.func @transform_0(%arg0: i32) -> (i32, i32) {
    %c0_i32 = arith.constant 0 : i32
    %c0_i32_0 = arith.constant 0 : i32
    %c0_i32_1 = arith.constant 0 : i32
    return %c0_i32, %c0_i32_0 : i32, i32
  }
  func.func @transform_1(%arg0: i32) -> (i32, i32) {
    %c0_i32 = arith.constant 0 : i32
    %c0_i32_0 = arith.constant 0 : i32
    return %c0_i32, %arg0 : i32, i32
  }
  func.func @transform_2(%arg0: i32) -> (i32, i32) {
    %c0_i32 = arith.constant 0 : i32
    %c0_i32_0 = arith.constant 0 : i32
    %c0_i32_1 = arith.constant 0 : i32
    return %c0_i32, %c0_i32_0 : i32, i32
  }
  func.func @transform_3(%arg0: i32) -> (i32, i32) {
    %c0_i32 = arith.constant 0 : i32
    %c0_i32_0 = arith.constant 0 : i32
    return %c0_i32, %arg0 : i32, i32
  }
}

module attributes {stable_mosaic.version = 11 : i64} {
  func.func @_conv_bn_relu_kernel(%arg0: i32, %arg1: memref<2x72xbf16, #tpu.memory_space<vmem>>, %arg2: memref<72x256xbf16, #tpu.memory_space<vmem>>, %arg3: memref<2x1xf32, #tpu.memory_space<vmem>>, %arg4: memref<2x1xf32, #tpu.memory_space<vmem>>, %arg5: memref<2x256xf32, #tpu.memory_space<vmem>>) attributes {dimension_semantics = [#tpu.dimension_semantics<arbitrary>], iteration_bounds = array<i64: 1>, scalar_prefetch = 0 : i64, scratch_operands = 0 : i64, tpu.core_type = #tpu.core_type<tc>, window_params = [{pipeline_mode = #tpu.pipeline_mode<synchronous>, transform_indices = @transform_0, window_bounds = array<i64: 2, 72>}, {pipeline_mode = #tpu.pipeline_mode<synchronous>, transform_indices = @transform_1, window_bounds = array<i64: 72, 256>}, {pipeline_mode = #tpu.pipeline_mode<synchronous>, transform_indices = @transform_2, window_bounds = array<i64: 2, 1>}, {pipeline_mode = #tpu.pipeline_mode<synchronous>, transform_indices = @transform_3, window_bounds = array<i64: 2, 1>}, {pipeline_mode = #tpu.pipeline_mode<synchronous>, transform_indices = @transform_4, window_bounds = array<i64: 2, 256>}]} {
    %c0 = arith.constant 0 : index
    %c0_0 = arith.constant 0 : index
    %0 = vector.load %arg1[%c0, %c0_0] : memref<2x72xbf16, #tpu.memory_space<vmem>>, vector<2x72xbf16>
    %c0_1 = arith.constant 0 : index
    %c0_2 = arith.constant 0 : index
    %1 = vector.load %arg2[%c0_1, %c0_2] : memref<72x256xbf16, #tpu.memory_space<vmem>>, vector<72x256xbf16>
    %cst = arith.constant dense<0.000000e+00> : vector<2x256xf32>
    %2 = tpu.matmul %0, %1, %cst {dimension_numbers = #tpu.dot_dimension_numbers<[1], [0], [0], [1], [0, 0, 1, 1], [], []>} : vector<2x72xbf16>, vector<72x256xbf16>, vector<2x256xf32> -> vector<2x256xf32>
    %cst_3 = arith.constant dense<0.000000e+00> : vector<2xf32>
    %3 = vector.multi_reduction <add>, %2, %cst_3 [1] : vector<2x256xf32> to vector<2xf32>
    %4 = vector.shape_cast %3 : vector<2xf32> to vector<2x1xf32>
    %cst_4 = arith.constant 2.560000e+02 : f32
    %5 = vector.broadcast %cst_4 : f32 to vector<2x1xf32>
    %6 = arith.divf %4, %5 : vector<2x1xf32>
    %7 = arith.mulf %2, %2 : vector<2x256xf32>
    %cst_5 = arith.constant dense<0.000000e+00> : vector<2xf32>
    %8 = vector.multi_reduction <add>, %7, %cst_5 [1] : vector<2x256xf32> to vector<2xf32>
    %9 = vector.shape_cast %8 : vector<2xf32> to vector<2x1xf32>
    %cst_6 = arith.constant 2.560000e+02 : f32
    %10 = vector.broadcast %cst_6 : f32 to vector<2x1xf32>
    %11 = arith.divf %9, %10 : vector<2x1xf32>
    %12 = arith.mulf %6, %6 : vector<2x1xf32>
    %13 = arith.subf %11, %12 : vector<2x1xf32>
    %cst_7 = arith.constant 0.000000e+00 : f32
    %14 = vector.broadcast %cst_7 : f32 to vector<2x1xf32>
    %15 = arith.maximumf %13, %14 : vector<2x1xf32>
    %c0_8 = arith.constant 0 : index
    %c0_9 = arith.constant 0 : index
    %16 = vector.load %arg3[%c0_8, %c0_9] : memref<2x1xf32, #tpu.memory_space<vmem>>, vector<2x1xf32>
    %cst_10 = arith.constant 9.99999996E-13 : f32
    %17 = vector.broadcast %cst_10 : f32 to vector<2x1xf32>
    %18 = arith.addf %15, %17 : vector<2x1xf32>
    %19 = math.rsqrt %18 : vector<2x1xf32>
    %20 = arith.mulf %16, %19 : vector<2x1xf32>
    %21 = vector.broadcast %6 : vector<2x1xf32> to vector<2x256xf32>
    %22 = arith.subf %2, %21 : vector<2x256xf32>
    %23 = vector.broadcast %20 : vector<2x1xf32> to vector<2x256xf32>
    %24 = arith.mulf %22, %23 : vector<2x256xf32>
    %c0_11 = arith.constant 0 : index
    %c0_12 = arith.constant 0 : index
    %25 = vector.load %arg4[%c0_11, %c0_12] : memref<2x1xf32, #tpu.memory_space<vmem>>, vector<2x1xf32>
    %26 = vector.broadcast %25 : vector<2x1xf32> to vector<2x256xf32>
    %27 = arith.addf %24, %26 : vector<2x256xf32>
    %cst_13 = arith.constant 0.000000e+00 : f32
    %28 = vector.broadcast %cst_13 : f32 to vector<2x256xf32>
    %29 = arith.maximumf %27, %28 : vector<2x256xf32>
    %c0_14 = arith.constant 0 : index
    %c0_15 = arith.constant 0 : index
    %30 = vector.load %arg5[%c0_14, %c0_15] : memref<2x256xf32, #tpu.memory_space<vmem>>, vector<2x256xf32>
    tpu.vector_store %arg5[%c0_14, %c0_15], %29 {strides = array<i32>} : memref<2x256xf32, #tpu.memory_space<vmem>>, vector<2x256xf32>,
    return
  }
  func.func @transform_0(%arg0: i32) -> (i32, i32) {
    %c0_i32 = arith.constant 0 : i32
    %c0_i32_0 = arith.constant 0 : i32
    %c0_i32_1 = arith.constant 0 : i32
    return %c0_i32, %c0_i32_0 : i32, i32
  }
  func.func @transform_1(%arg0: i32) -> (i32, i32) {
    %c0_i32 = arith.constant 0 : i32
    %c0_i32_0 = arith.constant 0 : i32
    %c0_i32_1 = arith.constant 0 : i32
    return %c0_i32, %c0_i32_0 : i32, i32
  }
  func.func @transform_2(%arg0: i32) -> (i32, i32) {
    %c0_i32 = arith.constant 0 : i32
    %c0_i32_0 = arith.constant 0 : i32
    %c0_i32_1 = arith.constant 0 : i32
    return %c0_i32, %c0_i32_0 : i32, i32
  }
  func.func @transform_3(%arg0: i32) -> (i32, i32) {
    %c0_i32 = arith.constant 0 : i32
    %c0_i32_0 = arith.constant 0 : i32
    %c0_i32_1 = arith.constant 0 : i32
    return %c0_i32, %c0_i32_0 : i32, i32
  }
  func.func @transform_4(%arg0: i32) -> (i32, i32) {
    %c0_i32 = arith.constant 0 : i32
    %c0_i32_0 = arith.constant 0 : i32
    %c0_i32_1 = arith.constant 0 : i32
    return %c0_i32, %c0_i32_0 : i32, i32
  }
}

module attributes {stable_mosaic.version = 11 : i64} {
  func.func @_conv_bn_relu_kernel(%arg0: i32, %arg1: memref<2x18xbf16, #tpu.memory_space<vmem>>, %arg2: memref<18x64xbf16, #tpu.memory_space<vmem>>, %arg3: memref<2x1xf32, #tpu.memory_space<vmem>>, %arg4: memref<2x1xf32, #tpu.memory_space<vmem>>, %arg5: memref<2x64xf32, #tpu.memory_space<vmem>>) attributes {dimension_semantics = [#tpu.dimension_semantics<arbitrary>], iteration_bounds = array<i64: 1>, scalar_prefetch = 0 : i64, scratch_operands = 0 : i64, tpu.core_type = #tpu.core_type<tc>, window_params = [{pipeline_mode = #tpu.pipeline_mode<synchronous>, transform_indices = @transform_0, window_bounds = array<i64: 2, 18>}, {pipeline_mode = #tpu.pipeline_mode<synchronous>, transform_indices = @transform_1, window_bounds = array<i64: 18, 64>}, {pipeline_mode = #tpu.pipeline_mode<synchronous>, transform_indices = @transform_2, window_bounds = array<i64: 2, 1>}, {pipeline_mode = #tpu.pipeline_mode<synchronous>, transform_indices = @transform_3, window_bounds = array<i64: 2, 1>}, {pipeline_mode = #tpu.pipeline_mode<synchronous>, transform_indices = @transform_4, window_bounds = array<i64: 2, 64>}]} {
    %c0 = arith.constant 0 : index
    %c0_0 = arith.constant 0 : index
    %0 = vector.load %arg1[%c0, %c0_0] : memref<2x18xbf16, #tpu.memory_space<vmem>>, vector<2x18xbf16>
    %c0_1 = arith.constant 0 : index
    %c0_2 = arith.constant 0 : index
    %1 = vector.load %arg2[%c0_1, %c0_2] : memref<18x64xbf16, #tpu.memory_space<vmem>>, vector<18x64xbf16>
    %cst = arith.constant dense<0.000000e+00> : vector<2x64xf32>
    %2 = tpu.matmul %0, %1, %cst {dimension_numbers = #tpu.dot_dimension_numbers<[1], [0], [0], [1], [0, 0, 1, 1], [], []>} : vector<2x18xbf16>, vector<18x64xbf16>, vector<2x64xf32> -> vector<2x64xf32>
    %cst_3 = arith.constant dense<0.000000e+00> : vector<2xf32>
    %3 = vector.multi_reduction <add>, %2, %cst_3 [1] : vector<2x64xf32> to vector<2xf32>
    %4 = vector.shape_cast %3 : vector<2xf32> to vector<2x1xf32>
    %cst_4 = arith.constant 6.400000e+01 : f32
    %5 = vector.broadcast %cst_4 : f32 to vector<2x1xf32>
    %6 = arith.divf %4, %5 : vector<2x1xf32>
    %7 = arith.mulf %2, %2 : vector<2x64xf32>
    %cst_5 = arith.constant dense<0.000000e+00> : vector<2xf32>
    %8 = vector.multi_reduction <add>, %7, %cst_5 [1] : vector<2x64xf32> to vector<2xf32>
    %9 = vector.shape_cast %8 : vector<2xf32> to vector<2x1xf32>
    %cst_6 = arith.constant 6.400000e+01 : f32
    %10 = vector.broadcast %cst_6 : f32 to vector<2x1xf32>
    %11 = arith.divf %9, %10 : vector<2x1xf32>
    %12 = arith.mulf %6, %6 : vector<2x1xf32>
    %13 = arith.subf %11, %12 : vector<2x1xf32>
    %cst_7 = arith.constant 0.000000e+00 : f32
    %14 = vector.broadcast %cst_7 : f32 to vector<2x1xf32>
    %15 = arith.maximumf %13, %14 : vector<2x1xf32>
    %c0_8 = arith.constant 0 : index
    %c0_9 = arith.constant 0 : index
    %16 = vector.load %arg3[%c0_8, %c0_9] : memref<2x1xf32, #tpu.memory_space<vmem>>, vector<2x1xf32>
    %cst_10 = arith.constant 9.99999996E-13 : f32
    %17 = vector.broadcast %cst_10 : f32 to vector<2x1xf32>
    %18 = arith.addf %15, %17 : vector<2x1xf32>
    %19 = math.rsqrt %18 : vector<2x1xf32>
    %20 = arith.mulf %16, %19 : vector<2x1xf32>
    %21 = vector.broadcast %6 : vector<2x1xf32> to vector<2x64xf32>
    %22 = arith.subf %2, %21 : vector<2x64xf32>
    %23 = vector.broadcast %20 : vector<2x1xf32> to vector<2x64xf32>
    %24 = arith.mulf %22, %23 : vector<2x64xf32>
    %c0_11 = arith.constant 0 : index
    %c0_12 = arith.constant 0 : index
    %25 = vector.load %arg4[%c0_11, %c0_12] : memref<2x1xf32, #tpu.memory_space<vmem>>, vector<2x1xf32>
    %26 = vector.broadcast %25 : vector<2x1xf32> to vector<2x64xf32>
    %27 = arith.addf %24, %26 : vector<2x64xf32>
    %cst_13 = arith.constant 0.000000e+00 : f32
    %28 = vector.broadcast %cst_13 : f32 to vector<2x64xf32>
    %29 = arith.maximumf %27, %28 : vector<2x64xf32>
    %c0_14 = arith.constant 0 : index
    %c0_15 = arith.constant 0 : index
    %30 = vector.load %arg5[%c0_14, %c0_15] : memref<2x64xf32, #tpu.memory_space<vmem>>, vector<2x64xf32>
    tpu.vector_store %arg5[%c0_14, %c0_15], %29 {strides = array<i32>} : memref<2x64xf32, #tpu.memory_space<vmem>>, vector<2x64xf32>,
    return
  }
  func.func @transform_0(%arg0: i32) -> (i32, i32) {
    %c0_i32 = arith.constant 0 : i32
    %c0_i32_0 = arith.constant 0 : i32
    %c0_i32_1 = arith.constant 0 : i32
    return %c0_i32, %c0_i32_0 : i32, i32
  }
  func.func @transform_1(%arg0: i32) -> (i32, i32) {
    %c0_i32 = arith.constant 0 : i32
    %c0_i32_0 = arith.constant 0 : i32
    %c0_i32_1 = arith.constant 0 : i32
    return %c0_i32, %c0_i32_0 : i32, i32
  }
  func.func @transform_2(%arg0: i32) -> (i32, i32) {
    %c0_i32 = arith.constant 0 : i32
    %c0_i32_0 = arith.constant 0 : i32
    %c0_i32_1 = arith.constant 0 : i32
    return %c0_i32, %c0_i32_0 : i32, i32
  }
  func.func @transform_3(%arg0: i32) -> (i32, i32) {
    %c0_i32 = arith.constant 0 : i32
    %c0_i32_0 = arith.constant 0 : i32
    %c0_i32_1 = arith.constant 0 : i32
    return %c0_i32, %c0_i32_0 : i32, i32
  }
  func.func @transform_4(%arg0: i32) -> (i32, i32) {
    %c0_i32 = arith.constant 0 : i32
    %c0_i32_0 = arith.constant 0 : i32
    %c0_i32_1 = arith.constant 0 : i32
    return %c0_i32, %c0_i32_0 : i32, i32
  }
}

module attributes {stable_mosaic.version = 11 : i64} {
  func.func @_conv_bn_relu_kernel(%arg0: i32, %arg1: memref<2x36xbf16, #tpu.memory_space<vmem>>, %arg2: memref<36x256xbf16, #tpu.memory_space<vmem>>, %arg3: memref<2x1xf32, #tpu.memory_space<vmem>>, %arg4: memref<2x1xf32, #tpu.memory_space<vmem>>, %arg5: memref<2x256xf32, #tpu.memory_space<vmem>>) attributes {dimension_semantics = [#tpu.dimension_semantics<arbitrary>], iteration_bounds = array<i64: 1>, scalar_prefetch = 0 : i64, scratch_operands = 0 : i64, tpu.core_type = #tpu.core_type<tc>, window_params = [{pipeline_mode = #tpu.pipeline_mode<synchronous>, transform_indices = @transform_0, window_bounds = array<i64: 2, 36>}, {pipeline_mode = #tpu.pipeline_mode<synchronous>, transform_indices = @transform_1, window_bounds = array<i64: 36, 256>}, {pipeline_mode = #tpu.pipeline_mode<synchronous>, transform_indices = @transform_2, window_bounds = array<i64: 2, 1>}, {pipeline_mode = #tpu.pipeline_mode<synchronous>, transform_indices = @transform_3, window_bounds = array<i64: 2, 1>}, {pipeline_mode = #tpu.pipeline_mode<synchronous>, transform_indices = @transform_4, window_bounds = array<i64: 2, 256>}]} {
    %c0 = arith.constant 0 : index
    %c0_0 = arith.constant 0 : index
    %0 = vector.load %arg1[%c0, %c0_0] : memref<2x36xbf16, #tpu.memory_space<vmem>>, vector<2x36xbf16>
    %c0_1 = arith.constant 0 : index
    %c0_2 = arith.constant 0 : index
    %1 = vector.load %arg2[%c0_1, %c0_2] : memref<36x256xbf16, #tpu.memory_space<vmem>>, vector<36x256xbf16>
    %cst = arith.constant dense<0.000000e+00> : vector<2x256xf32>
    %2 = tpu.matmul %0, %1, %cst {dimension_numbers = #tpu.dot_dimension_numbers<[1], [0], [0], [1], [0, 0, 1, 1], [], []>} : vector<2x36xbf16>, vector<36x256xbf16>, vector<2x256xf32> -> vector<2x256xf32>
    %cst_3 = arith.constant dense<0.000000e+00> : vector<2xf32>
    %3 = vector.multi_reduction <add>, %2, %cst_3 [1] : vector<2x256xf32> to vector<2xf32>
    %4 = vector.shape_cast %3 : vector<2xf32> to vector<2x1xf32>
    %cst_4 = arith.constant 2.560000e+02 : f32
    %5 = vector.broadcast %cst_4 : f32 to vector<2x1xf32>
    %6 = arith.divf %4, %5 : vector<2x1xf32>
    %7 = arith.mulf %2, %2 : vector<2x256xf32>
    %cst_5 = arith.constant dense<0.000000e+00> : vector<2xf32>
    %8 = vector.multi_reduction <add>, %7, %cst_5 [1] : vector<2x256xf32> to vector<2xf32>
    %9 = vector.shape_cast %8 : vector<2xf32> to vector<2x1xf32>
    %cst_6 = arith.constant 2.560000e+02 : f32
    %10 = vector.broadcast %cst_6 : f32 to vector<2x1xf32>
    %11 = arith.divf %9, %10 : vector<2x1xf32>
    %12 = arith.mulf %6, %6 : vector<2x1xf32>
    %13 = arith.subf %11, %12 : vector<2x1xf32>
    %cst_7 = arith.constant 0.000000e+00 : f32
    %14 = vector.broadcast %cst_7 : f32 to vector<2x1xf32>
    %15 = arith.maximumf %13, %14 : vector<2x1xf32>
    %c0_8 = arith.constant 0 : index
    %c0_9 = arith.constant 0 : index
    %16 = vector.load %arg3[%c0_8, %c0_9] : memref<2x1xf32, #tpu.memory_space<vmem>>, vector<2x1xf32>
    %cst_10 = arith.constant 9.99999996E-13 : f32
    %17 = vector.broadcast %cst_10 : f32 to vector<2x1xf32>
    %18 = arith.addf %15, %17 : vector<2x1xf32>
    %19 = math.rsqrt %18 : vector<2x1xf32>
    %20 = arith.mulf %16, %19 : vector<2x1xf32>
    %21 = vector.broadcast %6 : vector<2x1xf32> to vector<2x256xf32>
    %22 = arith.subf %2, %21 : vector<2x256xf32>
    %23 = vector.broadcast %20 : vector<2x1xf32> to vector<2x256xf32>
    %24 = arith.mulf %22, %23 : vector<2x256xf32>
    %c0_11 = arith.constant 0 : index
    %c0_12 = arith.constant 0 : index
    %25 = vector.load %arg4[%c0_11, %c0_12] : memref<2x1xf32, #tpu.memory_space<vmem>>, vector<2x1xf32>
    %26 = vector.broadcast %25 : vector<2x1xf32> to vector<2x256xf32>
    %27 = arith.addf %24, %26 : vector<2x256xf32>
    %cst_13 = arith.constant 0.000000e+00 : f32
    %28 = vector.broadcast %cst_13 : f32 to vector<2x256xf32>
    %29 = arith.maximumf %27, %28 : vector<2x256xf32>
    %c0_14 = arith.constant 0 : index
    %c0_15 = arith.constant 0 : index
    %30 = vector.load %arg5[%c0_14, %c0_15] : memref<2x256xf32, #tpu.memory_space<vmem>>, vector<2x256xf32>
    tpu.vector_store %arg5[%c0_14, %c0_15], %29 {strides = array<i32>} : memref<2x256xf32, #tpu.memory_space<vmem>>, vector<2x256xf32>,
    return
  }
  func.func @transform_0(%arg0: i32) -> (i32, i32) {
    %c0_i32 = arith.constant 0 : i32
    %c0_i32_0 = arith.constant 0 : i32
    %c0_i32_1 = arith.constant 0 : i32
    return %c0_i32, %c0_i32_0 : i32, i32
  }
  func.func @transform_1(%arg0: i32) -> (i32, i32) {
    %c0_i32 = arith.constant 0 : i32
    %c0_i32_0 = arith.constant 0 : i32
    %c0_i32_1 = arith.constant 0 : i32
    return %c0_i32, %c0_i32_0 : i32, i32
  }
  func.func @transform_2(%arg0: i32) -> (i32, i32) {
    %c0_i32 = arith.constant 0 : i32
    %c0_i32_0 = arith.constant 0 : i32
    %c0_i32_1 = arith.constant 0 : i32
    return %c0_i32, %c0_i32_0 : i32, i32
  }
  func.func @transform_3(%arg0: i32) -> (i32, i32) {
    %c0_i32 = arith.constant 0 : i32
    %c0_i32_0 = arith.constant 0 : i32
    %c0_i32_1 = arith.constant 0 : i32
    return %c0_i32, %c0_i32_0 : i32, i32
  }
  func.func @transform_4(%arg0: i32) -> (i32, i32) {
    %c0_i32 = arith.constant 0 : i32
    %c0_i32_0 = arith.constant 0 : i32
    %c0_i32_1 = arith.constant 0 : i32
    return %c0_i32, %c0_i32_0 : i32, i32
  }
}

module attributes {stable_mosaic.version = 11 : i64} {
  func.func @_convgemm_bias_kernel(%arg0: i32, %arg1: memref<4x2xbf16, #tpu.memory_space<vmem>>, %arg2: memref<2x128xbf16, #tpu.memory_space<vmem>>, %arg3: memref<4x1xf32, #tpu.memory_space<vmem>>, %arg4: memref<4x128xf32, #tpu.memory_space<vmem>>) attributes {dimension_semantics = [#tpu.dimension_semantics<parallel>], iteration_bounds = array<i64: 2>, scalar_prefetch = 0 : i64, scratch_operands = 0 : i64, tpu.core_type = #tpu.core_type<tc>, window_params = [{pipeline_mode = #tpu.pipeline_mode<synchronous>, transform_indices = @transform_0, window_bounds = array<i64: 4, 2>}, {transform_indices = @transform_1, window_bounds = array<i64: 2, 128>}, {pipeline_mode = #tpu.pipeline_mode<synchronous>, transform_indices = @transform_2, window_bounds = array<i64: 4, 1>}, {transform_indices = @transform_3, window_bounds = array<i64: 4, 128>}]} {
    %c0 = arith.constant 0 : index
    %c0_0 = arith.constant 0 : index
    %0 = vector.load %arg1[%c0, %c0_0] : memref<4x2xbf16, #tpu.memory_space<vmem>>, vector<4x2xbf16>
    %c0_1 = arith.constant 0 : index
    %c0_2 = arith.constant 0 : index
    %1 = vector.load %arg2[%c0_1, %c0_2] : memref<2x128xbf16, #tpu.memory_space<vmem>>, vector<2x128xbf16>
    %cst = arith.constant dense<0.000000e+00> : vector<4x128xf32>
    %2 = tpu.matmul %0, %1, %cst {dimension_numbers = #tpu.dot_dimension_numbers<[1], [0], [0], [1], [0, 0, 1, 1], [], []>} : vector<4x2xbf16>, vector<2x128xbf16>, vector<4x128xf32> -> vector<4x128xf32>
    %c0_3 = arith.constant 0 : index
    %c0_4 = arith.constant 0 : index
    %3 = vector.load %arg3[%c0_3, %c0_4] : memref<4x1xf32, #tpu.memory_space<vmem>>, vector<4x1xf32>
    %4 = vector.broadcast %3 : vector<4x1xf32> to vector<4x128xf32>
    %5 = arith.addf %2, %4 : vector<4x128xf32>
    %c0_5 = arith.constant 0 : index
    %c0_6 = arith.constant 0 : index
    %6 = vector.load %arg4[%c0_5, %c0_6] : memref<4x128xf32, #tpu.memory_space<vmem>>, vector<4x128xf32>
    tpu.vector_store %arg4[%c0_5, %c0_6], %5 {strides = array<i32>} : memref<4x128xf32, #tpu.memory_space<vmem>>, vector<4x128xf32>,
    return
  }
  func.func @transform_0(%arg0: i32) -> (i32, i32) {
    %c0_i32 = arith.constant 0 : i32
    %c0_i32_0 = arith.constant 0 : i32
    %c0_i32_1 = arith.constant 0 : i32
    return %c0_i32, %c0_i32_0 : i32, i32
  }
  func.func @transform_1(%arg0: i32) -> (i32, i32) {
    %c0_i32 = arith.constant 0 : i32
    %c0_i32_0 = arith.constant 0 : i32
    return %c0_i32, %arg0 : i32, i32
  }
  func.func @transform_2(%arg0: i32) -> (i32, i32) {
    %c0_i32 = arith.constant 0 : i32
    %c0_i32_0 = arith.constant 0 : i32
    %c0_i32_1 = arith.constant 0 : i32
    return %c0_i32, %c0_i32_0 : i32, i32
  }
  func.func @transform_3(%arg0: i32) -> (i32, i32) {
    %c0_i32 = arith.constant 0 : i32
    %c0_i32_0 = arith.constant 0 : i32
    return %c0_i32, %arg0 : i32, i32
  }
}

module attributes {stable_mosaic.version = 11 : i64} {
  func.func @_conv_bn_relu_kernel(%arg0: i32, %arg1: memref<2x90xbf16, #tpu.memory_space<vmem>>, %arg2: memref<90x256xbf16, #tpu.memory_space<vmem>>, %arg3: memref<2x1xf32, #tpu.memory_space<vmem>>, %arg4: memref<2x1xf32, #tpu.memory_space<vmem>>, %arg5: memref<2x256xf32, #tpu.memory_space<vmem>>) attributes {dimension_semantics = [#tpu.dimension_semantics<arbitrary>], iteration_bounds = array<i64: 1>, scalar_prefetch = 0 : i64, scratch_operands = 0 : i64, tpu.core_type = #tpu.core_type<tc>, window_params = [{pipeline_mode = #tpu.pipeline_mode<synchronous>, transform_indices = @transform_0, window_bounds = array<i64: 2, 90>}, {pipeline_mode = #tpu.pipeline_mode<synchronous>, transform_indices = @transform_1, window_bounds = array<i64: 90, 256>}, {pipeline_mode = #tpu.pipeline_mode<synchronous>, transform_indices = @transform_2, window_bounds = array<i64: 2, 1>}, {pipeline_mode = #tpu.pipeline_mode<synchronous>, transform_indices = @transform_3, window_bounds = array<i64: 2, 1>}, {pipeline_mode = #tpu.pipeline_mode<synchronous>, transform_indices = @transform_4, window_bounds = array<i64: 2, 256>}]} {
    %c0 = arith.constant 0 : index
    %c0_0 = arith.constant 0 : index
    %0 = vector.load %arg1[%c0, %c0_0] : memref<2x90xbf16, #tpu.memory_space<vmem>>, vector<2x90xbf16>
    %c0_1 = arith.constant 0 : index
    %c0_2 = arith.constant 0 : index
    %1 = vector.load %arg2[%c0_1, %c0_2] : memref<90x256xbf16, #tpu.memory_space<vmem>>, vector<90x256xbf16>
    %cst = arith.constant dense<0.000000e+00> : vector<2x256xf32>
    %2 = tpu.matmul %0, %1, %cst {dimension_numbers = #tpu.dot_dimension_numbers<[1], [0], [0], [1], [0, 0, 1, 1], [], []>} : vector<2x90xbf16>, vector<90x256xbf16>, vector<2x256xf32> -> vector<2x256xf32>
    %cst_3 = arith.constant dense<0.000000e+00> : vector<2xf32>
    %3 = vector.multi_reduction <add>, %2, %cst_3 [1] : vector<2x256xf32> to vector<2xf32>
    %4 = vector.shape_cast %3 : vector<2xf32> to vector<2x1xf32>
    %cst_4 = arith.constant 2.560000e+02 : f32
    %5 = vector.broadcast %cst_4 : f32 to vector<2x1xf32>
    %6 = arith.divf %4, %5 : vector<2x1xf32>
    %7 = arith.mulf %2, %2 : vector<2x256xf32>
    %cst_5 = arith.constant dense<0.000000e+00> : vector<2xf32>
    %8 = vector.multi_reduction <add>, %7, %cst_5 [1] : vector<2x256xf32> to vector<2xf32>
    %9 = vector.shape_cast %8 : vector<2xf32> to vector<2x1xf32>
    %cst_6 = arith.constant 2.560000e+02 : f32
    %10 = vector.broadcast %cst_6 : f32 to vector<2x1xf32>
    %11 = arith.divf %9, %10 : vector<2x1xf32>
    %12 = arith.mulf %6, %6 : vector<2x1xf32>
    %13 = arith.subf %11, %12 : vector<2x1xf32>
    %cst_7 = arith.constant 0.000000e+00 : f32
    %14 = vector.broadcast %cst_7 : f32 to vector<2x1xf32>
    %15 = arith.maximumf %13, %14 : vector<2x1xf32>
    %c0_8 = arith.constant 0 : index
    %c0_9 = arith.constant 0 : index
    %16 = vector.load %arg3[%c0_8, %c0_9] : memref<2x1xf32, #tpu.memory_space<vmem>>, vector<2x1xf32>
    %cst_10 = arith.constant 9.99999996E-13 : f32
    %17 = vector.broadcast %cst_10 : f32 to vector<2x1xf32>
    %18 = arith.addf %15, %17 : vector<2x1xf32>
    %19 = math.rsqrt %18 : vector<2x1xf32>
    %20 = arith.mulf %16, %19 : vector<2x1xf32>
    %21 = vector.broadcast %6 : vector<2x1xf32> to vector<2x256xf32>
    %22 = arith.subf %2, %21 : vector<2x256xf32>
    %23 = vector.broadcast %20 : vector<2x1xf32> to vector<2x256xf32>
    %24 = arith.mulf %22, %23 : vector<2x256xf32>
    %c0_11 = arith.constant 0 : index
    %c0_12 = arith.constant 0 : index
    %25 = vector.load %arg4[%c0_11, %c0_12] : memref<2x1xf32, #tpu.memory_space<vmem>>, vector<2x1xf32>
    %26 = vector.broadcast %25 : vector<2x1xf32> to vector<2x256xf32>
    %27 = arith.addf %24, %26 : vector<2x256xf32>
    %cst_13 = arith.constant 0.000000e+00 : f32
    %28 = vector.broadcast %cst_13 : f32 to vector<2x256xf32>
    %29 = arith.maximumf %27, %28 : vector<2x256xf32>
    %c0_14 = arith.constant 0 : index
    %c0_15 = arith.constant 0 : index
    %30 = vector.load %arg5[%c0_14, %c0_15] : memref<2x256xf32, #tpu.memory_space<vmem>>, vector<2x256xf32>
    tpu.vector_store %arg5[%c0_14, %c0_15], %29 {strides = array<i32>} : memref<2x256xf32, #tpu.memory_space<vmem>>, vector<2x256xf32>,
    return
  }
  func.func @transform_0(%arg0: i32) -> (i32, i32) {
    %c0_i32 = arith.constant 0 : i32
    %c0_i32_0 = arith.constant 0 : i32
    %c0_i32_1 = arith.constant 0 : i32
    return %c0_i32, %c0_i32_0 : i32, i32
  }
  func.func @transform_1(%arg0: i32) -> (i32, i32) {
    %c0_i32 = arith.constant 0 : i32
    %c0_i32_0 = arith.constant 0 : i32
    %c0_i32_1 = arith.constant 0 : i32
    return %c0_i32, %c0_i32_0 : i32, i32
  }
  func.func @transform_2(%arg0: i32) -> (i32, i32) {
    %c0_i32 = arith.constant 0 : i32
    %c0_i32_0 = arith.constant 0 : i32
    %c0_i32_1 = arith.constant 0 : i32
    return %c0_i32, %c0_i32_0 : i32, i32
  }
  func.func @transform_3(%arg0: i32) -> (i32, i32) {
    %c0_i32 = arith.constant 0 : i32
    %c0_i32_0 = arith.constant 0 : i32
    %c0_i32_1 = arith.constant 0 : i32
    return %c0_i32, %c0_i32_0 : i32, i32
  }
  func.func @transform_4(%arg0: i32) -> (i32, i32) {
    %c0_i32 = arith.constant 0 : i32
    %c0_i32_0 = arith.constant 0 : i32
    %c0_i32_1 = arith.constant 0 : i32
    return %c0_i32, %c0_i32_0 : i32, i32
  }
}

module attributes {stable_mosaic.version = 11 : i64} {
  func.func @_gtu_conv_kernel(%arg0: i32, %arg1: memref<4x36xbf16, #tpu.memory_space<vmem>>, %arg2: memref<36x128xbf16, #tpu.memory_space<vmem>>, %arg3: memref<4x1xf32, #tpu.memory_space<vmem>>, %arg4: memref<2x128xf32, #tpu.memory_space<vmem>>) attributes {dimension_semantics = [#tpu.dimension_semantics<parallel>], iteration_bounds = array<i64: 2>, scalar_prefetch = 0 : i64, scratch_operands = 0 : i64, tpu.core_type = #tpu.core_type<tc>, window_params = [{pipeline_mode = #tpu.pipeline_mode<synchronous>, transform_indices = @transform_0, window_bounds = array<i64: 4, 36>}, {transform_indices = @transform_1, window_bounds = array<i64: 36, 128>}, {pipeline_mode = #tpu.pipeline_mode<synchronous>, transform_indices = @transform_2, window_bounds = array<i64: 4, 1>}, {transform_indices = @transform_3, window_bounds = array<i64: 2, 128>}]} {
    %c0 = arith.constant 0 : index
    %c0_0 = arith.constant 0 : index
    %0 = vector.load %arg1[%c0, %c0_0] : memref<4x36xbf16, #tpu.memory_space<vmem>>, vector<4x36xbf16>
    %c0_1 = arith.constant 0 : index
    %c0_2 = arith.constant 0 : index
    %1 = vector.load %arg2[%c0_1, %c0_2] : memref<36x128xbf16, #tpu.memory_space<vmem>>, vector<36x128xbf16>
    %cst = arith.constant dense<0.000000e+00> : vector<4x128xf32>
    %2 = tpu.matmul %0, %1, %cst {dimension_numbers = #tpu.dot_dimension_numbers<[1], [0], [0], [1], [0, 0, 1, 1], [], []>} : vector<4x36xbf16>, vector<36x128xbf16>, vector<4x128xf32> -> vector<4x128xf32>
    %c0_3 = arith.constant 0 : index
    %c0_4 = arith.constant 0 : index
    %3 = vector.load %arg3[%c0_3, %c0_4] : memref<4x1xf32, #tpu.memory_space<vmem>>, vector<4x1xf32>
    %4 = vector.broadcast %3 : vector<4x1xf32> to vector<4x128xf32>
    %5 = arith.addf %2, %4 : vector<4x128xf32>
    %6 = vector.extract_strided_slice %5 {offsets = [0, 0], sizes = [2, 128], strides = [1, 1]} : vector<4x128xf32> to vector<2x128xf32>
    %7 = vector.extract_strided_slice %5 {offsets = [2, 0], sizes = [2, 128], strides = [1, 1]} : vector<4x128xf32> to vector<2x128xf32>
    %cst_5 = arith.constant 0.000000e+00 : f32
    %8 = vector.broadcast %cst_5 : f32 to vector<2x128xf32>
    %9 = arith.subf %8, %7 : vector<2x128xf32>
    %10 = math.exp %9 : vector<2x128xf32>
    %cst_6 = arith.constant 1.000000e+00 : f32
    %11 = vector.broadcast %cst_6 : f32 to vector<2x128xf32>
    %12 = arith.addf %11, %10 : vector<2x128xf32>
    %13 = tpu.reciprocal %12 {approx = true} : vector<2x128xf32> -> vector<2x128xf32>
    %14 = math.tanh %6 : vector<2x128xf32>
    %15 = arith.mulf %14, %13 : vector<2x128xf32>
    %c0_7 = arith.constant 0 : index
    %c0_8 = arith.constant 0 : index
    %16 = vector.load %arg4[%c0_7, %c0_8] : memref<2x128xf32, #tpu.memory_space<vmem>>, vector<2x128xf32>
    tpu.vector_store %arg4[%c0_7, %c0_8], %15 {strides = array<i32>} : memref<2x128xf32, #tpu.memory_space<vmem>>, vector<2x128xf32>,
    return
  }
  func.func @transform_0(%arg0: i32) -> (i32, i32) {
    %c0_i32 = arith.constant 0 : i32
    %c0_i32_0 = arith.constant 0 : i32
    %c0_i32_1 = arith.constant 0 : i32
    return %c0_i32, %c0_i32_0 : i32, i32
  }
  func.func @transform_1(%arg0: i32) -> (i32, i32) {
    %c0_i32 = arith.constant 0 : i32
    %c0_i32_0 = arith.constant 0 : i32
    return %c0_i32, %arg0 : i32, i32
  }
  func.func @transform_2(%arg0: i32) -> (i32, i32) {
    %c0_i32 = arith.constant 0 : i32
    %c0_i32_0 = arith.constant 0 : i32
    %c0_i32_1 = arith.constant 0 : i32
    return %c0_i32, %c0_i32_0 : i32, i32
  }
  func.func @transform_3(%arg0: i32) -> (i32, i32) {
    %c0_i32 = arith.constant 0 : i32
    %c0_i32_0 = arith.constant 0 : i32
    return %c0_i32, %arg0 : i32, i32
  }
}

</mosaic_0001>

<llo_original>
// kernel: d3net_forward.23
$region0: #{d3net_forward.23}
  #allocation0 [shape = 'u32[]', space=smem, size = 0x4, offset = 0x4, fixed_abs, tag = 'smem constant byte address 0x4 - core index']
  #allocation1 [shape = 'u32[144,128]{1,0:T(1,128)}', space=vmem, size = 0x12000, scoped, tag = 'internal scratch']
  %s0 = inlined_call_operand.vmem [shape: bf16[8,18], index: 0, kind: input, shape index: {}]
  %s1 = inlined_call_operand.vmem [shape: bf16[18,128], index: 1, kind: input, shape index: {}]
  %s2 = inlined_call_operand.vmem [shape: f32[8,1], index: 2, kind: input, shape index: {}]
  %s3 = inlined_call_operand.vmem [shape: f32[8,128], index: 3, kind: output, shape index: {}]
  %s4 = sld [smem:[#allocation0]]
  $region22: #{d3net_forward.23} parent=0
    _
  %s6 = ssub.s32 1, %s4
  %s7 = scalar_select 0, %s6, %s4
  // Predicated region
  $region2: #{d3net_forward.23} parent=0 // pred_check
    _
  $region3: #{d3net_forward.23} parent=0 // pred_check_branch
    %9 = sbr.rel (0) target = $region5
  $region4: #{d3net_forward.23} parent=0 // pred_region
    _
  $region5: #{d3net_forward.23} parent=0 // pred_fallthru
    _
  // Predicated region
  $region6: #{d3net_forward.23} parent=0 // pred_check
    _
  $region7: #{d3net_forward.23} parent=0 // pred_check_branch
    %11 = sbr.rel (0) target = $region9
  $region8: #{d3net_forward.23} parent=0 // pred_region
    _
  $region9: #{d3net_forward.23} parent=0 // pred_fallthru
    _
  // Predicated region
  $region10: #{d3net_forward.23} parent=0 // pred_check
    _
  $region11: #{d3net_forward.23} parent=0 // pred_check_branch
    %13 = sbr.rel (0) target = $region13
  $region12: #{d3net_forward.23} parent=0 // pred_region
    _
  $region13: #{d3net_forward.23} parent=0 // pred_fallthru
    _
  %v15 = vld [vmem:[%s0] sm:$0xf]
  %v16 = vld [vmem:[%s1] sm:$0xf]
  %v17 = vld [vmem:[%s1 + $0x4] sm:$0xf]
  %v18 = vld [vmem:[%s1 + $0x8] sm:$0x1]
  %v19 = vld [vmem:[%s2] sm:$0xff]
  %21 = vset.pattern.permute.xlu0 0
  %22 = vperm.xlu0 %21, %v19
  %v23 = vpop.permute.xlu0 %22
  %v28 = vunpack.c.l.b16 %v16
  %v29 = vunpack.c.l.b16 %v17
  %v30 = vunpack.c.l.b16 %v18
  %v31 = vpack.c.b16 %v29, %v28
  %v32 = vpack.c.b16 %v30, %v30
  %vm34 = vcmask 146432
  %v36 = vsel %vm34, %v15, 0
  %vm38 = vcmask 1040384
  %v40 = vsel %vm38, %v32, 0
  %42 = vmatprep.subr.bf16.mxu0 0
  %43 = vmatpush1.bf16.msra.mxu0 0
  %44 = vmatprep.subr.bf16.mxu0 0
  %45 = vmatpush1.bf16.msra.mxu0 0
  %46 = vmatprep.subr.bf16.mxu0 0
  %47 = vmatpush1.bf16.msra.mxu0 0
  %48 = vmatprep.subr.bf16.mxu0 0
  %49 = vmatpush1.bf16.msra.mxu0 0
  %50 = vmatprep.subr.bf16.mxu0 0
  %51 = vmatpush1.bf16.msra.mxu0 0
  %52 = vmatprep.subr.bf16.mxu0 0
  %53 = vmatpush1.bf16.msra.mxu0 0
  %54 = vmatprep.subr.bf16.mxu0 0
  %55 = vmatpush1.bf16.msra.mxu0 %v40
  %56 = vmatprep.subr.bf16.mxu0 0
  %57 = vmatpush1.bf16.msra.mxu0 %v31
  %58 = vmatprep.subr.bf16.mxu0 0
  %59 = vmatpush2.bf16.msra.mxu0 0
  %60 = vmatprep.subr.bf16.mxu0 0
  %61 = vmatpush2.bf16.msra.mxu0 0
  %62 = vmatprep.subr.bf16.mxu0 0
  %63 = vmatpush2.bf16.msra.mxu0 0
  %64 = vmatprep.subr.bf16.mxu0 0
  %65 = vmatpush2.bf16.msra.mxu0 0
  %66 = vmatprep.subr.bf16.mxu0 0
  %67 = vmatpush2.bf16.msra.mxu0 0
  %68 = vmatprep.subr.bf16.mxu0 0
  %69 = vmatpush2.bf16.msra.mxu0 0
  %70 = vmatprep.subr.bf16.mxu0 0
  %71 = vmatpush2.bf16.msra.mxu0 0
  %72 = vmatprep.subr.bf16.mxu0 0
  %73 = vmatpush2.bf16.msra.mxu0 0
  %74 = vmatprep.mubr.bf16.mxu0 0
  %75 = vmatmul.mubr.bf16.gmra.mxu0 %v36
  %v76 = vpop.f32.mrf.mxu0
  %v77 = vadd.f32 %v23, %v76
  %v78 = vpop.f32.mrf.mxu0
  %v79 = vpop.f32.mrf.mxu0
  %v80 = vpop.f32.mrf.mxu0
  %81 = vdwg.mxu0
  %82 = vst [vmem:[%s3] sm:$0xff] %v77
  // Predicated region
  $region14: #{d3net_forward.23} parent=0 // pred_check
    _
  $region15: #{d3net_forward.23} parent=0 // pred_check_branch
    %84 = sbr.rel (0) target = $region17
  $region16: #{d3net_forward.23} parent=0 // pred_region
    _
  $region17: #{d3net_forward.23} parent=0 // pred_fallthru
    _
  // Predicated region
  $region18: #{d3net_forward.23} parent=0 // pred_check
    _
  $region19: #{d3net_forward.23} parent=0 // pred_check_branch
    %86 = sbr.rel (0) target = $region21
  $region20: #{d3net_forward.23} parent=0 // pred_region
    _
  $region21: #{d3net_forward.23} parent=0 // pred_fallthru
    _

// kernel: d3net_forward.24
$region0: #{d3net_forward.24}
  #allocation0 [shape = 'u32[]', space=smem, size = 0x4, offset = 0x4, fixed_abs, tag = 'smem constant byte address 0x4 - core index']
  #allocation1 [shape = 'u32[144,128]{1,0:T(1,128)}', space=vmem, size = 0x12000, scoped, tag = 'internal scratch']
  %s0 = inlined_call_operand.vmem [shape: bf16[2,72], index: 0, kind: input, shape index: {}]
  %s1 = inlined_call_operand.vmem [shape: bf16[72,128], index: 1, kind: input, shape index: {}]
  %s2 = inlined_call_operand.vmem [shape: f32[2,1], index: 2, kind: input, shape index: {}]
  %s3 = inlined_call_operand.vmem [shape: f32[2,1], index: 3, kind: input, shape index: {}]
  %s4 = inlined_call_operand.vmem [shape: f32[2,128], index: 4, kind: output, shape index: {}]
  %s5 = sld [smem:[#allocation0]]
  $region26: #{d3net_forward.24} parent=0
    _
  %s7 = ssub.s32 1, %s5
  %s8 = scalar_select 0, %s7, %s5
  // Predicated region
  $region2: #{d3net_forward.24} parent=0 // pred_check
    _
  $region3: #{d3net_forward.24} parent=0 // pred_check_branch
    %10 = sbr.rel (0) target = $region5
  $region4: #{d3net_forward.24} parent=0 // pred_region
    _
  $region5: #{d3net_forward.24} parent=0 // pred_fallthru
    _
  // Predicated region
  $region6: #{d3net_forward.24} parent=0 // pred_check
    _
  $region7: #{d3net_forward.24} parent=0 // pred_check_branch
    %12 = sbr.rel (0) target = $region9
  $region8: #{d3net_forward.24} parent=0 // pred_region
    _
  $region9: #{d3net_forward.24} parent=0 // pred_fallthru
    _
  // Predicated region
  $region10: #{d3net_forward.24} parent=0 // pred_check
    _
  $region11: #{d3net_forward.24} parent=0 // pred_check_branch
    %14 = sbr.rel (0) target = $region13
  $region12: #{d3net_forward.24} parent=0 // pred_region
    _
  $region13: #{d3net_forward.24} parent=0 // pred_fallthru
    _
  // Predicated region
  $region14: #{d3net_forward.24} parent=0 // pred_check
    _
  $region15: #{d3net_forward.24} parent=0 // pred_check_branch
    %16 = sbr.rel (0) target = $region17
  $region16: #{d3net_forward.24} parent=0 // pred_region
    _
  $region17: #{d3net_forward.24} parent=0 // pred_fallthru
    _
  %v18 = vld [vmem:[%s0] sm:$0x1]
  %v19 = vld [vmem:[%s1] sm:$0xf]
  %v20 = vld [vmem:[%s1 + $0x4] sm:$0xf]
  %v21 = vld [vmem:[%s1 + $0x8] sm:$0xf]
  %v22 = vld [vmem:[%s1 + $0xc] sm:$0xf]
  %v23 = vld [vmem:[%s1 + $0x10] sm:$0xf]
  %v24 = vld [vmem:[%s1 + $0x14] sm:$0xf]
  %v25 = vld [vmem:[%s1 + $0x18] sm:$0xf]
  %v26 = vld [vmem:[%s1 + $0x1c] sm:$0xf]
  %v27 = vld [vmem:[%s1 + $0x20] sm:$0xf]
  %v37 = vunpack.c.l.b16 %v19
  %v38 = vunpack.c.l.b16 %v20
  %v39 = vunpack.c.l.b16 %v21
  %v40 = vunpack.c.l.b16 %v22
  %v41 = vunpack.c.l.b16 %v23
  %v42 = vunpack.c.l.b16 %v24
  %v43 = vunpack.c.l.b16 %v25
  %v44 = vunpack.c.l.b16 %v26
  %v45 = vunpack.c.l.b16 %v27
  %v46 = vpack.c.b16 %v38, %v37
  %v47 = vpack.c.b16 %v40, %v39
  %v48 = vpack.c.b16 %v42, %v41
  %v49 = vpack.c.b16 %v44, %v43
  %v50 = vpack.c.b16 %v45, %v45
  %vm55 = vcmask 588800
  %v57 = vsel %vm55, %v18, 0
  %vm59 = vcmask 1043456
  %v61 = vsel %vm59, %v50, 0
  %63 = vmatprep.subr.bf16.mxu0 0
  %64 = vmatpush1.bf16.msra.mxu0 0
  %65 = vmatprep.subr.bf16.mxu0 0
  %66 = vmatpush1.bf16.msra.mxu0 0
  %67 = vmatprep.subr.bf16.mxu0 0
  %68 = vmatpush1.bf16.msra.mxu0 0
  %69 = vmatprep.subr.bf16.mxu0 0
  %70 = vmatpush1.bf16.msra.mxu0 %v61
  %71 = vmatprep.subr.bf16.mxu0 0
  %72 = vmatpush1.bf16.msra.mxu0 %v49
  %73 = vmatprep.subr.bf16.mxu0 0
  %74 = vmatpush1.bf16.msra.mxu0 %v48
  %75 = vmatprep.subr.bf16.mxu0 0
  %76 = vmatpush1.bf16.msra.mxu0 %v47
  %77 = vmatprep.subr.bf16.mxu0 0
  %78 = vmatpush1.bf16.msra.mxu0 %v46
  %79 = vmatprep.subr.bf16.mxu0 0
  %80 = vmatpush2.bf16.msra.mxu0 0
  %81 = vmatprep.subr.bf16.mxu0 0
  %82 = vmatpush2.bf16.msra.mxu0 0
  %83 = vmatprep.subr.bf16.mxu0 0
  %84 = vmatpush2.bf16.msra.mxu0 0
  %85 = vmatprep.subr.bf16.mxu0 0
  %86 = vmatpush2.bf16.msra.mxu0 0
  %87 = vmatprep.subr.bf16.mxu0 0
  %88 = vmatpush2.bf16.msra.mxu0 0
  %89 = vmatprep.subr.bf16.mxu0 0
  %90 = vmatpush2.bf16.msra.mxu0 0
  %91 = vmatprep.subr.bf16.mxu0 0
  %92 = vmatpush2.bf16.msra.mxu0 0
  %93 = vmatprep.subr.bf16.mxu0 0
  %94 = vmatpush2.bf16.msra.mxu0 0
  %95 = vmatprep.mubr.bf16.mxu0 0
  %96 = vmatmul.mubr.bf16.gmra.mxu0 %v57
  %v97 = vpop.f32.mrf.mxu0
  %v98 = vadd.f32 0.0, %v97
  %v99 = vpop.f32.mrf.mxu0
  %v100 = vpop.f32.mrf.mxu0
  %v101 = vpop.f32.mrf.mxu0
  %102 = vdwg.mxu0
  %vm103 = vcmask 1041408
  %v104 = vsel %vm103, %v98, 0.0
  %105 = vadd.xlane.f32.xlu0 %v104
  %v106 = vpop.xlane.xlu0 %105
  %v107 = vrcp.pop 128.0
  %v108 = vmul.f32 %v106, %v107
  %v109 = vmul.f32 %v98, %v98
  %v110 = vsel %vm103, %v109, 0.0
  %111 = vadd.xlane.f32.xlu0 %v110
  %v112 = vpop.xlane.xlu0 %111
  %v113 = vmul.f32 %v112, %v107
  %v114 = vmul.f32 %v108, %v108
  %v115 = vsub.f32 %v113, %v114
  %v116 = vmax.f32 %v115, 0.0
  %v117 = vld [vmem:[%s2] sm:$0x3]
  %v118 = vadd.f32 %v116, 1e-12
  %v119 = vrsqrt.pop %v118
  %v120 = vmul.f32 %v117, %v119
  %v121 = vsub.f32 %v98, %v108
  %123 = vset.pattern.permute.xlu0 0
  %124 = vperm.xlu0 %123, %v120
  %v125 = vpop.permute.xlu0 %124
  %v127 = vmul.f32 %v121, %v125
  %v128 = vld [vmem:[%s3] sm:$0x3]
  %130 = vset.pattern.permute.xlu0 0
  %131 = vperm.xlu0 %130, %v128
  %v132 = vpop.permute.xlu0 %131
  %v134 = vadd.f32 %v127, %v132
  %v135 = vmax.f32 %v134, 0.0
  %136 = vst [vmem:[%s4] sm:$0x3] %v135
  // Predicated region
  $region18: #{d3net_forward.24} parent=0 // pred_check
    _
  $region19: #{d3net_forward.24} parent=0 // pred_check_branch
    %138 = sbr.rel (0) target = $region21
  $region20: #{d3net_forward.24} parent=0 // pred_region
    _
  $region21: #{d3net_forward.24} parent=0 // pred_fallthru
    _
  // Predicated region
  $region22: #{d3net_forward.24} parent=0 // pred_check
    _
  $region23: #{d3net_forward.24} parent=0 // pred_check_branch
    %140 = sbr.rel (0) target = $region25
  $region24: #{d3net_forward.24} parent=0 // pred_region
    _
  $region25: #{d3net_forward.24} parent=0 // pred_fallthru
    _

// kernel: mul.29
$region0: #{mul.29}
  %s0 = inlined_call_operand.vmem [shape: f32[2,32], index: 0, kind: input, shape index: {}]
  %s1 = inlined_call_operand.vmem [shape: f32[2,2,4,4], index: 1, kind: output, shape index: {}]
  $region1: #{mul.29} parent=0
    #allocation0 [shape = 'u8[16384]{0}', space=vmem, size = 0x4000, scoped, tag = 'scoped mem for output reshape']
    #allocation1 [shape = 'u8[4096]{0}', space=vmem, size = 0x1000, scoped, tag = 'scoped mem for input reshape']
    %s3 = sshll.u32 1, 2
    %s4 = ssub.s32 %s3, 1
    %v5 = vld [vmem:[%s0] sm:%s4]
    %6 = vst [vmem:[#allocation1] sm:%s4] %v5
    %v7 = vld [vmem:[#allocation1] sm:$0x3]
    %vm8 = vcmask 31744
    %9 = vst.msk [vmem:[#allocation0] ss:$16 sm:$0x3] %vm8, %v7
    %v10 = vld [vmem:[#allocation1] sm:$0x3]
    %11 = vrot.lane.b32.xlu0 %v10, 124
    %v12 = vpop.permute.xlu0 %11
    %vm13 = vcmask 31744
    %s14 = scalar_lea.vmem [#allocation0], 1
    %15 = vst.msk [vmem:[%s14] ss:$16 sm:$0x3] %vm13, %v12
    %v16 = vld [vmem:[#allocation1] sm:$0x3]
    %17 = vrot.lane.b32.xlu0 %v16, 120
    %v18 = vpop.permute.xlu0 %17
    %vm19 = vcmask 31744
    %s20 = scalar_lea.vmem [#allocation0], 2
    %21 = vst.msk [vmem:[%s20] ss:$16 sm:$0x3] %vm19, %v18
    %v22 = vld [vmem:[#allocation1] sm:$0x3]
    %23 = vrot.lane.b32.xlu0 %v22, 116
    %v24 = vpop.permute.xlu0 %23
    %vm25 = vcmask 31744
    %s26 = scalar_lea.vmem [#allocation0], 3
    %27 = vst.msk [vmem:[%s26] ss:$16 sm:$0x3] %vm25, %v24
    %v28 = vld [vmem:[#allocation1] sm:$0x3]
    %29 = vrot.lane.b32.xlu0 %v28, 112
    %v30 = vpop.permute.xlu0 %29
    %vm31 = vcmask 31744
    %s32 = scalar_lea.vmem [#allocation0], 8
    %33 = vst.msk [vmem:[%s32] ss:$16 sm:$0x3] %vm31, %v30
    %v34 = vld [vmem:[#allocation1] sm:$0x3]
    %35 = vrot.lane.b32.xlu0 %v34, 108
    %v36 = vpop.permute.xlu0 %35
    %vm37 = vcmask 31744
    %s38 = scalar_lea.vmem [#allocation0], 9
    %39 = vst.msk [vmem:[%s38] ss:$16 sm:$0x3] %vm37, %v36
    %v40 = vld [vmem:[#allocation1] sm:$0x3]
    %41 = vrot.lane.b32.xlu0 %v40, 104
    %v42 = vpop.permute.xlu0 %41
    %vm43 = vcmask 31744
    %s44 = scalar_lea.vmem [#allocation0], 10
    %45 = vst.msk [vmem:[%s44] ss:$16 sm:$0x3] %vm43, %v42
    %v46 = vld [vmem:[#allocation1] sm:$0x3]
    %47 = vrot.lane.b32.xlu0 %v46, 100
    %v48 = vpop.permute.xlu0 %47
    %vm49 = vcmask 31744
    %s50 = scalar_lea.vmem [#allocation0], 11
    %51 = vst.msk [vmem:[%s50] ss:$16 sm:$0x3] %vm49, %v48
    %s53 = sshll.u32 1, 4
    %s54 = ssub.s32 %s53, 1
    %v56 = vld [vmem:[#allocation0] sm:%s54]
    %s57 = sshll.u32 1, 4
    %s58 = ssub.s32 %s57, 1
    %59 = vst [vmem:[%s1] sm:%s58] %v56
    %s60 = scalar_lea.vmem [#allocation0], 8
    %v61 = vld [vmem:[%s60] sm:%s54]
    %s62 = sshll.u32 1, 4
    %s63 = ssub.s32 %s62, 1
    %s64 = scalar_lea.vmem %s1, 4
    %65 = vst [vmem:[%s64] sm:%s63] %v61
    %s66 = scalar_lea.vmem [#allocation0], 16
    %v67 = vld [vmem:[%s66] sm:%s54]
    %s68 = sshll.u32 1, 4
    %s69 = ssub.s32 %s68, 1
    %s70 = smul.addr 4, 2
    %s71 = scalar_lea.vmem %s1, %s70
    %72 = vst [vmem:[%s71] sm:%s69] %v67
    %s73 = scalar_lea.vmem [#allocation0], 24
    %v74 = vld [vmem:[%s73] sm:%s54]
    %s75 = sshll.u32 1, 4
    %s76 = ssub.s32 %s75, 1
    %s77 = smul.addr 4, 3
    %s78 = scalar_lea.vmem %s1, %s77
    %79 = vst [vmem:[%s78] sm:%s76] %v74

// kernel: d3net_forward.25
$region0: #{d3net_forward.25}
  #allocation0 [shape = 'u32[]', space=smem, size = 0x4, offset = 0x4, fixed_abs, tag = 'smem constant byte address 0x4 - core index']
  #allocation1 [shape = 'u32[144,128]{1,0:T(1,128)}', space=vmem, size = 0x12000, scoped, tag = 'internal scratch']
  %s0 = inlined_call_operand.vmem [shape: bf16[2,18], index: 0, kind: input, shape index: {}]
  %s1 = inlined_call_operand.vmem [shape: bf16[18,32], index: 1, kind: input, shape index: {}]
  %s2 = inlined_call_operand.vmem [shape: f32[2,1], index: 2, kind: input, shape index: {}]
  %s3 = inlined_call_operand.vmem [shape: f32[2,1], index: 3, kind: input, shape index: {}]
  %s4 = inlined_call_operand.vmem [shape: f32[2,32], index: 4, kind: output, shape index: {}]
  %s5 = sld [smem:[#allocation0]]
  $region26: #{d3net_forward.25} parent=0
    _
  %s7 = ssub.s32 1, %s5
  %s8 = scalar_select 0, %s7, %s5
  // Predicated region
  $region2: #{d3net_forward.25} parent=0 // pred_check
    _
  $region3: #{d3net_forward.25} parent=0 // pred_check_branch
    %10 = sbr.rel (0) target = $region5
  $region4: #{d3net_forward.25} parent=0 // pred_region
    _
  $region5: #{d3net_forward.25} parent=0 // pred_fallthru
    _
  // Predicated region
  $region6: #{d3net_forward.25} parent=0 // pred_check
    _
  $region7: #{d3net_forward.25} parent=0 // pred_check_branch
    %12 = sbr.rel (0) target = $region9
  $region8: #{d3net_forward.25} parent=0 // pred_region
    _
  $region9: #{d3net_forward.25} parent=0 // pred_fallthru
    _
  // Predicated region
  $region10: #{d3net_forward.25} parent=0 // pred_check
    _
  $region11: #{d3net_forward.25} parent=0 // pred_check_branch
    %14 = sbr.rel (0) target = $region13
  $region12: #{d3net_forward.25} parent=0 // pred_region
    _
  $region13: #{d3net_forward.25} parent=0 // pred_fallthru
    _
  // Predicated region
  $region14: #{d3net_forward.25} parent=0 // pred_check
    _
  $region15: #{d3net_forward.25} parent=0 // pred_check_branch
    %16 = sbr.rel (0) target = $region17
  $region16: #{d3net_forward.25} parent=0 // pred_region
    _
  $region17: #{d3net_forward.25} parent=0 // pred_fallthru
    _
  %v18 = vld [vmem:[%s0] sm:$0x1]
  %v19 = vld [vmem:[%s1] sm:$0xf]
  %v20 = vld [vmem:[%s1 + $0x4] sm:$0xf]
  %v21 = vld [vmem:[%s1 + $0x8] sm:$0x1]
  %v25 = vunpack.c.l.b16 %v19
  %v26 = vunpack.c.l.b16 %v20
  %v27 = vunpack.c.l.b16 %v21
  %v28 = vpack.c.b16 %v26, %v25
  %v29 = vpack.c.b16 %v27, %v27
  %vm31 = vcmask 146432
  %v33 = vsel %vm31, %v18, 0
  %vm35 = vcmask 1040384
  %v37 = vsel %vm35, %v29, 0
  %39 = vmatprep.subr.bf16.mxu0 0
  %40 = vmatpush1.bf16.msra.mxu0 0
  %41 = vmatprep.subr.bf16.mxu0 0
  %42 = vmatpush1.bf16.msra.mxu0 0
  %43 = vmatprep.subr.bf16.mxu0 0
  %44 = vmatpush1.bf16.msra.mxu0 0
  %45 = vmatprep.subr.bf16.mxu0 0
  %46 = vmatpush1.bf16.msra.mxu0 0
  %47 = vmatprep.subr.bf16.mxu0 0
  %48 = vmatpush1.bf16.msra.mxu0 0
  %49 = vmatprep.subr.bf16.mxu0 0
  %50 = vmatpush1.bf16.msra.mxu0 0
  %51 = vmatprep.subr.bf16.mxu0 0
  %52 = vmatpush1.bf16.msra.mxu0 %v37
  %53 = vmatprep.subr.bf16.mxu0 0
  %54 = vmatpush1.bf16.msra.mxu0 %v28
  %55 = vmatprep.subr.bf16.mxu0 0
  %56 = vmatpush2.bf16.msra.mxu0 0
  %57 = vmatprep.subr.bf16.mxu0 0
  %58 = vmatpush2.bf16.msra.mxu0 0
  %59 = vmatprep.subr.bf16.mxu0 0
  %60 = vmatpush2.bf16.msra.mxu0 0
  %61 = vmatprep.subr.bf16.mxu0 0
  %62 = vmatpush2.bf16.msra.mxu0 0
  %63 = vmatprep.subr.bf16.mxu0 0
  %64 = vmatpush2.bf16.msra.mxu0 0
  %65 = vmatprep.subr.bf16.mxu0 0
  %66 = vmatpush2.bf16.msra.mxu0 0
  %67 = vmatprep.subr.bf16.mxu0 0
  %68 = vmatpush2.bf16.msra.mxu0 0
  %69 = vmatprep.subr.bf16.mxu0 0
  %70 = vmatpush2.bf16.msra.mxu0 0
  %71 = vmatprep.mubr.bf16.mxu0 0
  %72 = vmatmul.mubr.bf16.gmra.mxu0 %v33
  %v73 = vpop.f32.mrf.mxu0
  %v74 = vadd.f32 0.0, %v73
  %v75 = vpop.f32.mrf.mxu0
  %v76 = vpop.f32.mrf.mxu0
  %v77 = vpop.f32.mrf.mxu0
  %78 = vdwg.mxu0
  %vm79 = vcmask 254976
  %v80 = vsel %vm79, %v74, 0.0
  %81 = vadd.xlane.f32.xlu0 %v80
  %v82 = vpop.xlane.xlu0 %81
  %v83 = vrcp.pop 32.0
  %v84 = vmul.f32 %v82, %v83
  %v85 = vmul.f32 %v74, %v74
  %v86 = vsel %vm79, %v85, 0.0
  %87 = vadd.xlane.f32.xlu0 %v86
  %v88 = vpop.xlane.xlu0 %87
  %v89 = vmul.f32 %v88, %v83
  %v90 = vmul.f32 %v84, %v84
  %v91 = vsub.f32 %v89, %v90
  %v92 = vmax.f32 %v91, 0.0
  %v93 = vld [vmem:[%s2] sm:$0x3]
  %v94 = vadd.f32 %v92, 1e-12
  %v95 = vrsqrt.pop %v94
  %v96 = vmul.f32 %v93, %v95
  %v97 = vsub.f32 %v74, %v84
  %99 = vset.pattern.permute.xlu0 0
  %100 = vperm.xlu0 %99, %v96
  %v101 = vpop.permute.xlu0 %100
  %v103 = vmul.f32 %v97, %v101
  %v104 = vld [vmem:[%s3] sm:$0x3]
  %106 = vset.pattern.permute.xlu0 0
  %107 = vperm.xlu0 %106, %v104
  %v108 = vpop.permute.xlu0 %107
  %v110 = vadd.f32 %v103, %v108
  %v111 = vmax.f32 %v110, 0.0
  %112 = vst.msk [vmem:[%s4] sm:$0x3] %vm79, %v111
  // Predicated region
  $region18: #{d3net_forward.25} parent=0 // pred_check
    _
  $region19: #{d3net_forward.25} parent=0 // pred_check_branch
    %114 = sbr.rel (0) target = $region21
  $region20: #{d3net_forward.25} parent=0 // pred_region
    _
  $region21: #{d3net_forward.25} parent=0 // pred_fallthru
    _
  // Predicated region
  $region22: #{d3net_forward.25} parent=0 // pred_check
    _
  $region23: #{d3net_forward.25} parent=0 // pred_check_branch
    %116 = sbr.rel (0) target = $region25
  $region24: #{d3net_forward.25} parent=0 // pred_region
    _
  $region25: #{d3net_forward.25} parent=0 // pred_fallthru
    _

// kernel: d3net_forward.26
$region0: #{d3net_forward.26}
  #allocation0 [shape = 'u32[]', space=smem, size = 0x4, offset = 0x4, fixed_abs, tag = 'smem constant byte address 0x4 - core index']
  #allocation1 [shape = 'u32[144,128]{1,0:T(1,128)}', space=vmem, size = 0x12000, scoped, tag = 'internal scratch']
  %s0 = inlined_call_operand.vmem [shape: bf16[2,36], index: 0, kind: input, shape index: {}]
  %s1 = inlined_call_operand.vmem [shape: bf16[36,128], index: 1, kind: input, shape index: {}]
  %s2 = inlined_call_operand.vmem [shape: f32[2,1], index: 2, kind: input, shape index: {}]
  %s3 = inlined_call_operand.vmem [shape: f32[2,1], index: 3, kind: input, shape index: {}]
  %s4 = inlined_call_operand.vmem [shape: f32[2,128], index: 4, kind: output, shape index: {}]
  %s5 = sld [smem:[#allocation0]]
  $region26: #{d3net_forward.26} parent=0
    _
  %s7 = ssub.s32 1, %s5
  %s8 = scalar_select 0, %s7, %s5
  // Predicated region
  $region2: #{d3net_forward.26} parent=0 // pred_check
    _
  $region3: #{d3net_forward.26} parent=0 // pred_check_branch
    %10 = sbr.rel (0) target = $region5
  $region4: #{d3net_forward.26} parent=0 // pred_region
    _
  $region5: #{d3net_forward.26} parent=0 // pred_fallthru
    _
  // Predicated region
  $region6: #{d3net_forward.26} parent=0 // pred_check
    _
  $region7: #{d3net_forward.26} parent=0 // pred_check_branch
    %12 = sbr.rel (0) target = $region9
  $region8: #{d3net_forward.26} parent=0 // pred_region
    _
  $region9: #{d3net_forward.26} parent=0 // pred_fallthru
    _
  // Predicated region
  $region10: #{d3net_forward.26} parent=0 // pred_check
    _
  $region11: #{d3net_forward.26} parent=0 // pred_check_branch
    %14 = sbr.rel (0) target = $region13
  $region12: #{d3net_forward.26} parent=0 // pred_region
    _
  $region13: #{d3net_forward.26} parent=0 // pred_fallthru
    _
  // Predicated region
  $region14: #{d3net_forward.26} parent=0 // pred_check
    _
  $region15: #{d3net_forward.26} parent=0 // pred_check_branch
    %16 = sbr.rel (0) target = $region17
  $region16: #{d3net_forward.26} parent=0 // pred_region
    _
  $region17: #{d3net_forward.26} parent=0 // pred_fallthru
    _
  %v18 = vld [vmem:[%s0] sm:$0x1]
  %v19 = vld [vmem:[%s1] sm:$0xf]
  %v20 = vld [vmem:[%s1 + $0x4] sm:$0xf]
  %v21 = vld [vmem:[%s1 + $0x8] sm:$0xf]
  %v22 = vld [vmem:[%s1 + $0xc] sm:$0xf]
  %v23 = vld [vmem:[%s1 + $0x10] sm:$0x3]
  %v29 = vunpack.c.l.b16 %v19
  %v30 = vunpack.c.l.b16 %v20
  %v31 = vunpack.c.l.b16 %v21
  %v32 = vunpack.c.l.b16 %v22
  %v33 = vunpack.c.l.b16 %v23
  %v34 = vpack.c.b16 %v30, %v29
  %v35 = vpack.c.b16 %v32, %v31
  %v36 = vpack.c.b16 %v33, %v33
  %vm39 = vcmask 293888
  %v41 = vsel %vm39, %v18, 0
  %vm43 = vcmask 1041408
  %v45 = vsel %vm43, %v36, 0
  %47 = vmatprep.subr.bf16.mxu0 0
  %48 = vmatpush1.bf16.msra.mxu0 0
  %49 = vmatprep.subr.bf16.mxu0 0
  %50 = vmatpush1.bf16.msra.mxu0 0
  %51 = vmatprep.subr.bf16.mxu0 0
  %52 = vmatpush1.bf16.msra.mxu0 0
  %53 = vmatprep.subr.bf16.mxu0 0
  %54 = vmatpush1.bf16.msra.mxu0 0
  %55 = vmatprep.subr.bf16.mxu0 0
  %56 = vmatpush1.bf16.msra.mxu0 0
  %57 = vmatprep.subr.bf16.mxu0 0
  %58 = vmatpush1.bf16.msra.mxu0 %v45
  %59 = vmatprep.subr.bf16.mxu0 0
  %60 = vmatpush1.bf16.msra.mxu0 %v35
  %61 = vmatprep.subr.bf16.mxu0 0
  %62 = vmatpush1.bf16.msra.mxu0 %v34
  %63 = vmatprep.subr.bf16.mxu0 0
  %64 = vmatpush2.bf16.msra.mxu0 0
  %65 = vmatprep.subr.bf16.mxu0 0
  %66 = vmatpush2.bf16.msra.mxu0 0
  %67 = vmatprep.subr.bf16.mxu0 0
  %68 = vmatpush2.bf16.msra.mxu0 0
  %69 = vmatprep.subr.bf16.mxu0 0
  %70 = vmatpush2.bf16.msra.mxu0 0
  %71 = vmatprep.subr.bf16.mxu0 0
  %72 = vmatpush2.bf16.msra.mxu0 0
  %73 = vmatprep.subr.bf16.mxu0 0
  %74 = vmatpush2.bf16.msra.mxu0 0
  %75 = vmatprep.subr.bf16.mxu0 0
  %76 = vmatpush2.bf16.msra.mxu0 0
  %77 = vmatprep.subr.bf16.mxu0 0
  %78 = vmatpush2.bf16.msra.mxu0 0
  %79 = vmatprep.mubr.bf16.mxu0 0
  %80 = vmatmul.mubr.bf16.gmra.mxu0 %v41
  %v81 = vpop.f32.mrf.mxu0
  %v82 = vadd.f32 0.0, %v81
  %v83 = vpop.f32.mrf.mxu0
  %v84 = vpop.f32.mrf.mxu0
  %v85 = vpop.f32.mrf.mxu0
  %86 = vdwg.mxu0
  %v87 = vsel %vm43, %v82, 0.0
  %88 = vadd.xlane.f32.xlu0 %v87
  %v89 = vpop.xlane.xlu0 %88
  %v90 = vrcp.pop 128.0
  %v91 = vmul.f32 %v89, %v90
  %v92 = vmul.f32 %v82, %v82
  %v93 = vsel %vm43, %v92, 0.0
  %94 = vadd.xlane.f32.xlu0 %v93
  %v95 = vpop.xlane.xlu0 %94
  %v96 = vmul.f32 %v95, %v90
  %v97 = vmul.f32 %v91, %v91
  %v98 = vsub.f32 %v96, %v97
  %v99 = vmax.f32 %v98, 0.0
  %v100 = vld [vmem:[%s2] sm:$0x3]
  %v101 = vadd.f32 %v99, 1e-12
  %v102 = vrsqrt.pop %v101
  %v103 = vmul.f32 %v100, %v102
  %v104 = vsub.f32 %v82, %v91
  %106 = vset.pattern.permute.xlu0 0
  %107 = vperm.xlu0 %106, %v103
  %v108 = vpop.permute.xlu0 %107
  %v110 = vmul.f32 %v104, %v108
  %v111 = vld [vmem:[%s3] sm:$0x3]
  %113 = vset.pattern.permute.xlu0 0
  %114 = vperm.xlu0 %113, %v111
  %v115 = vpop.permute.xlu0 %114
  %v117 = vadd.f32 %v110, %v115
  %v118 = vmax.f32 %v117, 0.0
  %119 = vst [vmem:[%s4] sm:$0x3] %v118
  // Predicated region
  $region18: #{d3net_forward.26} parent=0 // pred_check
    _
  $region19: #{d3net_forward.26} parent=0 // pred_check_branch
    %121 = sbr.rel (0) target = $region21
  $region20: #{d3net_forward.26} parent=0 // pred_region
    _
  $region21: #{d3net_forward.26} parent=0 // pred_fallthru
    _
  // Predicated region
  $region22: #{d3net_forward.26} parent=0 // pred_check
    _
  $region23: #{d3net_forward.26} parent=0 // pred_check_branch
    %123 = sbr.rel (0) target = $region25
  $region24: #{d3net_forward.26} parent=0 // pred_region
    _
  $region25: #{d3net_forward.26} parent=0 // pred_fallthru
    _

// kernel: d3net_forward.27
$region0: #{d3net_forward.27}
  #allocation0 [shape = 'u32[]', space=smem, size = 0x4, offset = 0x4, fixed_abs, tag = 'smem constant byte address 0x4 - core index']
  #allocation1 [shape = 'u32[144,128]{1,0:T(1,128)}', space=vmem, size = 0x12000, scoped, tag = 'internal scratch']
  %s0 = inlined_call_operand.vmem [shape: bf16[4,2], index: 0, kind: input, shape index: {}]
  %s1 = inlined_call_operand.vmem [shape: bf16[2,128], index: 1, kind: input, shape index: {}]
  %s2 = inlined_call_operand.vmem [shape: f32[4,1], index: 2, kind: input, shape index: {}]
  %s3 = inlined_call_operand.vmem [shape: f32[4,128], index: 3, kind: output, shape index: {}]
  %s4 = sld [smem:[#allocation0]]
  $region22: #{d3net_forward.27} parent=0
    _
  %s6 = ssub.s32 1, %s4
  %s7 = scalar_select 0, %s6, %s4
  // Predicated region
  $region2: #{d3net_forward.27} parent=0 // pred_check
    _
  $region3: #{d3net_forward.27} parent=0 // pred_check_branch
    %9 = sbr.rel (0) target = $region5
  $region4: #{d3net_forward.27} parent=0 // pred_region
    _
  $region5: #{d3net_forward.27} parent=0 // pred_fallthru
    _
  // Predicated region
  $region6: #{d3net_forward.27} parent=0 // pred_check
    _
  $region7: #{d3net_forward.27} parent=0 // pred_check_branch
    %11 = sbr.rel (0) target = $region9
  $region8: #{d3net_forward.27} parent=0 // pred_region
    _
  $region9: #{d3net_forward.27} parent=0 // pred_fallthru
    _
  // Predicated region
  $region10: #{d3net_forward.27} parent=0 // pred_check
    _
  $region11: #{d3net_forward.27} parent=0 // pred_check_branch
    %13 = sbr.rel (0) target = $region13
  $region12: #{d3net_forward.27} parent=0 // pred_region
    _
  $region13: #{d3net_forward.27} parent=0 // pred_fallthru
    _
  %v15 = vld [vmem:[%s0] sm:$0x3]
  %v16 = vld [vmem:[%s1] sm:$0x1]
  %v17 = vld [vmem:[%s2] sm:$0xf]
  %19 = vset.pattern.permute.xlu0 0
  %20 = vperm.xlu0 %19, %v17
  %v21 = vpop.permute.xlu0 %20
  %vm23 = vcmask 15360
  %v25 = vsel %vm23, %v15, 0
  %vm27 = vcmask 1040384
  %v29 = vsel %vm27, %v16, 0
  %31 = vmatprep.subr.bf16.mxu0 0
  %32 = vmatpush1.bf16.msra.mxu0 0
  %33 = vmatprep.subr.bf16.mxu0 0
  %34 = vmatpush1.bf16.msra.mxu0 0
  %35 = vmatprep.subr.bf16.mxu0 0
  %36 = vmatpush1.bf16.msra.mxu0 0
  %37 = vmatprep.subr.bf16.mxu0 0
  %38 = vmatpush1.bf16.msra.mxu0 0
  %39 = vmatprep.subr.bf16.mxu0 0
  %40 = vmatpush1.bf16.msra.mxu0 0
  %41 = vmatprep.subr.bf16.mxu0 0
  %42 = vmatpush1.bf16.msra.mxu0 0
  %43 = vmatprep.subr.bf16.mxu0 0
  %44 = vmatpush1.bf16.msra.mxu0 0
  %45 = vmatprep.subr.bf16.mxu0 0
  %46 = vmatpush1.bf16.msra.mxu0 %v29
  %47 = vmatprep.subr.bf16.mxu0 0
  %48 = vmatpush2.bf16.msra.mxu0 0
  %49 = vmatprep.subr.bf16.mxu0 0
  %50 = vmatpush2.bf16.msra.mxu0 0
  %51 = vmatprep.subr.bf16.mxu0 0
  %52 = vmatpush2.bf16.msra.mxu0 0
  %53 = vmatprep.subr.bf16.mxu0 0
  %54 = vmatpush2.bf16.msra.mxu0 0
  %55 = vmatprep.subr.bf16.mxu0 0
  %56 = vmatpush2.bf16.msra.mxu0 0
  %57 = vmatprep.subr.bf16.mxu0 0
  %58 = vmatpush2.bf16.msra.mxu0 0
  %59 = vmatprep.subr.bf16.mxu0 0
  %60 = vmatpush2.bf16.msra.mxu0 0
  %61 = vmatprep.subr.bf16.mxu0 0
  %62 = vmatpush2.bf16.msra.mxu0 0
  %63 = vmatprep.mubr.bf16.mxu0 0
  %64 = vmatmul.mubr.bf16.gmra.mxu0 %v25
  %v65 = vpop.f32.mrf.mxu0
  %v66 = vadd.f32 %v21, %v65
  %v67 = vpop.f32.mrf.mxu0
  %v68 = vpop.f32.mrf.mxu0
  %v69 = vpop.f32.mrf.mxu0
  %70 = vdwg.mxu0
  %71 = vst [vmem:[%s3] sm:$0xf] %v66
  // Predicated region
  $region14: #{d3net_forward.27} parent=0 // pred_check
    _
  $region15: #{d3net_forward.27} parent=0 // pred_check_branch
    %73 = sbr.rel (0) target = $region17
  $region16: #{d3net_forward.27} parent=0 // pred_region
    _
  $region17: #{d3net_forward.27} parent=0 // pred_fallthru
    _
  // Predicated region
  $region18: #{d3net_forward.27} parent=0 // pred_check
    _
  $region19: #{d3net_forward.27} parent=0 // pred_check_branch
    %75 = sbr.rel (0) target = $region21
  $region20: #{d3net_forward.27} parent=0 // pred_region
    _
  $region21: #{d3net_forward.27} parent=0 // pred_fallthru
    _

// kernel: d3net_forward.28
$region0: #{d3net_forward.28}
  #allocation0 [shape = 'u32[]', space=smem, size = 0x4, offset = 0x4, fixed_abs, tag = 'smem constant byte address 0x4 - core index']
  #allocation1 [shape = 'u32[144,128]{1,0:T(1,128)}', space=vmem, size = 0x12000, scoped, tag = 'internal scratch']
  %s0 = inlined_call_operand.vmem [shape: bf16[8,18], index: 0, kind: input, shape index: {}]
  %s1 = inlined_call_operand.vmem [shape: bf16[18,256], index: 1, kind: input, shape index: {}]
  %s2 = inlined_call_operand.vmem [shape: f32[8,1], index: 2, kind: input, shape index: {}]
  %s3 = inlined_call_operand.vmem [shape: f32[8,256], index: 3, kind: output, shape index: {}]
  %s4 = sld [smem:[#allocation0]]
  $region86: #{d3net_forward.28} parent=0
    _
  %s6 = ssub.s32 1, %s4
  %s7 = scalar_select 0, %s6, %s4
  $region1: #{d3net_forward.28} parent=0
    #allocation2 [shape = 'u8[12288]{0}', space=vmem, size = 0x3000, scoped, tag = 'input window, operand 1']
    loop: start=0, step=1, limit=4
    $region2: #{d3net_forward.28} parent=1 // loop_pre_header
      _
    $region3: #{d3net_forward.28} parent=1 // loop_header
      %s9 = sphi 0, %s13
      %p10 = scmp.ge.s32.totalorder %s9, 4
      %s17 = sphi 0, %s17
      %s19 = sphi 0, %s17
      %s20 = sphi 0, %s19
      %s34 = sphi 0, %s20
      %s40 = sphi 0, %s42
      %s43 = sphi 0, %s40
      %s44 = sphi 0, %s43
      %s60 = sphi 0, %s44
      %s64 = sphi 0, %s64
      %s66 = sphi 0, %s64
      %s67 = sphi 0, %s66
      %s81 = sphi 0, %s67
      %s87 = sphi 0, %s89
      %s90 = sphi 0, %s87
      %s91 = sphi 0, %s90
      %s107 = sphi 0, %s91
    $region4: #{d3net_forward.28} parent=1 // loop_header_branch
      %12 = sbr.rel (%p10) target = $region8
    $region5: #{d3net_forward.28} parent=1 // loop_body
      %s14 = ssub.s32 %s9, 1
      %s15 = ssub.s32 %s9, 2
      %s16 = sadd.s32 %s9, 1
      %s18 = sadd.s32 %s17, 1
      %p21 = scmp.eq.s32.totalorder %s9, 1
      %p22 = scmp.ne.s32.totalorder %s17, %s19
      %p23 = scmp.eq.s32.totalorder %s9, 0
      %p24 = por %p22, %p23
      %p25 = scmp.ne.s32.totalorder %s17, %s19
      %p26 = scmp.eq.s32.totalorder %s14, 1
      %p27 = por %p25, %p26
      %p28 = scmp.ne.s32.totalorder %s19, %s20
      %p29 = scmp.eq.s32.totalorder %s14, 0
      %p30 = por %p28, %p29
      %p31 = scmp.ne.s32.totalorder %s19, %s20
      %p32 = scmp.eq.s32.totalorder %s15, 1
      %p33 = por %p31, %p32
      %p35 = scmp.ne.s32.totalorder %s20, %s34
      %p36 = scmp.eq.s32.totalorder %s15, 0
      %p37 = por %p35, %p36
      %s38 = ssub.s32 %s9, %s16
      %p39 = scmp.eq.s32.totalorder %s38, 0
      %s41 = sadd.s32 %s40, 1
      %s42 = scalar_select %p39, %s40, %s41
      %p45 = pneg %p39
      %p46 = scmp.eq.s32.totalorder %s9, 1
      %p47 = por %p45, %p46
      %p48 = scmp.ne.s32.totalorder %s40, %s43
      %p49 = scmp.eq.s32.totalorder %s9, 0
      %p50 = por %p48, %p49
      %p51 = scmp.ne.s32.totalorder %s40, %s43
      %p52 = scmp.eq.s32.totalorder %s14, 1
      %p53 = por %p51, %p52
      %p54 = scmp.ne.s32.totalorder %s43, %s44
      %p55 = scmp.eq.s32.totalorder %s14, 0
      %p56 = por %p54, %p55
      %p57 = scmp.ne.s32.totalorder %s43, %s44
      %p58 = scmp.eq.s32.totalorder %s15, 1
      %p59 = por %p57, %p58
      %p61 = scmp.ne.s32.totalorder %s44, %s60
      %p62 = scmp.eq.s32.totalorder %s15, 0
      %p63 = por %p61, %p62
      %s65 = sadd.s32 %s64, 1
      %p68 = scmp.eq.s32.totalorder %s9, 1
      %p69 = scmp.ne.s32.totalorder %s64, %s66
      %p70 = scmp.eq.s32.totalorder %s9, 0
      %p71 = por %p69, %p70
      %p72 = scmp.ne.s32.totalorder %s64, %s66
      %p73 = scmp.eq.s32.totalorder %s14, 1
      %p74 = por %p72, %p73
      %p75 = scmp.ne.s32.totalorder %s66, %s67
      %p76 = scmp.eq.s32.totalorder %s14, 0
      %p77 = por %p75, %p76
      %p78 = scmp.ne.s32.totalorder %s66, %s67
      %p79 = scmp.eq.s32.totalorder %s15, 1
      %p80 = por %p78, %p79
      %p82 = scmp.ne.s32.totalorder %s67, %s81
      %p83 = scmp.eq.s32.totalorder %s15, 0
      %p84 = por %p82, %p83
      %s85 = ssub.s32 %s9, %s16
      %p86 = scmp.eq.s32.totalorder %s85, 0
      %s88 = sadd.s32 %s87, 1
      %s89 = scalar_select %p86, %s87, %s88
      %p92 = pneg %p86
      %p93 = scmp.eq.s32.totalorder %s9, 1
      %p94 = por %p92, %p93
      %p95 = scmp.ne.s32.totalorder %s87, %s90
      %p96 = scmp.eq.s32.totalorder %s9, 0
      %p97 = por %p95, %p96
      %p98 = scmp.ne.s32.totalorder %s87, %s90
      %p99 = scmp.eq.s32.totalorder %s14, 1
      %p100 = por %p98, %p99
      %p101 = scmp.ne.s32.totalorder %s90, %s91
      %p102 = scmp.eq.s32.totalorder %s14, 0
      %p103 = por %p101, %p102
      %p104 = scmp.ne.s32.totalorder %s90, %s91
      %p105 = scmp.eq.s32.totalorder %s15, 1
      %p106 = por %p104, %p105
      %p108 = scmp.ne.s32.totalorder %s91, %s107
      %p109 = scmp.eq.s32.totalorder %s15, 0
      %p110 = por %p108, %p109
      %p111 = scmp.le.s32.totalorder 1, %s9
      %p112 = scmp.lt.s32.totalorder %s9, 3
      %p113 = pnand %p111, %p112
      %p114 = pneg %p113
      // Predicated region
      $region9: #{d3net_forward.28} parent=5 // pred_check
        _
      $region10: #{d3net_forward.28} parent=5 // pred_check_branch
        %116 = sbr.rel (%p113) target = $region12
      $region11: #{d3net_forward.28} parent=5 // pred_region
        %s117 = ssub.s32 %s9, 1
        // Predicated region
        $region13: #{d3net_forward.28} parent=11 // pred_check
          %p118 = pneg %p30
        $region14: #{d3net_forward.28} parent=11 // pred_check_branch
          %120 = sbr.rel (%p118) target = $region16
        $region15: #{d3net_forward.28} parent=11 // pred_region
          _
        $region16: #{d3net_forward.28} parent=11 // pred_fallthru
          _
        // Predicated region
        $region17: #{d3net_forward.28} parent=11 // pred_check
          %p121 = pneg %p77
        $region18: #{d3net_forward.28} parent=11 // pred_check_branch
          %123 = sbr.rel (%p121) target = $region20
        $region19: #{d3net_forward.28} parent=11 // pred_region
          _
        $region20: #{d3net_forward.28} parent=11 // pred_fallthru
          _
      $region12: #{d3net_forward.28} parent=5 // pred_fallthru
        _
      %p124 = scmp.lt.s32.totalorder %s9, 2
      // Predicated region
      $region21: #{d3net_forward.28} parent=5 // pred_check
        %p125 = pneg %p124
      $region22: #{d3net_forward.28} parent=5 // pred_check_branch
        %127 = sbr.rel (%p125) target = $region24
      $region23: #{d3net_forward.28} parent=5 // pred_region
        // Predicated region
        $region25: #{d3net_forward.28} parent=23 // pred_check
          %p128 = pneg %p50
        $region26: #{d3net_forward.28} parent=23 // pred_check_branch
          %130 = sbr.rel (%p128) target = $region28
        $region27: #{d3net_forward.28} parent=23 // pred_region
          %s131 = sand.u32 %s40, 1
          %s132 = sand.u32 %s40, 1
          %s133 = smul.addr %s132, 12
          %s134 = scalar_lea.vmem [#allocation2], %s133
          %s135 = smul.addr %s9, 4
          %s136 = scalar_lea.vmem %s1, %s135
          // Predicated region
          $region29: #{d3net_forward.28} parent=27 // pred_check
            _
          $region30: #{d3net_forward.28} parent=27 // pred_check_branch
            %138 = sbr.rel (0) target = $region32
          $region31: #{d3net_forward.28} parent=27 // pred_region
            // Predicated region
            $region33: #{d3net_forward.28} parent=31 // pred_check
              _
            $region34: #{d3net_forward.28} parent=31 // pred_check_branch
              %140 = sbr.rel target = $region36
            $region35: #{d3net_forward.28} parent=31 // pred_region
              // Predicated region
              $region48: #{d3net_forward.28} parent=35 // pred_check
                _
              $region49: #{d3net_forward.28} parent=35 // pred_check_branch
                %160 = sbr.rel (0) target = $region51
              $region50: #{d3net_forward.28} parent=35 // pred_region
                loop: start=0, step=1, limit=1
                $region52: #{d3net_forward.28} parent=50 // loop_pre_header
                  _
                $region53: #{d3net_forward.28} parent=50 // loop_header
                  %s162 = sphi 0, %s166
                  %p163 = scmp.ge.s32.totalorder %s162, 1
                  %s167 = sphi %s136, %s136
                  %s168 = sphi %s134, %s134
                $region54: #{d3net_forward.28} parent=50 // loop_header_branch
                  %165 = sbr.rel (%p163) target = $region58
                $region55: #{d3net_forward.28} parent=50 // loop_body
                  _
                $region56: #{d3net_forward.28} parent=50 // loop_footer
                  %s166 = sadd.s32 1, %s162
                $region57: #{d3net_forward.28} parent=50 // loop_footer_branch
                  %161 = sbr.rel target = $region53
                $region58: #{d3net_forward.28} parent=50 // loop_exit
                  _
                %s170 = ssub.s32 16, 1
                loop: start=0, step=1, limit=1
                $region59: #{d3net_forward.28} parent=50 // loop_pre_header
                  _
                $region60: #{d3net_forward.28} parent=50 // loop_header
                  %s172 = sphi 0, %s176
                  %p173 = scmp.ge.s32.totalorder %s172, 1
                  %s177 = sphi %s136, %s136
                  %s178 = sphi %s134, %s134
                $region61: #{d3net_forward.28} parent=50 // loop_header_branch
                  %175 = sbr.rel (%p173) target = $region65
                $region62: #{d3net_forward.28} parent=50 // loop_body
                  %v179 = vld [vmem:[%s177] sm:%s170]
                  %180 = vst [vmem:[%s178] sm:%s170] %v179
                  %v181 = vld [vmem:[%s177 + $0x8] sm:%s170]
                  %182 = vst [vmem:[%s178 + $0x4] sm:%s170] %v181
                  %v183 = vld [vmem:[%s177 + $0x10] sm:%s170]
                  %184 = vst [vmem:[%s178 + $0x8] sm:%s170] %v183
                $region63: #{d3net_forward.28} parent=50 // loop_footer
                  %s176 = sadd.s32 1, %s172
                $region64: #{d3net_forward.28} parent=50 // loop_footer_branch
                  %171 = sbr.rel target = $region60
                $region65: #{d3net_forward.28} parent=50 // loop_exit
                  _
              $region51: #{d3net_forward.28} parent=35 // pred_fallthru
                _
            $region36: #{d3net_forward.28} parent=31 // pred_fallthru
              _
            // Predicated region
            $region37: #{d3net_forward.28} parent=31 // pred_check
              _
            $region38: #{d3net_forward.28} parent=31 // pred_check_branch
              %142 = sbr.rel (0) target = $region40
            $region39: #{d3net_forward.28} parent=31 // pred_region
              %s144 = ssub.s32 16, 1
              loop: start=0, step=1, limit=1
              $region41: #{d3net_forward.28} parent=39 // loop_pre_header
                _
              $region42: #{d3net_forward.28} parent=39 // loop_header
                %s146 = sphi 0, %s150
                %p147 = scmp.ge.s32.totalorder %s146, 1
                %s151 = sphi %s136, %s136
                %s152 = sphi %s134, %s134
              $region43: #{d3net_forward.28} parent=39 // loop_header_branch
                %149 = sbr.rel (%p147) target = $region47
              $region44: #{d3net_forward.28} parent=39 // loop_body
                %v153 = vld [vmem:[%s151] sm:%s144]
                %154 = vst [vmem:[%s152] sm:%s144] %v153
                %v155 = vld [vmem:[%s151 + $0x8] sm:%s144]
                %156 = vst [vmem:[%s152 + $0x4] sm:%s144] %v155
                %v157 = vld [vmem:[%s151 + $0x10] sm:%s144]
                %158 = vst [vmem:[%s152 + $0x8] sm:%s144] %v157
              $region45: #{d3net_forward.28} parent=39 // loop_footer
                %s150 = sadd.s32 1, %s146
              $region46: #{d3net_forward.28} parent=39 // loop_footer_branch
                %145 = sbr.rel target = $region42
              $region47: #{d3net_forward.28} parent=39 // loop_exit
                _
            $region40: #{d3net_forward.28} parent=31 // pred_fallthru
              _
          $region32: #{d3net_forward.28} parent=27 // pred_fallthru
            _
          %185 = vnop
        $region28: #{d3net_forward.28} parent=23 // pred_fallthru
          _
      $region24: #{d3net_forward.28} parent=5 // pred_fallthru
        _
      %p186 = scmp.le.s32.totalorder 1, %s9
      %p187 = scmp.lt.s32.totalorder %s9, 3
      %p188 = pnand %p186, %p187
      %p189 = pneg %p188
      // Predicated region
      $region66: #{d3net_forward.28} parent=5 // pred_check
        _
      $region67: #{d3net_forward.28} parent=5 // pred_check_branch
        %191 = sbr.rel (%p188) target = $region69
      $region68: #{d3net_forward.28} parent=5 // pred_region
        %s192 = ssub.s32 %s9, 1
        %s193 = sand.u32 %s43, 1
        %s194 = sand.u32 %s43, 1
        %s195 = smul.addr %s194, 12
        %s196 = scalar_lea.vmem [#allocation2], %s195
        // Predicated region
        $region70: #{d3net_forward.28} parent=68 // pred_check
          %p197 = pneg %p56
        $region71: #{d3net_forward.28} parent=68 // pred_check_branch
          %199 = sbr.rel (%p197) target = $region73
        $region72: #{d3net_forward.28} parent=68 // pred_region
          _
        $region73: #{d3net_forward.28} parent=68 // pred_fallthru
          _
        %p200 = pneg %p30
        %p201 = pneg %p27
        %s202 = sand.u32 %s43, 1
        %s203 = sand.u32 %s43, 1
        %s204 = smul.addr %s203, 12
        %s205 = scalar_lea.vmem [#allocation2], %s204
        %p206 = pneg %p56
        %p207 = pneg %p53
        %p208 = pneg %p77
        %p209 = pneg %p74
        %p210 = pneg %p103
        %p211 = pneg %p100
        %p212 = scmp.lt.s32.totalorder %s14, 1
        %s213 = scalar_select %p212, %s14, 1
        %s214 = smul.addr %s213, 8
        %s215 = scalar_lea.vmem %s3, %s214
        %p216 = scmp.lt.s32.totalorder %s14, 1
        %s217 = scalar_select %p216, %s14, 1
        %s218 = smul.addr %s217, 8
        %s219 = scalar_lea.vmem %s3, %s218
        %v221 = vld [vmem:[%s0] sm:$0xf]
        %v222 = vld [vmem:[%s196] sm:$0xf]
        %v223 = vld [vmem:[%s196 + $0x4] sm:$0xf]
        %v224 = vld [vmem:[%s196 + $0x8] sm:$0x1]
        %v225 = vld [vmem:[%s2] sm:$0xff]
        %227 = vset.pattern.permute.xlu0 0
        %228 = vperm.xlu0 %227, %v225
        %v229 = vpop.permute.xlu0 %228
        %v234 = vunpack.c.l.b16 %v222
        %v235 = vunpack.c.l.b16 %v223
        %v236 = vunpack.c.l.b16 %v224
        %v237 = vpack.c.b16 %v235, %v234
        %v238 = vpack.c.b16 %v236, %v236
        %vm240 = vcmask 146432
        %v242 = vsel %vm240, %v221, 0
        %vm244 = vcmask 1040384
        %v246 = vsel %vm244, %v238, 0
        %248 = vmatprep.subr.bf16.mxu0 0
        %249 = vmatpush1.bf16.msra.mxu0 0
        %250 = vmatprep.subr.bf16.mxu0 0
        %251 = vmatpush1.bf16.msra.mxu0 0
        %252 = vmatprep.subr.bf16.mxu0 0
        %253 = vmatpush1.bf16.msra.mxu0 0
        %254 = vmatprep.subr.bf16.mxu0 0
        %255 = vmatpush1.bf16.msra.mxu0 0
        %256 = vmatprep.subr.bf16.mxu0 0
        %257 = vmatpush1.bf16.msra.mxu0 0
        %258 = vmatprep.subr.bf16.mxu0 0
        %259 = vmatpush1.bf16.msra.mxu0 0
        %260 = vmatprep.subr.bf16.mxu0 0
        %261 = vmatpush1.bf16.msra.mxu0 %v246
        %262 = vmatprep.subr.bf16.mxu0 0
        %263 = vmatpush1.bf16.msra.mxu0 %v237
        %264 = vmatprep.subr.bf16.mxu0 0
        %265 = vmatpush2.bf16.msra.mxu0 0
        %266 = vmatprep.subr.bf16.mxu0 0
        %267 = vmatpush2.bf16.msra.mxu0 0
        %268 = vmatprep.subr.bf16.mxu0 0
        %269 = vmatpush2.bf16.msra.mxu0 0
        %270 = vmatprep.subr.bf16.mxu0 0
        %271 = vmatpush2.bf16.msra.mxu0 0
        %272 = vmatprep.subr.bf16.mxu0 0
        %273 = vmatpush2.bf16.msra.mxu0 0
        %274 = vmatprep.subr.bf16.mxu0 0
        %275 = vmatpush2.bf16.msra.mxu0 0
        %276 = vmatprep.subr.bf16.mxu0 0
        %277 = vmatpush2.bf16.msra.mxu0 0
        %278 = vmatprep.subr.bf16.mxu0 0
        %279 = vmatpush2.bf16.msra.mxu0 0
        %280 = vmatprep.mubr.bf16.mxu0 0
        %281 = vmatmul.mubr.bf16.gmra.mxu0 %v242
        %v282 = vpop.f32.mrf.mxu0
        %v283 = vadd.f32 %v229, %v282
        %v284 = vpop.f32.mrf.mxu0
        %v285 = vpop.f32.mrf.mxu0
        %v286 = vpop.f32.mrf.mxu0
        %287 = vdwg.mxu0
        %288 = vst [vmem:[%s219] sm:$0xff] %v283
        %p289 = scmp.lt.s32.totalorder %s14, 1
        %s290 = scalar_select %p289, %s14, 1
        %s291 = smul.addr %s290, 8
        %s292 = scalar_lea.vmem %s3, %s291
        // Predicated region
        $region74: #{d3net_forward.28} parent=68 // pred_check
          %p293 = pneg %p100
        $region75: #{d3net_forward.28} parent=68 // pred_check_branch
          %295 = sbr.rel (%p293) target = $region77
        $region76: #{d3net_forward.28} parent=68 // pred_region
          _
        $region77: #{d3net_forward.28} parent=68 // pred_fallthru
          _
      $region69: #{d3net_forward.28} parent=5 // pred_fallthru
        _
      %p296 = scmp.le.s32.totalorder 2, %s9
      // Predicated region
      $region78: #{d3net_forward.28} parent=5 // pred_check
        %p297 = pneg %p296
      $region79: #{d3net_forward.28} parent=5 // pred_check_branch
        %299 = sbr.rel (%p297) target = $region81
      $region80: #{d3net_forward.28} parent=5 // pred_region
        %s300 = ssub.s32 %s9, 2
        // Predicated region
        $region82: #{d3net_forward.28} parent=80 // pred_check
          %p301 = pneg %p106
        $region83: #{d3net_forward.28} parent=80 // pred_check_branch
          %303 = sbr.rel (%p301) target = $region85
        $region84: #{d3net_forward.28} parent=80 // pred_region
          %p304 = scmp.lt.s32.totalorder %s15, 1
          %s305 = scalar_select %p304, %s15, 1
          %s306 = smul.addr %s305, 8
          %s307 = scalar_lea.vmem %s3, %s306
        $region85: #{d3net_forward.28} parent=80 // pred_fallthru
          _
      $region81: #{d3net_forward.28} parent=5 // pred_fallthru
        _
    $region6: #{d3net_forward.28} parent=1 // loop_footer
      %s13 = sadd.s32 1, %s9
    $region7: #{d3net_forward.28} parent=1 // loop_footer_branch
      %8 = sbr.rel target = $region3
    $region8: #{d3net_forward.28} parent=1 // loop_exit
      _

// kernel: mul.36
$region0: #{mul.36}
  %s0 = inlined_call_operand.vmem [shape: f32[2,64], index: 0, kind: input, shape index: {}]
  %s1 = inlined_call_operand.vmem [shape: f32[2,2,8,4], index: 1, kind: output, shape index: {}]
  $region1: #{mul.36} parent=0
    #allocation0 [shape = 'u8[4096]{0}', space=vmem, size = 0x1000, scoped, tag = 'scoped mem for input reshape']
    %s3 = sshll.u32 1, 2
    %s4 = ssub.s32 %s3, 1
    %v5 = vld [vmem:[%s0] sm:%s4]
    %6 = vst [vmem:[#allocation0] sm:%s4] %v5
    %v7 = vld [vmem:[#allocation0] sm:$0x3]
    %vm8 = vcmask 31744
    %9 = vst.msk [vmem:[%s1] ss:$16 sm:$0x3] %vm8, %v7
    %v10 = vld [vmem:[#allocation0] sm:$0x3]
    %11 = vrot.lane.b32.xlu0 %v10, 124
    %v12 = vpop.permute.xlu0 %11
    %vm13 = vcmask 31744
    %s14 = scalar_lea.vmem %s1, 1
    %15 = vst.msk [vmem:[%s14] ss:$16 sm:$0x3] %vm13, %v12
    %v16 = vld [vmem:[#allocation0] sm:$0x3]
    %17 = vrot.lane.b32.xlu0 %v16, 120
    %v18 = vpop.permute.xlu0 %17
    %vm19 = vcmask 31744
    %s20 = scalar_lea.vmem %s1, 2
    %21 = vst.msk [vmem:[%s20] ss:$16 sm:$0x3] %vm19, %v18
    %v22 = vld [vmem:[#allocation0] sm:$0x3]
    %23 = vrot.lane.b32.xlu0 %v22, 116
    %v24 = vpop.permute.xlu0 %23
    %vm25 = vcmask 31744
    %s26 = scalar_lea.vmem %s1, 3
    %27 = vst.msk [vmem:[%s26] ss:$16 sm:$0x3] %vm25, %v24
    %v28 = vld [vmem:[#allocation0] sm:$0x3]
    %29 = vrot.lane.b32.xlu0 %v28, 112
    %v30 = vpop.permute.xlu0 %29
    %vm31 = vcmask 31744
    %s32 = scalar_lea.vmem %s1, 4
    %33 = vst.msk [vmem:[%s32] ss:$16 sm:$0x3] %vm31, %v30
    %v34 = vld [vmem:[#allocation0] sm:$0x3]
    %35 = vrot.lane.b32.xlu0 %v34, 108
    %v36 = vpop.permute.xlu0 %35
    %vm37 = vcmask 31744
    %s38 = scalar_lea.vmem %s1, 5
    %39 = vst.msk [vmem:[%s38] ss:$16 sm:$0x3] %vm37, %v36
    %v40 = vld [vmem:[#allocation0] sm:$0x3]
    %41 = vrot.lane.b32.xlu0 %v40, 104
    %v42 = vpop.permute.xlu0 %41
    %vm43 = vcmask 31744
    %s44 = scalar_lea.vmem %s1, 6
    %45 = vst.msk [vmem:[%s44] ss:$16 sm:$0x3] %vm43, %v42
    %v46 = vld [vmem:[#allocation0] sm:$0x3]
    %47 = vrot.lane.b32.xlu0 %v46, 100
    %v48 = vpop.permute.xlu0 %47
    %vm49 = vcmask 31744
    %s50 = scalar_lea.vmem %s1, 7
    %51 = vst.msk [vmem:[%s50] ss:$16 sm:$0x3] %vm49, %v48
    %v52 = vld [vmem:[#allocation0] sm:$0x3]
    %53 = vrot.lane.b32.xlu0 %v52, 96
    %v54 = vpop.permute.xlu0 %53
    %vm55 = vcmask 31744
    %s56 = scalar_lea.vmem %s1, 8
    %57 = vst.msk [vmem:[%s56] ss:$16 sm:$0x3] %vm55, %v54
    %v58 = vld [vmem:[#allocation0] sm:$0x3]
    %59 = vrot.lane.b32.xlu0 %v58, 92
    %v60 = vpop.permute.xlu0 %59
    %vm61 = vcmask 31744
    %s62 = scalar_lea.vmem %s1, 9
    %63 = vst.msk [vmem:[%s62] ss:$16 sm:$0x3] %vm61, %v60
    %v64 = vld [vmem:[#allocation0] sm:$0x3]
    %65 = vrot.lane.b32.xlu0 %v64, 88
    %v66 = vpop.permute.xlu0 %65
    %vm67 = vcmask 31744
    %s68 = scalar_lea.vmem %s1, 10
    %69 = vst.msk [vmem:[%s68] ss:$16 sm:$0x3] %vm67, %v66
    %v70 = vld [vmem:[#allocation0] sm:$0x3]
    %71 = vrot.lane.b32.xlu0 %v70, 84
    %v72 = vpop.permute.xlu0 %71
    %vm73 = vcmask 31744
    %s74 = scalar_lea.vmem %s1, 11
    %75 = vst.msk [vmem:[%s74] ss:$16 sm:$0x3] %vm73, %v72
    %v76 = vld [vmem:[#allocation0] sm:$0x3]
    %77 = vrot.lane.b32.xlu0 %v76, 80
    %v78 = vpop.permute.xlu0 %77
    %vm79 = vcmask 31744
    %s80 = scalar_lea.vmem %s1, 12
    %81 = vst.msk [vmem:[%s80] ss:$16 sm:$0x3] %vm79, %v78
    %v82 = vld [vmem:[#allocation0] sm:$0x3]
    %83 = vrot.lane.b32.xlu0 %v82, 76
    %v84 = vpop.permute.xlu0 %83
    %vm85 = vcmask 31744
    %s86 = scalar_lea.vmem %s1, 13
    %87 = vst.msk [vmem:[%s86] ss:$16 sm:$0x3] %vm85, %v84
    %v88 = vld [vmem:[#allocation0] sm:$0x3]
    %89 = vrot.lane.b32.xlu0 %v88, 72
    %v90 = vpop.permute.xlu0 %89
    %vm91 = vcmask 31744
    %s92 = scalar_lea.vmem %s1, 14
    %93 = vst.msk [vmem:[%s92] ss:$16 sm:$0x3] %vm91, %v90
    %v94 = vld [vmem:[#allocation0] sm:$0x3]
    %95 = vrot.lane.b32.xlu0 %v94, 68
    %v96 = vpop.permute.xlu0 %95
    %vm97 = vcmask 31744
    %s98 = scalar_lea.vmem %s1, 15
    %99 = vst.msk [vmem:[%s98] ss:$16 sm:$0x3] %vm97, %v96

// kernel: d3net_forward.29
$region0: #{d3net_forward.29}
  #allocation0 [shape = 'u32[]', space=smem, size = 0x4, offset = 0x4, fixed_abs, tag = 'smem constant byte address 0x4 - core index']
  #allocation1 [shape = 'u32[144,128]{1,0:T(1,128)}', space=vmem, size = 0x12000, scoped, tag = 'internal scratch']
  %s0 = inlined_call_operand.vmem [shape: bf16[2,72], index: 0, kind: input, shape index: {}]
  %s1 = inlined_call_operand.vmem [shape: bf16[72,256], index: 1, kind: input, shape index: {}]
  %s2 = inlined_call_operand.vmem [shape: f32[2,1], index: 2, kind: input, shape index: {}]
  %s3 = inlined_call_operand.vmem [shape: f32[2,1], index: 3, kind: input, shape index: {}]
  %s4 = inlined_call_operand.vmem [shape: f32[2,256], index: 4, kind: output, shape index: {}]
  %s5 = sld [smem:[#allocation0]]
  $region26: #{d3net_forward.29} parent=0
    _
  %s7 = ssub.s32 1, %s5
  %s8 = scalar_select 0, %s7, %s5
  // Predicated region
  $region2: #{d3net_forward.29} parent=0 // pred_check
    _
  $region3: #{d3net_forward.29} parent=0 // pred_check_branch
    %10 = sbr.rel (0) target = $region5
  $region4: #{d3net_forward.29} parent=0 // pred_region
    _
  $region5: #{d3net_forward.29} parent=0 // pred_fallthru
    _
  // Predicated region
  $region6: #{d3net_forward.29} parent=0 // pred_check
    _
  $region7: #{d3net_forward.29} parent=0 // pred_check_branch
    %12 = sbr.rel (0) target = $region9
  $region8: #{d3net_forward.29} parent=0 // pred_region
    _
  $region9: #{d3net_forward.29} parent=0 // pred_fallthru
    _
  // Predicated region
  $region10: #{d3net_forward.29} parent=0 // pred_check
    _
  $region11: #{d3net_forward.29} parent=0 // pred_check_branch
    %14 = sbr.rel (0) target = $region13
  $region12: #{d3net_forward.29} parent=0 // pred_region
    _
  $region13: #{d3net_forward.29} parent=0 // pred_fallthru
    _
  // Predicated region
  $region14: #{d3net_forward.29} parent=0 // pred_check
    _
  $region15: #{d3net_forward.29} parent=0 // pred_check_branch
    %16 = sbr.rel (0) target = $region17
  $region16: #{d3net_forward.29} parent=0 // pred_region
    _
  $region17: #{d3net_forward.29} parent=0 // pred_fallthru
    _
  %v18 = vld [vmem:[%s0] sm:$0x1]
  %v19 = vld [vmem:[%s1] sm:$0xff]
  %v20 = vld [vmem:[%s1 + $0x8] sm:$0xff]
  %v21 = vld [vmem:[%s1 + $0x10] sm:$0xff]
  %v22 = vld [vmem:[%s1 + $0x18] sm:$0xff]
  %v23 = vld [vmem:[%s1 + $0x20] sm:$0xff]
  %v24 = vld [vmem:[%s1 + $0x28] sm:$0xff]
  %v25 = vld [vmem:[%s1 + $0x30] sm:$0xff]
  %v26 = vld [vmem:[%s1 + $0x38] sm:$0xff]
  %v27 = vld [vmem:[%s1 + $0x40] sm:$0xff]
  %v37 = vunpack.c.l.b16 %v19
  %v38 = vunpack.c.h.b16 %v19
  %v39 = vunpack.c.l.b16 %v20
  %v40 = vunpack.c.h.b16 %v20
  %v41 = vunpack.c.l.b16 %v21
  %v42 = vunpack.c.h.b16 %v21
  %v43 = vunpack.c.l.b16 %v22
  %v44 = vunpack.c.h.b16 %v22
  %v45 = vunpack.c.l.b16 %v23
  %v46 = vunpack.c.h.b16 %v23
  %v47 = vunpack.c.l.b16 %v24
  %v48 = vunpack.c.h.b16 %v24
  %v49 = vunpack.c.l.b16 %v25
  %v50 = vunpack.c.h.b16 %v25
  %v51 = vunpack.c.l.b16 %v26
  %v52 = vunpack.c.h.b16 %v26
  %v53 = vunpack.c.l.b16 %v27
  %v54 = vunpack.c.h.b16 %v27
  %v55 = vpack.c.b16 %v39, %v37
  %v56 = vpack.c.b16 %v40, %v38
  %v57 = vpack.c.b16 %v43, %v41
  %v58 = vpack.c.b16 %v44, %v42
  %v59 = vpack.c.b16 %v47, %v45
  %v60 = vpack.c.b16 %v48, %v46
  %v61 = vpack.c.b16 %v51, %v49
  %v62 = vpack.c.b16 %v52, %v50
  %v63 = vpack.c.b16 %v53, %v53
  %v64 = vpack.c.b16 %v54, %v54
  %vm73 = vcmask 588800
  %v75 = vsel %vm73, %v18, 0
  %vm77 = vcmask 1043456
  %v79 = vsel %vm77, %v63, 0
  %v82 = vsel %vm77, %v64, 0
  %84 = vmatprep.subr.bf16.mxu0 0
  %85 = vmatpush1.bf16.msra.mxu0 0
  %86 = vmatprep.subr.bf16.mxu0 0
  %87 = vmatpush1.bf16.msra.mxu0 0
  %88 = vmatprep.subr.bf16.mxu0 0
  %89 = vmatpush1.bf16.msra.mxu0 0
  %90 = vmatprep.subr.bf16.mxu0 %v82
  %91 = vmatpush1.bf16.msra.mxu0 %v79
  %92 = vmatprep.subr.bf16.mxu0 %v62
  %93 = vmatpush1.bf16.msra.mxu0 %v61
  %94 = vmatprep.subr.bf16.mxu0 %v60
  %95 = vmatpush1.bf16.msra.mxu0 %v59
  %96 = vmatprep.subr.bf16.mxu0 %v58
  %97 = vmatpush1.bf16.msra.mxu0 %v57
  %98 = vmatprep.subr.bf16.mxu0 %v56
  %99 = vmatpush1.bf16.msra.mxu0 %v55
  %100 = vmatprep.subr.bf16.mxu0 0
  %101 = vmatpush2.bf16.msra.mxu0 0
  %102 = vmatprep.subr.bf16.mxu0 0
  %103 = vmatpush2.bf16.msra.mxu0 0
  %104 = vmatprep.subr.bf16.mxu0 0
  %105 = vmatpush2.bf16.msra.mxu0 0
  %106 = vmatprep.subr.bf16.mxu0 0
  %107 = vmatpush2.bf16.msra.mxu0 0
  %108 = vmatprep.subr.bf16.mxu0 0
  %109 = vmatpush2.bf16.msra.mxu0 0
  %110 = vmatprep.subr.bf16.mxu0 0
  %111 = vmatpush2.bf16.msra.mxu0 0
  %112 = vmatprep.subr.bf16.mxu0 0
  %113 = vmatpush2.bf16.msra.mxu0 0
  %114 = vmatprep.subr.bf16.mxu0 0
  %115 = vmatpush2.bf16.msra.mxu0 0
  %116 = vmatprep.mubr.bf16.mxu0 0
  %117 = vmatmul.mubr.bf16.gmra.mxu0 %v75
  %v118 = vpop.f32.mrf.mxu0
  %v119 = vadd.f32 0.0, %v118
  %v120 = vpop.f32.mrf.mxu0
  %v121 = vadd.f32 0.0, %v120
  %v122 = vpop.f32.mrf.mxu0
  %v123 = vpop.f32.mrf.mxu0
  %124 = vdwg.mxu0
  %vm125 = vcmask 1041408
  %v126 = vsel %vm125, %v119, 0.0
  %v127 = vsel %vm125, %v121, 0.0
  %v128 = vadd.f32 %v126, %v127
  %129 = vadd.xlane.f32.xlu0 %v128
  %v130 = vpop.xlane.xlu0 %129
  %v131 = vrcp.pop 256.0
  %v132 = vmul.f32 %v130, %v131
  %v133 = vmul.f32 %v119, %v119
  %v134 = vmul.f32 %v121, %v121
  %v135 = vsel %vm125, %v133, 0.0
  %v136 = vsel %vm125, %v134, 0.0
  %v137 = vadd.f32 %v135, %v136
  %138 = vadd.xlane.f32.xlu0 %v137
  %v139 = vpop.xlane.xlu0 %138
  %v140 = vmul.f32 %v139, %v131
  %v141 = vmul.f32 %v132, %v132
  %v142 = vsub.f32 %v140, %v141
  %v143 = vmax.f32 %v142, 0.0
  %v144 = vld [vmem:[%s2] sm:$0x3]
  %v145 = vadd.f32 %v143, 1e-12
  %v146 = vrsqrt.pop %v145
  %v147 = vmul.f32 %v144, %v146
  %v148 = vsub.f32 %v119, %v132
  %v149 = vsub.f32 %v121, %v132
  %151 = vset.pattern.permute.xlu0 0
  %152 = vperm.xlu0 %151, %v147
  %v153 = vpop.permute.xlu0 %152
  %v155 = vmul.f32 %v148, %v153
  %v156 = vmul.f32 %v149, %v153
  %v157 = vld [vmem:[%s3] sm:$0x3]
  %159 = vset.pattern.permute.xlu0 0
  %160 = vperm.xlu0 %159, %v157
  %v161 = vpop.permute.xlu0 %160
  %v163 = vadd.f32 %v155, %v161
  %v164 = vadd.f32 %v156, %v161
  %v165 = vmax.f32 %v163, 0.0
  %v166 = vmax.f32 %v164, 0.0
  %v169 = vcombine.low %v165, %v166
  %v171 = vunpack.c.l.s4 1983009808
  %v172 = vunpack.c.0.s8 %v171
  %v173 = vlaneseq
  %v174 = vshrl.u32 %v173, 7
  %v175 = vsub.s32 %v172, %v174
  %v176 = vrot.slane %v169, %v175
  %178 = vst [vmem:[%s4] sm:$0xf] %v176
  // Predicated region
  $region18: #{d3net_forward.29} parent=0 // pred_check
    _
  $region19: #{d3net_forward.29} parent=0 // pred_check_branch
    %180 = sbr.rel (0) target = $region21
  $region20: #{d3net_forward.29} parent=0 // pred_region
    _
  $region21: #{d3net_forward.29} parent=0 // pred_fallthru
    _
  // Predicated region
  $region22: #{d3net_forward.29} parent=0 // pred_check
    _
  $region23: #{d3net_forward.29} parent=0 // pred_check_branch
    %182 = sbr.rel (0) target = $region25
  $region24: #{d3net_forward.29} parent=0 // pred_region
    _
  $region25: #{d3net_forward.29} parent=0 // pred_fallthru
    _

// kernel: d3net_forward.30
$region0: #{d3net_forward.30}
  #allocation0 [shape = 'u32[]', space=smem, size = 0x4, offset = 0x4, fixed_abs, tag = 'smem constant byte address 0x4 - core index']
  #allocation1 [shape = 'u32[144,128]{1,0:T(1,128)}', space=vmem, size = 0x12000, scoped, tag = 'internal scratch']
  %s0 = inlined_call_operand.vmem [shape: bf16[2,18], index: 0, kind: input, shape index: {}]
  %s1 = inlined_call_operand.vmem [shape: bf16[18,64], index: 1, kind: input, shape index: {}]
  %s2 = inlined_call_operand.vmem [shape: f32[2,1], index: 2, kind: input, shape index: {}]
  %s3 = inlined_call_operand.vmem [shape: f32[2,1], index: 3, kind: input, shape index: {}]
  %s4 = inlined_call_operand.vmem [shape: f32[2,64], index: 4, kind: output, shape index: {}]
  %s5 = sld [smem:[#allocation0]]
  $region26: #{d3net_forward.30} parent=0
    _
  %s7 = ssub.s32 1, %s5
  %s8 = scalar_select 0, %s7, %s5
  // Predicated region
  $region2: #{d3net_forward.30} parent=0 // pred_check
    _
  $region3: #{d3net_forward.30} parent=0 // pred_check_branch
    %10 = sbr.rel (0) target = $region5
  $region4: #{d3net_forward.30} parent=0 // pred_region
    _
  $region5: #{d3net_forward.30} parent=0 // pred_fallthru
    _
  // Predicated region
  $region6: #{d3net_forward.30} parent=0 // pred_check
    _
  $region7: #{d3net_forward.30} parent=0 // pred_check_branch
    %12 = sbr.rel (0) target = $region9
  $region8: #{d3net_forward.30} parent=0 // pred_region
    _
  $region9: #{d3net_forward.30} parent=0 // pred_fallthru
    _
  // Predicated region
  $region10: #{d3net_forward.30} parent=0 // pred_check
    _
  $region11: #{d3net_forward.30} parent=0 // pred_check_branch
    %14 = sbr.rel (0) target = $region13
  $region12: #{d3net_forward.30} parent=0 // pred_region
    _
  $region13: #{d3net_forward.30} parent=0 // pred_fallthru
    _
  // Predicated region
  $region14: #{d3net_forward.30} parent=0 // pred_check
    _
  $region15: #{d3net_forward.30} parent=0 // pred_check_branch
    %16 = sbr.rel (0) target = $region17
  $region16: #{d3net_forward.30} parent=0 // pred_region
    _
  $region17: #{d3net_forward.30} parent=0 // pred_fallthru
    _
  %v18 = vld [vmem:[%s0] sm:$0x1]
  %v19 = vld [vmem:[%s1] sm:$0xf]
  %v20 = vld [vmem:[%s1 + $0x4] sm:$0xf]
  %v21 = vld [vmem:[%s1 + $0x8] sm:$0x1]
  %v25 = vunpack.c.l.b16 %v19
  %v26 = vunpack.c.l.b16 %v20
  %v27 = vunpack.c.l.b16 %v21
  %v28 = vpack.c.b16 %v26, %v25
  %v29 = vpack.c.b16 %v27, %v27
  %vm31 = vcmask 146432
  %v33 = vsel %vm31, %v18, 0
  %vm35 = vcmask 1040384
  %v37 = vsel %vm35, %v29, 0
  %39 = vmatprep.subr.bf16.mxu0 0
  %40 = vmatpush1.bf16.msra.mxu0 0
  %41 = vmatprep.subr.bf16.mxu0 0
  %42 = vmatpush1.bf16.msra.mxu0 0
  %43 = vmatprep.subr.bf16.mxu0 0
  %44 = vmatpush1.bf16.msra.mxu0 0
  %45 = vmatprep.subr.bf16.mxu0 0
  %46 = vmatpush1.bf16.msra.mxu0 0
  %47 = vmatprep.subr.bf16.mxu0 0
  %48 = vmatpush1.bf16.msra.mxu0 0
  %49 = vmatprep.subr.bf16.mxu0 0
  %50 = vmatpush1.bf16.msra.mxu0 0
  %51 = vmatprep.subr.bf16.mxu0 0
  %52 = vmatpush1.bf16.msra.mxu0 %v37
  %53 = vmatprep.subr.bf16.mxu0 0
  %54 = vmatpush1.bf16.msra.mxu0 %v28
  %55 = vmatprep.subr.bf16.mxu0 0
  %56 = vmatpush2.bf16.msra.mxu0 0
  %57 = vmatprep.subr.bf16.mxu0 0
  %58 = vmatpush2.bf16.msra.mxu0 0
  %59 = vmatprep.subr.bf16.mxu0 0
  %60 = vmatpush2.bf16.msra.mxu0 0
  %61 = vmatprep.subr.bf16.mxu0 0
  %62 = vmatpush2.bf16.msra.mxu0 0
  %63 = vmatprep.subr.bf16.mxu0 0
  %64 = vmatpush2.bf16.msra.mxu0 0
  %65 = vmatprep.subr.bf16.mxu0 0
  %66 = vmatpush2.bf16.msra.mxu0 0
  %67 = vmatprep.subr.bf16.mxu0 0
  %68 = vmatpush2.bf16.msra.mxu0 0
  %69 = vmatprep.subr.bf16.mxu0 0
  %70 = vmatpush2.bf16.msra.mxu0 0
  %71 = vmatprep.mubr.bf16.mxu0 0
  %72 = vmatmul.mubr.bf16.gmra.mxu0 %v33
  %v73 = vpop.f32.mrf.mxu0
  %v74 = vadd.f32 0.0, %v73
  %v75 = vpop.f32.mrf.mxu0
  %v76 = vpop.f32.mrf.mxu0
  %v77 = vpop.f32.mrf.mxu0
  %78 = vdwg.mxu0
  %vm79 = vcmask 517120
  %v80 = vsel %vm79, %v74, 0.0
  %81 = vadd.xlane.f32.xlu0 %v80
  %v82 = vpop.xlane.xlu0 %81
  %v83 = vrcp.pop 64.0
  %v84 = vmul.f32 %v82, %v83
  %v85 = vmul.f32 %v74, %v74
  %v86 = vsel %vm79, %v85, 0.0
  %87 = vadd.xlane.f32.xlu0 %v86
  %v88 = vpop.xlane.xlu0 %87
  %v89 = vmul.f32 %v88, %v83
  %v90 = vmul.f32 %v84, %v84
  %v91 = vsub.f32 %v89, %v90
  %v92 = vmax.f32 %v91, 0.0
  %v93 = vld [vmem:[%s2] sm:$0x3]
  %v94 = vadd.f32 %v92, 1e-12
  %v95 = vrsqrt.pop %v94
  %v96 = vmul.f32 %v93, %v95
  %v97 = vsub.f32 %v74, %v84
  %99 = vset.pattern.permute.xlu0 0
  %100 = vperm.xlu0 %99, %v96
  %v101 = vpop.permute.xlu0 %100
  %v103 = vmul.f32 %v97, %v101
  %v104 = vld [vmem:[%s3] sm:$0x3]
  %106 = vset.pattern.permute.xlu0 0
  %107 = vperm.xlu0 %106, %v104
  %v108 = vpop.permute.xlu0 %107
  %v110 = vadd.f32 %v103, %v108
  %v111 = vmax.f32 %v110, 0.0
  %112 = vst.msk [vmem:[%s4] sm:$0x3] %vm79, %v111
  // Predicated region
  $region18: #{d3net_forward.30} parent=0 // pred_check
    _
  $region19: #{d3net_forward.30} parent=0 // pred_check_branch
    %114 = sbr.rel (0) target = $region21
  $region20: #{d3net_forward.30} parent=0 // pred_region
    _
  $region21: #{d3net_forward.30} parent=0 // pred_fallthru
    _
  // Predicated region
  $region22: #{d3net_forward.30} parent=0 // pred_check
    _
  $region23: #{d3net_forward.30} parent=0 // pred_check_branch
    %116 = sbr.rel (0) target = $region25
  $region24: #{d3net_forward.30} parent=0 // pred_region
    _
  $region25: #{d3net_forward.30} parent=0 // pred_fallthru
    _

// kernel: d3net_forward.31
$region0: #{d3net_forward.31}
  #allocation0 [shape = 'u32[]', space=smem, size = 0x4, offset = 0x4, fixed_abs, tag = 'smem constant byte address 0x4 - core index']
  #allocation1 [shape = 'u32[144,128]{1,0:T(1,128)}', space=vmem, size = 0x12000, scoped, tag = 'internal scratch']
  %s0 = inlined_call_operand.vmem [shape: bf16[2,36], index: 0, kind: input, shape index: {}]
  %s1 = inlined_call_operand.vmem [shape: bf16[36,256], index: 1, kind: input, shape index: {}]
  %s2 = inlined_call_operand.vmem [shape: f32[2,1], index: 2, kind: input, shape index: {}]
  %s3 = inlined_call_operand.vmem [shape: f32[2,1], index: 3, kind: input, shape index: {}]
  %s4 = inlined_call_operand.vmem [shape: f32[2,256], index: 4, kind: output, shape index: {}]
  %s5 = sld [smem:[#allocation0]]
  $region26: #{d3net_forward.31} parent=0
    _
  %s7 = ssub.s32 1, %s5
  %s8 = scalar_select 0, %s7, %s5
  // Predicated region
  $region2: #{d3net_forward.31} parent=0 // pred_check
    _
  $region3: #{d3net_forward.31} parent=0 // pred_check_branch
    %10 = sbr.rel (0) target = $region5
  $region4: #{d3net_forward.31} parent=0 // pred_region
    _
  $region5: #{d3net_forward.31} parent=0 // pred_fallthru
    _
  // Predicated region
  $region6: #{d3net_forward.31} parent=0 // pred_check
    _
  $region7: #{d3net_forward.31} parent=0 // pred_check_branch
    %12 = sbr.rel (0) target = $region9
  $region8: #{d3net_forward.31} parent=0 // pred_region
    _
  $region9: #{d3net_forward.31} parent=0 // pred_fallthru
    _
  // Predicated region
  $region10: #{d3net_forward.31} parent=0 // pred_check
    _
  $region11: #{d3net_forward.31} parent=0 // pred_check_branch
    %14 = sbr.rel (0) target = $region13
  $region12: #{d3net_forward.31} parent=0 // pred_region
    _
  $region13: #{d3net_forward.31} parent=0 // pred_fallthru
    _
  // Predicated region
  $region14: #{d3net_forward.31} parent=0 // pred_check
    _
  $region15: #{d3net_forward.31} parent=0 // pred_check_branch
    %16 = sbr.rel (0) target = $region17
  $region16: #{d3net_forward.31} parent=0 // pred_region
    _
  $region17: #{d3net_forward.31} parent=0 // pred_fallthru
    _
  %v18 = vld [vmem:[%s0] sm:$0x1]
  %v19 = vld [vmem:[%s1] sm:$0xff]
  %v20 = vld [vmem:[%s1 + $0x8] sm:$0xff]
  %v21 = vld [vmem:[%s1 + $0x10] sm:$0xff]
  %v22 = vld [vmem:[%s1 + $0x18] sm:$0xff]
  %v23 = vld [vmem:[%s1 + $0x20] sm:$0x33]
  %v29 = vunpack.c.l.b16 %v19
  %v30 = vunpack.c.h.b16 %v19
  %v31 = vunpack.c.l.b16 %v20
  %v32 = vunpack.c.h.b16 %v20
  %v33 = vunpack.c.l.b16 %v21
  %v34 = vunpack.c.h.b16 %v21
  %v35 = vunpack.c.l.b16 %v22
  %v36 = vunpack.c.h.b16 %v22
  %v37 = vunpack.c.l.b16 %v23
  %v38 = vunpack.c.h.b16 %v23
  %v39 = vpack.c.b16 %v31, %v29
  %v40 = vpack.c.b16 %v32, %v30
  %v41 = vpack.c.b16 %v35, %v33
  %v42 = vpack.c.b16 %v36, %v34
  %v43 = vpack.c.b16 %v37, %v37
  %v44 = vpack.c.b16 %v38, %v38
  %vm49 = vcmask 293888
  %v51 = vsel %vm49, %v18, 0
  %vm53 = vcmask 1041408
  %v55 = vsel %vm53, %v43, 0
  %v58 = vsel %vm53, %v44, 0
  %60 = vmatprep.subr.bf16.mxu0 0
  %61 = vmatpush1.bf16.msra.mxu0 0
  %62 = vmatprep.subr.bf16.mxu0 0
  %63 = vmatpush1.bf16.msra.mxu0 0
  %64 = vmatprep.subr.bf16.mxu0 0
  %65 = vmatpush1.bf16.msra.mxu0 0
  %66 = vmatprep.subr.bf16.mxu0 0
  %67 = vmatpush1.bf16.msra.mxu0 0
  %68 = vmatprep.subr.bf16.mxu0 0
  %69 = vmatpush1.bf16.msra.mxu0 0
  %70 = vmatprep.subr.bf16.mxu0 %v58
  %71 = vmatpush1.bf16.msra.mxu0 %v55
  %72 = vmatprep.subr.bf16.mxu0 %v42
  %73 = vmatpush1.bf16.msra.mxu0 %v41
  %74 = vmatprep.subr.bf16.mxu0 %v40
  %75 = vmatpush1.bf16.msra.mxu0 %v39
  %76 = vmatprep.subr.bf16.mxu0 0
  %77 = vmatpush2.bf16.msra.mxu0 0
  %78 = vmatprep.subr.bf16.mxu0 0
  %79 = vmatpush2.bf16.msra.mxu0 0
  %80 = vmatprep.subr.bf16.mxu0 0
  %81 = vmatpush2.bf16.msra.mxu0 0
  %82 = vmatprep.subr.bf16.mxu0 0
  %83 = vmatpush2.bf16.msra.mxu0 0
  %84 = vmatprep.subr.bf16.mxu0 0
  %85 = vmatpush2.bf16.msra.mxu0 0
  %86 = vmatprep.subr.bf16.mxu0 0
  %87 = vmatpush2.bf16.msra.mxu0 0
  %88 = vmatprep.subr.bf16.mxu0 0
  %89 = vmatpush2.bf16.msra.mxu0 0
  %90 = vmatprep.subr.bf16.mxu0 0
  %91 = vmatpush2.bf16.msra.mxu0 0
  %92 = vmatprep.mubr.bf16.mxu0 0
  %93 = vmatmul.mubr.bf16.gmra.mxu0 %v51
  %v94 = vpop.f32.mrf.mxu0
  %v95 = vadd.f32 0.0, %v94
  %v96 = vpop.f32.mrf.mxu0
  %v97 = vadd.f32 0.0, %v96
  %v98 = vpop.f32.mrf.mxu0
  %v99 = vpop.f32.mrf.mxu0
  %100 = vdwg.mxu0
  %v101 = vsel %vm53, %v95, 0.0
  %v102 = vsel %vm53, %v97, 0.0
  %v103 = vadd.f32 %v101, %v102
  %104 = vadd.xlane.f32.xlu0 %v103
  %v105 = vpop.xlane.xlu0 %104
  %v106 = vrcp.pop 256.0
  %v107 = vmul.f32 %v105, %v106
  %v108 = vmul.f32 %v95, %v95
  %v109 = vmul.f32 %v97, %v97
  %v110 = vsel %vm53, %v108, 0.0
  %v111 = vsel %vm53, %v109, 0.0
  %v112 = vadd.f32 %v110, %v111
  %113 = vadd.xlane.f32.xlu0 %v112
  %v114 = vpop.xlane.xlu0 %113
  %v115 = vmul.f32 %v114, %v106
  %v116 = vmul.f32 %v107, %v107
  %v117 = vsub.f32 %v115, %v116
  %v118 = vmax.f32 %v117, 0.0
  %v119 = vld [vmem:[%s2] sm:$0x3]
  %v120 = vadd.f32 %v118, 1e-12
  %v121 = vrsqrt.pop %v120
  %v122 = vmul.f32 %v119, %v121
  %v123 = vsub.f32 %v95, %v107
  %v124 = vsub.f32 %v97, %v107
  %126 = vset.pattern.permute.xlu0 0
  %127 = vperm.xlu0 %126, %v122
  %v128 = vpop.permute.xlu0 %127
  %v130 = vmul.f32 %v123, %v128
  %v131 = vmul.f32 %v124, %v128
  %v132 = vld [vmem:[%s3] sm:$0x3]
  %134 = vset.pattern.permute.xlu0 0
  %135 = vperm.xlu0 %134, %v132
  %v136 = vpop.permute.xlu0 %135
  %v138 = vadd.f32 %v130, %v136
  %v139 = vadd.f32 %v131, %v136
  %v140 = vmax.f32 %v138, 0.0
  %v141 = vmax.f32 %v139, 0.0
  %v144 = vcombine.low %v140, %v141
  %v146 = vunpack.c.l.s4 1983009808
  %v147 = vunpack.c.0.s8 %v146
  %v148 = vlaneseq
  %v149 = vshrl.u32 %v148, 7
  %v150 = vsub.s32 %v147, %v149
  %v151 = vrot.slane %v144, %v150
  %153 = vst [vmem:[%s4] sm:$0xf] %v151
  // Predicated region
  $region18: #{d3net_forward.31} parent=0 // pred_check
    _
  $region19: #{d3net_forward.31} parent=0 // pred_check_branch
    %155 = sbr.rel (0) target = $region21
  $region20: #{d3net_forward.31} parent=0 // pred_region
    _
  $region21: #{d3net_forward.31} parent=0 // pred_fallthru
    _
  // Predicated region
  $region22: #{d3net_forward.31} parent=0 // pred_check
    _
  $region23: #{d3net_forward.31} parent=0 // pred_check_branch
    %157 = sbr.rel (0) target = $region25
  $region24: #{d3net_forward.31} parent=0 // pred_region
    _
  $region25: #{d3net_forward.31} parent=0 // pred_fallthru
    _

// kernel: d3net_forward.32
$region0: #{d3net_forward.32}
  #allocation0 [shape = 'u32[]', space=smem, size = 0x4, offset = 0x4, fixed_abs, tag = 'smem constant byte address 0x4 - core index']
  #allocation1 [shape = 'u32[144,128]{1,0:T(1,128)}', space=vmem, size = 0x12000, scoped, tag = 'internal scratch']
  %s0 = inlined_call_operand.vmem [shape: bf16[4,2], index: 0, kind: input, shape index: {}]
  %s1 = inlined_call_operand.vmem [shape: bf16[2,256], index: 1, kind: input, shape index: {}]
  %s2 = inlined_call_operand.vmem [shape: f32[4,1], index: 2, kind: input, shape index: {}]
  %s3 = inlined_call_operand.vmem [shape: f32[4,256], index: 3, kind: output, shape index: {}]
  %s4 = sld [smem:[#allocation0]]
  $region45: #{d3net_forward.32} parent=0
    _
  %s6 = ssub.s32 1, %s4
  %s7 = scalar_select 0, %s6, %s4
  loop: start=0, step=1, limit=4
  $region2: #{d3net_forward.32} parent=0 // loop_pre_header
    _
  $region3: #{d3net_forward.32} parent=0 // loop_header
    %s9 = sphi 0, %s13
    %p10 = scmp.ge.s32.totalorder %s9, 4
    %s17 = sphi 0, %s17
    %s19 = sphi 0, %s17
    %s20 = sphi 0, %s19
    %s34 = sphi 0, %s20
    %s40 = sphi 0, %s42
    %s43 = sphi 0, %s40
    %s44 = sphi 0, %s43
    %s60 = sphi 0, %s44
    %s64 = sphi 0, %s64
    %s66 = sphi 0, %s64
    %s67 = sphi 0, %s66
    %s81 = sphi 0, %s67
    %s87 = sphi 0, %s89
    %s90 = sphi 0, %s87
    %s91 = sphi 0, %s90
    %s107 = sphi 0, %s91
  $region4: #{d3net_forward.32} parent=0 // loop_header_branch
    %12 = sbr.rel (%p10) target = $region8
  $region5: #{d3net_forward.32} parent=0 // loop_body
    %s14 = ssub.s32 %s9, 1
    %s15 = ssub.s32 %s9, 2
    %s16 = sadd.s32 %s9, 1
    %s18 = sadd.s32 %s17, 1
    %p21 = scmp.eq.s32.totalorder %s9, 1
    %p22 = scmp.ne.s32.totalorder %s17, %s19
    %p23 = scmp.eq.s32.totalorder %s9, 0
    %p24 = por %p22, %p23
    %p25 = scmp.ne.s32.totalorder %s17, %s19
    %p26 = scmp.eq.s32.totalorder %s14, 1
    %p27 = por %p25, %p26
    %p28 = scmp.ne.s32.totalorder %s19, %s20
    %p29 = scmp.eq.s32.totalorder %s14, 0
    %p30 = por %p28, %p29
    %p31 = scmp.ne.s32.totalorder %s19, %s20
    %p32 = scmp.eq.s32.totalorder %s15, 1
    %p33 = por %p31, %p32
    %p35 = scmp.ne.s32.totalorder %s20, %s34
    %p36 = scmp.eq.s32.totalorder %s15, 0
    %p37 = por %p35, %p36
    %s38 = ssub.s32 %s9, %s16
    %p39 = scmp.eq.s32.totalorder %s38, 0
    %s41 = sadd.s32 %s40, 1
    %s42 = scalar_select %p39, %s40, %s41
    %p45 = pneg %p39
    %p46 = scmp.eq.s32.totalorder %s9, 1
    %p47 = por %p45, %p46
    %p48 = scmp.ne.s32.totalorder %s40, %s43
    %p49 = scmp.eq.s32.totalorder %s9, 0
    %p50 = por %p48, %p49
    %p51 = scmp.ne.s32.totalorder %s40, %s43
    %p52 = scmp.eq.s32.totalorder %s14, 1
    %p53 = por %p51, %p52
    %p54 = scmp.ne.s32.totalorder %s43, %s44
    %p55 = scmp.eq.s32.totalorder %s14, 0
    %p56 = por %p54, %p55
    %p57 = scmp.ne.s32.totalorder %s43, %s44
    %p58 = scmp.eq.s32.totalorder %s15, 1
    %p59 = por %p57, %p58
    %p61 = scmp.ne.s32.totalorder %s44, %s60
    %p62 = scmp.eq.s32.totalorder %s15, 0
    %p63 = por %p61, %p62
    %s65 = sadd.s32 %s64, 1
    %p68 = scmp.eq.s32.totalorder %s9, 1
    %p69 = scmp.ne.s32.totalorder %s64, %s66
    %p70 = scmp.eq.s32.totalorder %s9, 0
    %p71 = por %p69, %p70
    %p72 = scmp.ne.s32.totalorder %s64, %s66
    %p73 = scmp.eq.s32.totalorder %s14, 1
    %p74 = por %p72, %p73
    %p75 = scmp.ne.s32.totalorder %s66, %s67
    %p76 = scmp.eq.s32.totalorder %s14, 0
    %p77 = por %p75, %p76
    %p78 = scmp.ne.s32.totalorder %s66, %s67
    %p79 = scmp.eq.s32.totalorder %s15, 1
    %p80 = por %p78, %p79
    %p82 = scmp.ne.s32.totalorder %s67, %s81
    %p83 = scmp.eq.s32.totalorder %s15, 0
    %p84 = por %p82, %p83
    %s85 = ssub.s32 %s9, %s16
    %p86 = scmp.eq.s32.totalorder %s85, 0
    %s88 = sadd.s32 %s87, 1
    %s89 = scalar_select %p86, %s87, %s88
    %p92 = pneg %p86
    %p93 = scmp.eq.s32.totalorder %s9, 1
    %p94 = por %p92, %p93
    %p95 = scmp.ne.s32.totalorder %s87, %s90
    %p96 = scmp.eq.s32.totalorder %s9, 0
    %p97 = por %p95, %p96
    %p98 = scmp.ne.s32.totalorder %s87, %s90
    %p99 = scmp.eq.s32.totalorder %s14, 1
    %p100 = por %p98, %p99
    %p101 = scmp.ne.s32.totalorder %s90, %s91
    %p102 = scmp.eq.s32.totalorder %s14, 0
    %p103 = por %p101, %p102
    %p104 = scmp.ne.s32.totalorder %s90, %s91
    %p105 = scmp.eq.s32.totalorder %s15, 1
    %p106 = por %p104, %p105
    %p108 = scmp.ne.s32.totalorder %s91, %s107
    %p109 = scmp.eq.s32.totalorder %s15, 0
    %p110 = por %p108, %p109
    %p111 = scmp.le.s32.totalorder 1, %s9
    %p112 = scmp.lt.s32.totalorder %s9, 3
    %p113 = pnand %p111, %p112
    %p114 = pneg %p113
    // Predicated region
    $region9: #{d3net_forward.32} parent=5 // pred_check
      _
    $region10: #{d3net_forward.32} parent=5 // pred_check_branch
      %116 = sbr.rel (%p113) target = $region12
    $region11: #{d3net_forward.32} parent=5 // pred_region
      %s117 = ssub.s32 %s9, 1
      // Predicated region
      $region13: #{d3net_forward.32} parent=11 // pred_check
        %p118 = pneg %p30
      $region14: #{d3net_forward.32} parent=11 // pred_check_branch
        %120 = sbr.rel (%p118) target = $region16
      $region15: #{d3net_forward.32} parent=11 // pred_region
        _
      $region16: #{d3net_forward.32} parent=11 // pred_fallthru
        _
      // Predicated region
      $region17: #{d3net_forward.32} parent=11 // pred_check
        %p121 = pneg %p77
      $region18: #{d3net_forward.32} parent=11 // pred_check_branch
        %123 = sbr.rel (%p121) target = $region20
      $region19: #{d3net_forward.32} parent=11 // pred_region
        _
      $region20: #{d3net_forward.32} parent=11 // pred_fallthru
        _
    $region12: #{d3net_forward.32} parent=5 // pred_fallthru
      _
    %p124 = scmp.lt.s32.totalorder %s9, 2
    // Predicated region
    $region21: #{d3net_forward.32} parent=5 // pred_check
      %p125 = pneg %p124
    $region22: #{d3net_forward.32} parent=5 // pred_check_branch
      %127 = sbr.rel (%p125) target = $region24
    $region23: #{d3net_forward.32} parent=5 // pred_region
      // Predicated region
      $region25: #{d3net_forward.32} parent=23 // pred_check
        %p128 = pneg %p50
      $region26: #{d3net_forward.32} parent=23 // pred_check_branch
        %130 = sbr.rel (%p128) target = $region28
      $region27: #{d3net_forward.32} parent=23 // pred_region
        %p131 = scmp.lt.s32.totalorder %s9, 1
        %s132 = scalar_select %p131, %s9, 1
        %s133 = scalar_lea.vmem %s1, %s132
      $region28: #{d3net_forward.32} parent=23 // pred_fallthru
        _
    $region24: #{d3net_forward.32} parent=5 // pred_fallthru
      _
    %p134 = scmp.le.s32.totalorder 1, %s9
    %p135 = scmp.lt.s32.totalorder %s9, 3
    %p136 = pnand %p134, %p135
    %p137 = pneg %p136
    // Predicated region
    $region29: #{d3net_forward.32} parent=5 // pred_check
      _
    $region30: #{d3net_forward.32} parent=5 // pred_check_branch
      %139 = sbr.rel (%p136) target = $region32
    $region31: #{d3net_forward.32} parent=5 // pred_region
      %s140 = ssub.s32 %s9, 1
      %p141 = pneg %p30
      %p142 = pneg %p27
      %p143 = scmp.lt.s32.totalorder %s14, 1
      %s144 = scalar_select %p143, %s14, 1
      %s145 = scalar_lea.vmem %s1, %s144
      %p146 = pneg %p56
      %p147 = pneg %p53
      %p148 = pneg %p77
      %p149 = pneg %p74
      %p150 = pneg %p103
      %p151 = pneg %p100
      %p152 = scmp.lt.s32.totalorder %s14, 1
      %s153 = scalar_select %p152, %s14, 1
      %s154 = smul.addr %s153, 4
      %s155 = scalar_lea.vmem %s3, %s154
      %p156 = scmp.lt.s32.totalorder %s14, 1
      %s157 = scalar_select %p156, %s14, 1
      %s158 = scalar_lea.vmem %s1, %s157
      %p159 = scmp.lt.s32.totalorder %s14, 1
      %s160 = scalar_select %p159, %s14, 1
      %s161 = smul.addr %s160, 4
      %s162 = scalar_lea.vmem %s3, %s161
      %v164 = vld [vmem:[%s0] sm:$0x3]
      %v165 = vld [vmem:[%s158] sm:$0x1]
      %v166 = vld [vmem:[%s2] sm:$0xf]
      %168 = vset.pattern.permute.xlu0 0
      %169 = vperm.xlu0 %168, %v166
      %v170 = vpop.permute.xlu0 %169
      %vm172 = vcmask 15360
      %v174 = vsel %vm172, %v164, 0
      %vm176 = vcmask 1040384
      %v178 = vsel %vm176, %v165, 0
      %180 = vmatprep.subr.bf16.mxu0 0
      %181 = vmatpush1.bf16.msra.mxu0 0
      %182 = vmatprep.subr.bf16.mxu0 0
      %183 = vmatpush1.bf16.msra.mxu0 0
      %184 = vmatprep.subr.bf16.mxu0 0
      %185 = vmatpush1.bf16.msra.mxu0 0
      %186 = vmatprep.subr.bf16.mxu0 0
      %187 = vmatpush1.bf16.msra.mxu0 0
      %188 = vmatprep.subr.bf16.mxu0 0
      %189 = vmatpush1.bf16.msra.mxu0 0
      %190 = vmatprep.subr.bf16.mxu0 0
      %191 = vmatpush1.bf16.msra.mxu0 0
      %192 = vmatprep.subr.bf16.mxu0 0
      %193 = vmatpush1.bf16.msra.mxu0 0
      %194 = vmatprep.subr.bf16.mxu0 0
      %195 = vmatpush1.bf16.msra.mxu0 %v178
      %196 = vmatprep.subr.bf16.mxu0 0
      %197 = vmatpush2.bf16.msra.mxu0 0
      %198 = vmatprep.subr.bf16.mxu0 0
      %199 = vmatpush2.bf16.msra.mxu0 0
      %200 = vmatprep.subr.bf16.mxu0 0
      %201 = vmatpush2.bf16.msra.mxu0 0
      %202 = vmatprep.subr.bf16.mxu0 0
      %203 = vmatpush2.bf16.msra.mxu0 0
      %204 = vmatprep.subr.bf16.mxu0 0
      %205 = vmatpush2.bf16.msra.mxu0 0
      %206 = vmatprep.subr.bf16.mxu0 0
      %207 = vmatpush2.bf16.msra.mxu0 0
      %208 = vmatprep.subr.bf16.mxu0 0
      %209 = vmatpush2.bf16.msra.mxu0 0
      %210 = vmatprep.subr.bf16.mxu0 0
      %211 = vmatpush2.bf16.msra.mxu0 0
      %212 = vmatprep.mubr.bf16.mxu0 0
      %213 = vmatmul.mubr.bf16.gmra.mxu0 %v174
      %v214 = vpop.f32.mrf.mxu0
      %v215 = vadd.f32 %v170, %v214
      %v216 = vpop.f32.mrf.mxu0
      %v217 = vpop.f32.mrf.mxu0
      %v218 = vpop.f32.mrf.mxu0
      %219 = vdwg.mxu0
      %220 = vst [vmem:[%s162] sm:$0xf] %v215
      %p221 = scmp.lt.s32.totalorder %s14, 1
      %s222 = scalar_select %p221, %s14, 1
      %s223 = smul.addr %s222, 4
      %s224 = scalar_lea.vmem %s3, %s223
      // Predicated region
      $region33: #{d3net_forward.32} parent=31 // pred_check
        %p225 = pneg %p100
      $region34: #{d3net_forward.32} parent=31 // pred_check_branch
        %227 = sbr.rel (%p225) target = $region36
      $region35: #{d3net_forward.32} parent=31 // pred_region
        _
      $region36: #{d3net_forward.32} parent=31 // pred_fallthru
        _
    $region32: #{d3net_forward.32} parent=5 // pred_fallthru
      _
    %p228 = scmp.le.s32.totalorder 2, %s9
    // Predicated region
    $region37: #{d3net_forward.32} parent=5 // pred_check
      %p229 = pneg %p228
    $region38: #{d3net_forward.32} parent=5 // pred_check_branch
      %231 = sbr.rel (%p229) target = $region40
    $region39: #{d3net_forward.32} parent=5 // pred_region
      %s232 = ssub.s32 %s9, 2
      // Predicated region
      $region41: #{d3net_forward.32} parent=39 // pred_check
        %p233 = pneg %p106
      $region42: #{d3net_forward.32} parent=39 // pred_check_branch
        %235 = sbr.rel (%p233) target = $region44
      $region43: #{d3net_forward.32} parent=39 // pred_region
        %p236 = scmp.lt.s32.totalorder %s15, 1
        %s237 = scalar_select %p236, %s15, 1
        %s238 = smul.addr %s237, 4
        %s239 = scalar_lea.vmem %s3, %s238
      $region44: #{d3net_forward.32} parent=39 // pred_fallthru
        _
    $region40: #{d3net_forward.32} parent=5 // pred_fallthru
      _
  $region6: #{d3net_forward.32} parent=0 // loop_footer
    %s13 = sadd.s32 1, %s9
  $region7: #{d3net_forward.32} parent=0 // loop_footer_branch
    %8 = sbr.rel target = $region3
  $region8: #{d3net_forward.32} parent=0 // loop_exit
    _

// kernel: d3net_forward.34
$region0: #{d3net_forward.34}
  #allocation0 [shape = 'u32[]', space=smem, size = 0x4, offset = 0x4, fixed_abs, tag = 'smem constant byte address 0x4 - core index']
  #allocation1 [shape = 'u32[144,128]{1,0:T(1,128)}', space=vmem, size = 0x12000, scoped, tag = 'internal scratch']
  %s0 = inlined_call_operand.vmem [shape: bf16[2,90], index: 0, kind: input, shape index: {}]
  %s1 = inlined_call_operand.vmem [shape: bf16[90,256], index: 1, kind: input, shape index: {}]
  %s2 = inlined_call_operand.vmem [shape: f32[2,1], index: 2, kind: input, shape index: {}]
  %s3 = inlined_call_operand.vmem [shape: f32[2,1], index: 3, kind: input, shape index: {}]
  %s4 = inlined_call_operand.vmem [shape: f32[2,256], index: 4, kind: output, shape index: {}]
  %s5 = sld [smem:[#allocation0]]
  $region26: #{d3net_forward.34} parent=0
    _
  %s7 = ssub.s32 1, %s5
  %s8 = scalar_select 0, %s7, %s5
  // Predicated region
  $region2: #{d3net_forward.34} parent=0 // pred_check
    _
  $region3: #{d3net_forward.34} parent=0 // pred_check_branch
    %10 = sbr.rel (0) target = $region5
  $region4: #{d3net_forward.34} parent=0 // pred_region
    _
  $region5: #{d3net_forward.34} parent=0 // pred_fallthru
    _
  // Predicated region
  $region6: #{d3net_forward.34} parent=0 // pred_check
    _
  $region7: #{d3net_forward.34} parent=0 // pred_check_branch
    %12 = sbr.rel (0) target = $region9
  $region8: #{d3net_forward.34} parent=0 // pred_region
    _
  $region9: #{d3net_forward.34} parent=0 // pred_fallthru
    _
  // Predicated region
  $region10: #{d3net_forward.34} parent=0 // pred_check
    _
  $region11: #{d3net_forward.34} parent=0 // pred_check_branch
    %14 = sbr.rel (0) target = $region13
  $region12: #{d3net_forward.34} parent=0 // pred_region
    _
  $region13: #{d3net_forward.34} parent=0 // pred_fallthru
    _
  // Predicated region
  $region14: #{d3net_forward.34} parent=0 // pred_check
    _
  $region15: #{d3net_forward.34} parent=0 // pred_check_branch
    %16 = sbr.rel (0) target = $region17
  $region16: #{d3net_forward.34} parent=0 // pred_region
    _
  $region17: #{d3net_forward.34} parent=0 // pred_fallthru
    _
  %v18 = vld [vmem:[%s0] sm:$0x1]
  %v19 = vld [vmem:[%s1] sm:$0xff]
  %v20 = vld [vmem:[%s1 + $0x8] sm:$0xff]
  %v21 = vld [vmem:[%s1 + $0x10] sm:$0xff]
  %v22 = vld [vmem:[%s1 + $0x18] sm:$0xff]
  %v23 = vld [vmem:[%s1 + $0x20] sm:$0xff]
  %v24 = vld [vmem:[%s1 + $0x28] sm:$0xff]
  %v25 = vld [vmem:[%s1 + $0x30] sm:$0xff]
  %v26 = vld [vmem:[%s1 + $0x38] sm:$0xff]
  %v27 = vld [vmem:[%s1 + $0x40] sm:$0xff]
  %v28 = vld [vmem:[%s1 + $0x48] sm:$0xff]
  %v29 = vld [vmem:[%s1 + $0x50] sm:$0xff]
  %v30 = vld [vmem:[%s1 + $0x58] sm:$0x11]
  %v43 = vunpack.c.l.b16 %v19
  %v44 = vunpack.c.h.b16 %v19
  %v45 = vunpack.c.l.b16 %v20
  %v46 = vunpack.c.h.b16 %v20
  %v47 = vunpack.c.l.b16 %v21
  %v48 = vunpack.c.h.b16 %v21
  %v49 = vunpack.c.l.b16 %v22
  %v50 = vunpack.c.h.b16 %v22
  %v51 = vunpack.c.l.b16 %v23
  %v52 = vunpack.c.h.b16 %v23
  %v53 = vunpack.c.l.b16 %v24
  %v54 = vunpack.c.h.b16 %v24
  %v55 = vunpack.c.l.b16 %v25
  %v56 = vunpack.c.h.b16 %v25
  %v57 = vunpack.c.l.b16 %v26
  %v58 = vunpack.c.h.b16 %v26
  %v59 = vunpack.c.l.b16 %v27
  %v60 = vunpack.c.h.b16 %v27
  %v61 = vunpack.c.l.b16 %v28
  %v62 = vunpack.c.h.b16 %v28
  %v63 = vunpack.c.l.b16 %v29
  %v64 = vunpack.c.h.b16 %v29
  %v65 = vunpack.c.l.b16 %v30
  %v66 = vunpack.c.h.b16 %v30
  %v67 = vpack.c.b16 %v45, %v43
  %v68 = vpack.c.b16 %v46, %v44
  %v69 = vpack.c.b16 %v49, %v47
  %v70 = vpack.c.b16 %v50, %v48
  %v71 = vpack.c.b16 %v53, %v51
  %v72 = vpack.c.b16 %v54, %v52
  %v73 = vpack.c.b16 %v57, %v55
  %v74 = vpack.c.b16 %v58, %v56
  %v75 = vpack.c.b16 %v61, %v59
  %v76 = vpack.c.b16 %v62, %v60
  %v77 = vpack.c.b16 %v65, %v63
  %v78 = vpack.c.b16 %v66, %v64
  %vm89 = vcmask 736256
  %v91 = vsel %vm89, %v18, 0
  %vm93 = vcmask 1044480
  %v95 = vsel %vm93, %v77, 0
  %v98 = vsel %vm93, %v78, 0
  %100 = vmatprep.subr.bf16.mxu0 0
  %101 = vmatpush1.bf16.msra.mxu0 0
  %102 = vmatprep.subr.bf16.mxu0 0
  %103 = vmatpush1.bf16.msra.mxu0 0
  %104 = vmatprep.subr.bf16.mxu0 %v98
  %105 = vmatpush1.bf16.msra.mxu0 %v95
  %106 = vmatprep.subr.bf16.mxu0 %v76
  %107 = vmatpush1.bf16.msra.mxu0 %v75
  %108 = vmatprep.subr.bf16.mxu0 %v74
  %109 = vmatpush1.bf16.msra.mxu0 %v73
  %110 = vmatprep.subr.bf16.mxu0 %v72
  %111 = vmatpush1.bf16.msra.mxu0 %v71
  %112 = vmatprep.subr.bf16.mxu0 %v70
  %113 = vmatpush1.bf16.msra.mxu0 %v69
  %114 = vmatprep.subr.bf16.mxu0 %v68
  %115 = vmatpush1.bf16.msra.mxu0 %v67
  %116 = vmatprep.subr.bf16.mxu0 0
  %117 = vmatpush2.bf16.msra.mxu0 0
  %118 = vmatprep.subr.bf16.mxu0 0
  %119 = vmatpush2.bf16.msra.mxu0 0
  %120 = vmatprep.subr.bf16.mxu0 0
  %121 = vmatpush2.bf16.msra.mxu0 0
  %122 = vmatprep.subr.bf16.mxu0 0
  %123 = vmatpush2.bf16.msra.mxu0 0
  %124 = vmatprep.subr.bf16.mxu0 0
  %125 = vmatpush2.bf16.msra.mxu0 0
  %126 = vmatprep.subr.bf16.mxu0 0
  %127 = vmatpush2.bf16.msra.mxu0 0
  %128 = vmatprep.subr.bf16.mxu0 0
  %129 = vmatpush2.bf16.msra.mxu0 0
  %130 = vmatprep.subr.bf16.mxu0 0
  %131 = vmatpush2.bf16.msra.mxu0 0
  %132 = vmatprep.mubr.bf16.mxu0 0
  %133 = vmatmul.mubr.bf16.gmra.mxu0 %v91
  %v134 = vpop.f32.mrf.mxu0
  %v135 = vadd.f32 0.0, %v134
  %v136 = vpop.f32.mrf.mxu0
  %v137 = vadd.f32 0.0, %v136
  %v138 = vpop.f32.mrf.mxu0
  %v139 = vpop.f32.mrf.mxu0
  %140 = vdwg.mxu0
  %vm141 = vcmask 1041408
  %v142 = vsel %vm141, %v135, 0.0
  %v143 = vsel %vm141, %v137, 0.0
  %v144 = vadd.f32 %v142, %v143
  %145 = vadd.xlane.f32.xlu0 %v144
  %v146 = vpop.xlane.xlu0 %145
  %v147 = vrcp.pop 256.0
  %v148 = vmul.f32 %v146, %v147
  %v149 = vmul.f32 %v135, %v135
  %v150 = vmul.f32 %v137, %v137
  %v151 = vsel %vm141, %v149, 0.0
  %v152 = vsel %vm141, %v150, 0.0
  %v153 = vadd.f32 %v151, %v152
  %154 = vadd.xlane.f32.xlu0 %v153
  %v155 = vpop.xlane.xlu0 %154
  %v156 = vmul.f32 %v155, %v147
  %v157 = vmul.f32 %v148, %v148
  %v158 = vsub.f32 %v156, %v157
  %v159 = vmax.f32 %v158, 0.0
  %v160 = vld [vmem:[%s2] sm:$0x3]
  %v161 = vadd.f32 %v159, 1e-12
  %v162 = vrsqrt.pop %v161
  %v163 = vmul.f32 %v160, %v162
  %v164 = vsub.f32 %v135, %v148
  %v165 = vsub.f32 %v137, %v148
  %167 = vset.pattern.permute.xlu0 0
  %168 = vperm.xlu0 %167, %v163
  %v169 = vpop.permute.xlu0 %168
  %v171 = vmul.f32 %v164, %v169
  %v172 = vmul.f32 %v165, %v169
  %v173 = vld [vmem:[%s3] sm:$0x3]
  %175 = vset.pattern.permute.xlu0 0
  %176 = vperm.xlu0 %175, %v173
  %v177 = vpop.permute.xlu0 %176
  %v179 = vadd.f32 %v171, %v177
  %v180 = vadd.f32 %v172, %v177
  %v181 = vmax.f32 %v179, 0.0
  %v182 = vmax.f32 %v180, 0.0
  %v185 = vcombine.low %v181, %v182
  %v187 = vunpack.c.l.s4 1983009808
  %v188 = vunpack.c.0.s8 %v187
  %v189 = vlaneseq
  %v190 = vshrl.u32 %v189, 7
  %v191 = vsub.s32 %v188, %v190
  %v192 = vrot.slane %v185, %v191
  %194 = vst [vmem:[%s4] sm:$0xf] %v192
  // Predicated region
  $region18: #{d3net_forward.34} parent=0 // pred_check
    _
  $region19: #{d3net_forward.34} parent=0 // pred_check_branch
    %196 = sbr.rel (0) target = $region21
  $region20: #{d3net_forward.34} parent=0 // pred_region
    _
  $region21: #{d3net_forward.34} parent=0 // pred_fallthru
    _
  // Predicated region
  $region22: #{d3net_forward.34} parent=0 // pred_check
    _
  $region23: #{d3net_forward.34} parent=0 // pred_check_branch
    %198 = sbr.rel (0) target = $region25
  $region24: #{d3net_forward.34} parent=0 // pred_region
    _
  $region25: #{d3net_forward.34} parent=0 // pred_fallthru
    _

// kernel: d3net_forward.35
$region0: #{d3net_forward.35}
  #allocation0 [shape = 'u32[]', space=smem, size = 0x4, offset = 0x4, fixed_abs, tag = 'smem constant byte address 0x4 - core index']
  #allocation1 [shape = 'u32[144,128]{1,0:T(1,128)}', space=vmem, size = 0x12000, scoped, tag = 'internal scratch']
  %s0 = inlined_call_operand.vmem [shape: bf16[4,36], index: 0, kind: input, shape index: {}]
  %s1 = inlined_call_operand.vmem [shape: bf16[36,256], index: 1, kind: input, shape index: {}]
  %s2 = inlined_call_operand.vmem [shape: f32[4,1], index: 2, kind: input, shape index: {}]
  %s3 = inlined_call_operand.vmem [shape: f32[2,256], index: 3, kind: output, shape index: {}]
  %s4 = sld [smem:[#allocation0]]
  $region86: #{d3net_forward.35} parent=0
    _
  %s6 = ssub.s32 1, %s4
  %s7 = scalar_select 0, %s6, %s4
  $region1: #{d3net_forward.35} parent=0
    #allocation2 [shape = 'u8[20480]{0}', space=vmem, size = 0x5000, scoped, tag = 'input window, operand 1']
    loop: start=0, step=1, limit=4
    $region2: #{d3net_forward.35} parent=1 // loop_pre_header
      _
    $region3: #{d3net_forward.35} parent=1 // loop_header
      %s9 = sphi 0, %s13
      %p10 = scmp.ge.s32.totalorder %s9, 4
      %s17 = sphi 0, %s17
      %s19 = sphi 0, %s17
      %s20 = sphi 0, %s19
      %s34 = sphi 0, %s20
      %s40 = sphi 0, %s42
      %s43 = sphi 0, %s40
      %s44 = sphi 0, %s43
      %s60 = sphi 0, %s44
      %s64 = sphi 0, %s64
      %s66 = sphi 0, %s64
      %s67 = sphi 0, %s66
      %s81 = sphi 0, %s67
      %s87 = sphi 0, %s89
      %s90 = sphi 0, %s87
      %s91 = sphi 0, %s90
      %s107 = sphi 0, %s91
    $region4: #{d3net_forward.35} parent=1 // loop_header_branch
      %12 = sbr.rel (%p10) target = $region8
    $region5: #{d3net_forward.35} parent=1 // loop_body
      %s14 = ssub.s32 %s9, 1
      %s15 = ssub.s32 %s9, 2
      %s16 = sadd.s32 %s9, 1
      %s18 = sadd.s32 %s17, 1
      %p21 = scmp.eq.s32.totalorder %s9, 1
      %p22 = scmp.ne.s32.totalorder %s17, %s19
      %p23 = scmp.eq.s32.totalorder %s9, 0
      %p24 = por %p22, %p23
      %p25 = scmp.ne.s32.totalorder %s17, %s19
      %p26 = scmp.eq.s32.totalorder %s14, 1
      %p27 = por %p25, %p26
      %p28 = scmp.ne.s32.totalorder %s19, %s20
      %p29 = scmp.eq.s32.totalorder %s14, 0
      %p30 = por %p28, %p29
      %p31 = scmp.ne.s32.totalorder %s19, %s20
      %p32 = scmp.eq.s32.totalorder %s15, 1
      %p33 = por %p31, %p32
      %p35 = scmp.ne.s32.totalorder %s20, %s34
      %p36 = scmp.eq.s32.totalorder %s15, 0
      %p37 = por %p35, %p36
      %s38 = ssub.s32 %s9, %s16
      %p39 = scmp.eq.s32.totalorder %s38, 0
      %s41 = sadd.s32 %s40, 1
      %s42 = scalar_select %p39, %s40, %s41
      %p45 = pneg %p39
      %p46 = scmp.eq.s32.totalorder %s9, 1
      %p47 = por %p45, %p46
      %p48 = scmp.ne.s32.totalorder %s40, %s43
      %p49 = scmp.eq.s32.totalorder %s9, 0
      %p50 = por %p48, %p49
      %p51 = scmp.ne.s32.totalorder %s40, %s43
      %p52 = scmp.eq.s32.totalorder %s14, 1
      %p53 = por %p51, %p52
      %p54 = scmp.ne.s32.totalorder %s43, %s44
      %p55 = scmp.eq.s32.totalorder %s14, 0
      %p56 = por %p54, %p55
      %p57 = scmp.ne.s32.totalorder %s43, %s44
      %p58 = scmp.eq.s32.totalorder %s15, 1
      %p59 = por %p57, %p58
      %p61 = scmp.ne.s32.totalorder %s44, %s60
      %p62 = scmp.eq.s32.totalorder %s15, 0
      %p63 = por %p61, %p62
      %s65 = sadd.s32 %s64, 1
      %p68 = scmp.eq.s32.totalorder %s9, 1
      %p69 = scmp.ne.s32.totalorder %s64, %s66
      %p70 = scmp.eq.s32.totalorder %s9, 0
      %p71 = por %p69, %p70
      %p72 = scmp.ne.s32.totalorder %s64, %s66
      %p73 = scmp.eq.s32.totalorder %s14, 1
      %p74 = por %p72, %p73
      %p75 = scmp.ne.s32.totalorder %s66, %s67
      %p76 = scmp.eq.s32.totalorder %s14, 0
      %p77 = por %p75, %p76
      %p78 = scmp.ne.s32.totalorder %s66, %s67
      %p79 = scmp.eq.s32.totalorder %s15, 1
      %p80 = por %p78, %p79
      %p82 = scmp.ne.s32.totalorder %s67, %s81
      %p83 = scmp.eq.s32.totalorder %s15, 0
      %p84 = por %p82, %p83
      %s85 = ssub.s32 %s9, %s16
      %p86 = scmp.eq.s32.totalorder %s85, 0
      %s88 = sadd.s32 %s87, 1
      %s89 = scalar_select %p86, %s87, %s88
      %p92 = pneg %p86
      %p93 = scmp.eq.s32.totalorder %s9, 1
      %p94 = por %p92, %p93
      %p95 = scmp.ne.s32.totalorder %s87, %s90
      %p96 = scmp.eq.s32.totalorder %s9, 0
      %p97 = por %p95, %p96
      %p98 = scmp.ne.s32.totalorder %s87, %s90
      %p99 = scmp.eq.s32.totalorder %s14, 1
      %p100 = por %p98, %p99
      %p101 = scmp.ne.s32.totalorder %s90, %s91
      %p102 = scmp.eq.s32.totalorder %s14, 0
      %p103 = por %p101, %p102
      %p104 = scmp.ne.s32.totalorder %s90, %s91
      %p105 = scmp.eq.s32.totalorder %s15, 1
      %p106 = por %p104, %p105
      %p108 = scmp.ne.s32.totalorder %s91, %s107
      %p109 = scmp.eq.s32.totalorder %s15, 0
      %p110 = por %p108, %p109
      %p111 = scmp.le.s32.totalorder 1, %s9
      %p112 = scmp.lt.s32.totalorder %s9, 3
      %p113 = pnand %p111, %p112
      %p114 = pneg %p113
      // Predicated region
      $region9: #{d3net_forward.35} parent=5 // pred_check
        _
      $region10: #{d3net_forward.35} parent=5 // pred_check_branch
        %116 = sbr.rel (%p113) target = $region12
      $region11: #{d3net_forward.35} parent=5 // pred_region
        %s117 = ssub.s32 %s9, 1
        // Predicated region
        $region13: #{d3net_forward.35} parent=11 // pred_check
          %p118 = pneg %p30
        $region14: #{d3net_forward.35} parent=11 // pred_check_branch
          %120 = sbr.rel (%p118) target = $region16
        $region15: #{d3net_forward.35} parent=11 // pred_region
          _
        $region16: #{d3net_forward.35} parent=11 // pred_fallthru
          _
        // Predicated region
        $region17: #{d3net_forward.35} parent=11 // pred_check
          %p121 = pneg %p77
        $region18: #{d3net_forward.35} parent=11 // pred_check_branch
          %123 = sbr.rel (%p121) target = $region20
        $region19: #{d3net_forward.35} parent=11 // pred_region
          _
        $region20: #{d3net_forward.35} parent=11 // pred_fallthru
          _
      $region12: #{d3net_forward.35} parent=5 // pred_fallthru
        _
      %p124 = scmp.lt.s32.totalorder %s9, 2
      // Predicated region
      $region21: #{d3net_forward.35} parent=5 // pred_check
        %p125 = pneg %p124
      $region22: #{d3net_forward.35} parent=5 // pred_check_branch
        %127 = sbr.rel (%p125) target = $region24
      $region23: #{d3net_forward.35} parent=5 // pred_region
        // Predicated region
        $region25: #{d3net_forward.35} parent=23 // pred_check
          %p128 = pneg %p50
        $region26: #{d3net_forward.35} parent=23 // pred_check_branch
          %130 = sbr.rel (%p128) target = $region28
        $region27: #{d3net_forward.35} parent=23 // pred_region
          %s131 = sand.u32 %s40, 1
          %s132 = sand.u32 %s40, 1
          %s133 = smul.addr %s132, 20
          %s134 = scalar_lea.vmem [#allocation2], %s133
          %s135 = smul.addr %s9, 4
          %s136 = scalar_lea.vmem %s1, %s135
          // Predicated region
          $region29: #{d3net_forward.35} parent=27 // pred_check
            _
          $region30: #{d3net_forward.35} parent=27 // pred_check_branch
            %138 = sbr.rel (0) target = $region32
          $region31: #{d3net_forward.35} parent=27 // pred_region
            // Predicated region
            $region33: #{d3net_forward.35} parent=31 // pred_check
              _
            $region34: #{d3net_forward.35} parent=31 // pred_check_branch
              %140 = sbr.rel target = $region36
            $region35: #{d3net_forward.35} parent=31 // pred_region
              // Predicated region
              $region48: #{d3net_forward.35} parent=35 // pred_check
                _
              $region49: #{d3net_forward.35} parent=35 // pred_check_branch
                %164 = sbr.rel (0) target = $region51
              $region50: #{d3net_forward.35} parent=35 // pred_region
                loop: start=0, step=1, limit=1
                $region52: #{d3net_forward.35} parent=50 // loop_pre_header
                  _
                $region53: #{d3net_forward.35} parent=50 // loop_header
                  %s166 = sphi 0, %s170
                  %p167 = scmp.ge.s32.totalorder %s166, 1
                  %s171 = sphi %s136, %s136
                  %s172 = sphi %s134, %s134
                $region54: #{d3net_forward.35} parent=50 // loop_header_branch
                  %169 = sbr.rel (%p167) target = $region58
                $region55: #{d3net_forward.35} parent=50 // loop_body
                  _
                $region56: #{d3net_forward.35} parent=50 // loop_footer
                  %s170 = sadd.s32 1, %s166
                $region57: #{d3net_forward.35} parent=50 // loop_footer_branch
                  %165 = sbr.rel target = $region53
                $region58: #{d3net_forward.35} parent=50 // loop_exit
                  _
                %s174 = ssub.s32 16, 1
                loop: start=0, step=1, limit=1
                $region59: #{d3net_forward.35} parent=50 // loop_pre_header
                  _
                $region60: #{d3net_forward.35} parent=50 // loop_header
                  %s176 = sphi 0, %s180
                  %p177 = scmp.ge.s32.totalorder %s176, 1
                  %s181 = sphi %s136, %s136
                  %s182 = sphi %s134, %s134
                $region61: #{d3net_forward.35} parent=50 // loop_header_branch
                  %179 = sbr.rel (%p177) target = $region65
                $region62: #{d3net_forward.35} parent=50 // loop_body
                  %v183 = vld [vmem:[%s181] sm:%s174]
                  %184 = vst [vmem:[%s182] sm:%s174] %v183
                  %v185 = vld [vmem:[%s181 + $0x8] sm:%s174]
                  %186 = vst [vmem:[%s182 + $0x4] sm:%s174] %v185
                  %v187 = vld [vmem:[%s181 + $0x10] sm:%s174]
                  %188 = vst [vmem:[%s182 + $0x8] sm:%s174] %v187
                  %v189 = vld [vmem:[%s181 + $0x18] sm:%s174]
                  %190 = vst [vmem:[%s182 + $0xc] sm:%s174] %v189
                  %v191 = vld [vmem:[%s181 + $0x20] sm:%s174]
                  %192 = vst [vmem:[%s182 + $0x10] sm:%s174] %v191
                $region63: #{d3net_forward.35} parent=50 // loop_footer
                  %s180 = sadd.s32 1, %s176
                $region64: #{d3net_forward.35} parent=50 // loop_footer_branch
                  %175 = sbr.rel target = $region60
                $region65: #{d3net_forward.35} parent=50 // loop_exit
                  _
              $region51: #{d3net_forward.35} parent=35 // pred_fallthru
                _
            $region36: #{d3net_forward.35} parent=31 // pred_fallthru
              _
            // Predicated region
            $region37: #{d3net_forward.35} parent=31 // pred_check
              _
            $region38: #{d3net_forward.35} parent=31 // pred_check_branch
              %142 = sbr.rel (0) target = $region40
            $region39: #{d3net_forward.35} parent=31 // pred_region
              %s144 = ssub.s32 16, 1
              loop: start=0, step=1, limit=1
              $region41: #{d3net_forward.35} parent=39 // loop_pre_header
                _
              $region42: #{d3net_forward.35} parent=39 // loop_header
                %s146 = sphi 0, %s150
                %p147 = scmp.ge.s32.totalorder %s146, 1
                %s151 = sphi %s136, %s136
                %s152 = sphi %s134, %s134
              $region43: #{d3net_forward.35} parent=39 // loop_header_branch
                %149 = sbr.rel (%p147) target = $region47
              $region44: #{d3net_forward.35} parent=39 // loop_body
                %v153 = vld [vmem:[%s151] sm:%s144]
                %154 = vst [vmem:[%s152] sm:%s144] %v153
                %v155 = vld [vmem:[%s151 + $0x8] sm:%s144]
                %156 = vst [vmem:[%s152 + $0x4] sm:%s144] %v155
                %v157 = vld [vmem:[%s151 + $0x10] sm:%s144]
                %158 = vst [vmem:[%s152 + $0x8] sm:%s144] %v157
                %v159 = vld [vmem:[%s151 + $0x18] sm:%s144]
                %160 = vst [vmem:[%s152 + $0xc] sm:%s144] %v159
                %v161 = vld [vmem:[%s151 + $0x20] sm:%s144]
                %162 = vst [vmem:[%s152 + $0x10] sm:%s144] %v161
              $region45: #{d3net_forward.35} parent=39 // loop_footer
                %s150 = sadd.s32 1, %s146
              $region46: #{d3net_forward.35} parent=39 // loop_footer_branch
                %145 = sbr.rel target = $region42
              $region47: #{d3net_forward.35} parent=39 // loop_exit
                _
            $region40: #{d3net_forward.35} parent=31 // pred_fallthru
              _
          $region32: #{d3net_forward.35} parent=27 // pred_fallthru
            _
          %193 = vnop
        $region28: #{d3net_forward.35} parent=23 // pred_fallthru
          _
      $region24: #{d3net_forward.35} parent=5 // pred_fallthru
        _
      %p194 = scmp.le.s32.totalorder 1, %s9
      %p195 = scmp.lt.s32.totalorder %s9, 3
      %p196 = pnand %p194, %p195
      %p197 = pneg %p196
      // Predicated region
      $region66: #{d3net_forward.35} parent=5 // pred_check
        _
      $region67: #{d3net_forward.35} parent=5 // pred_check_branch
        %199 = sbr.rel (%p196) target = $region69
      $region68: #{d3net_forward.35} parent=5 // pred_region
        %s200 = ssub.s32 %s9, 1
        %s201 = sand.u32 %s43, 1
        %s202 = sand.u32 %s43, 1
        %s203 = smul.addr %s202, 20
        %s204 = scalar_lea.vmem [#allocation2], %s203
        // Predicated region
        $region70: #{d3net_forward.35} parent=68 // pred_check
          %p205 = pneg %p56
        $region71: #{d3net_forward.35} parent=68 // pred_check_branch
          %207 = sbr.rel (%p205) target = $region73
        $region72: #{d3net_forward.35} parent=68 // pred_region
          _
        $region73: #{d3net_forward.35} parent=68 // pred_fallthru
          _
        %p208 = pneg %p30
        %p209 = pneg %p27
        %s210 = sand.u32 %s43, 1
        %s211 = sand.u32 %s43, 1
        %s212 = smul.addr %s211, 20
        %s213 = scalar_lea.vmem [#allocation2], %s212
        %p214 = pneg %p56
        %p215 = pneg %p53
        %p216 = pneg %p77
        %p217 = pneg %p74
        %p218 = pneg %p103
        %p219 = pneg %p100
        %p220 = scmp.lt.s32.totalorder %s14, 1
        %s221 = scalar_select %p220, %s14, 1
        %s222 = smul.addr %s221, 2
        %s223 = scalar_lea.vmem %s3, %s222
        %p224 = scmp.lt.s32.totalorder %s14, 1
        %s225 = scalar_select %p224, %s14, 1
        %s226 = smul.addr %s225, 2
        %s227 = scalar_lea.vmem %s3, %s226
        %v229 = vld [vmem:[%s0] sm:$0x3]
        %v230 = vld [vmem:[%s204] sm:$0xf]
        %v231 = vld [vmem:[%s204 + $0x4] sm:$0xf]
        %v232 = vld [vmem:[%s204 + $0x8] sm:$0xf]
        %v233 = vld [vmem:[%s204 + $0xc] sm:$0xf]
        %v234 = vld [vmem:[%s204 + $0x10] sm:$0x3]
        %v235 = vld [vmem:[%s2] sm:$0xf]
        %237 = vset.pattern.permute.xlu0 0
        %238 = vperm.xlu0 %237, %v235
        %v239 = vpop.permute.xlu0 %238
        %v246 = vunpack.c.l.b16 %v230
        %v247 = vunpack.c.l.b16 %v231
        %v248 = vunpack.c.l.b16 %v232
        %v249 = vunpack.c.l.b16 %v233
        %v250 = vunpack.c.l.b16 %v234
        %v251 = vpack.c.b16 %v247, %v246
        %v252 = vpack.c.b16 %v249, %v248
        %v253 = vpack.c.b16 %v250, %v250
        %vm256 = vcmask 293888
        %v258 = vsel %vm256, %v229, 0
        %vm260 = vcmask 1041408
        %v262 = vsel %vm260, %v253, 0
        %264 = vmatprep.subr.bf16.mxu0 0
        %265 = vmatpush1.bf16.msra.mxu0 0
        %266 = vmatprep.subr.bf16.mxu0 0
        %267 = vmatpush1.bf16.msra.mxu0 0
        %268 = vmatprep.subr.bf16.mxu0 0
        %269 = vmatpush1.bf16.msra.mxu0 0
        %270 = vmatprep.subr.bf16.mxu0 0
        %271 = vmatpush1.bf16.msra.mxu0 0
        %272 = vmatprep.subr.bf16.mxu0 0
        %273 = vmatpush1.bf16.msra.mxu0 0
        %274 = vmatprep.subr.bf16.mxu0 0
        %275 = vmatpush1.bf16.msra.mxu0 %v262
        %276 = vmatprep.subr.bf16.mxu0 0
        %277 = vmatpush1.bf16.msra.mxu0 %v252
        %278 = vmatprep.subr.bf16.mxu0 0
        %279 = vmatpush1.bf16.msra.mxu0 %v251
        %280 = vmatprep.subr.bf16.mxu0 0
        %281 = vmatpush2.bf16.msra.mxu0 0
        %282 = vmatprep.subr.bf16.mxu0 0
        %283 = vmatpush2.bf16.msra.mxu0 0
        %284 = vmatprep.subr.bf16.mxu0 0
        %285 = vmatpush2.bf16.msra.mxu0 0
        %286 = vmatprep.subr.bf16.mxu0 0
        %287 = vmatpush2.bf16.msra.mxu0 0
        %288 = vmatprep.subr.bf16.mxu0 0
        %289 = vmatpush2.bf16.msra.mxu0 0
        %290 = vmatprep.subr.bf16.mxu0 0
        %291 = vmatpush2.bf16.msra.mxu0 0
        %292 = vmatprep.subr.bf16.mxu0 0
        %293 = vmatpush2.bf16.msra.mxu0 0
        %294 = vmatprep.subr.bf16.mxu0 0
        %295 = vmatpush2.bf16.msra.mxu0 0
        %296 = vmatprep.mubr.bf16.mxu0 0
        %297 = vmatmul.mubr.bf16.gmra.mxu0 %v258
        %v298 = vpop.f32.mrf.mxu0
        %v299 = vadd.f32 %v239, %v298
        %v300 = vpop.f32.mrf.mxu0
        %v301 = vpop.f32.mrf.mxu0
        %v302 = vpop.f32.mrf.mxu0
        %303 = vdwg.mxu0
        %v304 = vsub.f32 0.0, %v299
        %v305 = vmul.f32 %v304, 1.442695
        %v306 = vpow.pop %v305
        %v307 = vadd.f32 %v306, 1.0
        %v308 = vrcp.pop %v307
        %v309 = vtanh.pop %v299
        %v311 = vrot.slane %v308, 2
        %v313 = vmul.f32 %v309, %v311
        %314 = vst [vmem:[%s227] sm:$0x3] %v313
        %p315 = scmp.lt.s32.totalorder %s14, 1
        %s316 = scalar_select %p315, %s14, 1
        %s317 = smul.addr %s316, 2
        %s318 = scalar_lea.vmem %s3, %s317
        // Predicated region
        $region74: #{d3net_forward.35} parent=68 // pred_check
          %p319 = pneg %p100
        $region75: #{d3net_forward.35} parent=68 // pred_check_branch
          %321 = sbr.rel (%p319) target = $region77
        $region76: #{d3net_forward.35} parent=68 // pred_region
          _
        $region77: #{d3net_forward.35} parent=68 // pred_fallthru
          _
      $region69: #{d3net_forward.35} parent=5 // pred_fallthru
        _
      %p322 = scmp.le.s32.totalorder 2, %s9
      // Predicated region
      $region78: #{d3net_forward.35} parent=5 // pred_check
        %p323 = pneg %p322
      $region79: #{d3net_forward.35} parent=5 // pred_check_branch
        %325 = sbr.rel (%p323) target = $region81
      $region80: #{d3net_forward.35} parent=5 // pred_region
        %s326 = ssub.s32 %s9, 2
        // Predicated region
        $region82: #{d3net_forward.35} parent=80 // pred_check
          %p327 = pneg %p106
        $region83: #{d3net_forward.35} parent=80 // pred_check_branch
          %329 = sbr.rel (%p327) target = $region85
        $region84: #{d3net_forward.35} parent=80 // pred_region
          %p330 = scmp.lt.s32.totalorder %s15, 1
          %s331 = scalar_select %p330, %s15, 1
          %s332 = smul.addr %s331, 2
          %s333 = scalar_lea.vmem %s3, %s332
        $region85: #{d3net_forward.35} parent=80 // pred_fallthru
          _
      $region81: #{d3net_forward.35} parent=5 // pred_fallthru
        _
    $region6: #{d3net_forward.35} parent=1 // loop_footer
      %s13 = sadd.s32 1, %s9
    $region7: #{d3net_forward.35} parent=1 // loop_footer_branch
      %8 = sbr.rel target = $region3
    $region8: #{d3net_forward.35} parent=1 // loop_exit
      _

</llo_original>
